<compile_context>
chip_gen: v5e
topology: v5e:2x2
jax: 0.10.0
libtpu: 0.0.40
codegen_flags: <defaults>
</compile_context>

<pallas_src>
import functools

import numpy as np
import jax
import jax.numpy as jnp
from jax.experimental import pallas as pl
from jax.experimental.pallas import tpu as pltpu


def _round_up(x, m):
    return (x + m - 1) // m * m


# ----------------------------------------------------------------------------
# In-kernel helpers / kernels
# ----------------------------------------------------------------------------
def _dense(h, layer, slab_refs, bias_ref):
    """One linear layer: static slab slice -> bf16 MXU matmul -> f32 bias/ReLU."""
    w_ref = slab_refs[layer["width"]]
    r0, rows = layer["r0"], layer["rows"]
    w = w_ref[r0:r0 + rows, :]
    b = bias_ref[:, layer["b0"]:layer["b0"] + layer["width"]]
    y = jnp.dot(h.astype(w.dtype), w, preferred_element_type=jnp.float32) + b
    return jnp.maximum(y, 0.0) if layer["relu"] else y


def _stage1_kernel(x_ref, *refs, widths, layers, split):
    """CNN + obs MLP + msg encoder (incl. the enc-last @ dec-first fold)."""
    slab_refs = {w: refs[i] for i, w in enumerate(widths)}
    bias_ref = refs[len(widths)]
    xfeat_ref = refs[len(widths) + 1]
    msg_ref = refs[len(widths) + 2]

    h = x_ref[...]                                    # (TB, 64*channel_in) bf16
    for layer in layers[:split]:                      # 3 convs + obs MLP
        h = _dense(h, layer, slab_refs, bias_ref)
    xfeat_ref[...] = h.astype(xfeat_ref.dtype)        # (TB, obs_dim_p) lane-dense

    m = h
    for layer in layers[split:]:                      # msg encoder (+ fold)
        m = _dense(m, layer, slab_refs, bias_ref)
    msg_ref[...] = m.astype(msg_ref.dtype)            # (TB, msgc_w) lane-dense


def _stage2_kernel(mix_ref, msgs_ref, xfeat_ref, *refs, widths, layers,
                   act_dim, obs_dim_p, msgc_w, bc_off, bd1_off):
    """Neighbour mixing + msg decoder + fused dueling head -> padded Q slab."""
    slab_refs = {w: refs[i] for i, w in enumerate(widths)}
    bias_ref = refs[len(widths)]
    o_ref = refs[len(widths) + 1]

    # Neighbour aggregation: nm = mix @ msg_c.  The folded encoder-last bias is
    # re-applied as rowsum(mix) * (b_enc4 @ W_dec1), plus the decoder-1 bias.
    mix = mix_ref[...]
    nm = jnp.dot(mix.astype(jnp.bfloat16), msgs_ref[...].astype(jnp.bfloat16),
                 preferred_element_type=jnp.float32)
    rowsum = jnp.sum(mix, axis=1, keepdims=True)
    bc = bias_ref[:, bc_off:bc_off + msgc_w]
    bd1 = bias_ref[:, bd1_off:bd1_off + msgc_w]
    d = jnp.maximum(nm + rowsum * bc + bd1, 0.0)       # decoder layer 1 (ReLU)

    for layer in layers[:3]:                           # decoder layers 2..4
        d = _dense(d, layer, slab_refs, bias_ref)

    # Fused dueling head: cat([x, msg]) @ [fc_A | fc_V] as two row-split matmuls
    # against a single VMEM-resident slab (no in-kernel concat).
    h1l = layers[3]
    w_ref = slab_refs[h1l["width"]]
    r0 = h1l["r0"]
    wx = w_ref[r0:r0 + obs_dim_p, :]
    wm = w_ref[r0 + obs_dim_p:r0 + 2 * obs_dim_p, :]
    b1 = bias_ref[:, h1l["b0"]:h1l["b0"] + h1l["width"]]
    h1 = (jnp.dot(xfeat_ref[...], wx, preferred_element_type=jnp.float32)
          + jnp.dot(d.astype(wm.dtype), wm, preferred_element_type=jnp.float32)
          + b1)
    h1 = jnp.maximum(h1, 0.0)
    h2 = _dense(h1, layers[4], slab_refs, bias_ref)
    av = _dense(h2, layers[5], slab_refs, bias_ref)    # (TB, 128): [A | V | 0..]

    # Dueling epilogue on the lane-dense padded slab: padded A columns are 0, so
    # sum(av) - V == sum(A); use a fixed 1/act_dim divisor.  Q is sliced to
    # act_dim lanes outside the kernel (store stays unmasked / lane-dense).
    v = av[:, act_dim:act_dim + 1]
    mean_a = (jnp.sum(av, axis=1, keepdims=True) - v) * (1.0 / act_dim)
    o_ref[...] = av + v - mean_a


# ----------------------------------------------------------------------------
# Host-side layout helpers
# ----------------------------------------------------------------------------
def _space_to_depth2(x):
    """(B,H,W,C) -> (B,H/2,W/2,4C) with (kh,kw,c) patch ordering."""
    B, H, W, C = x.shape
    x = x.reshape(B, H // 2, 2, W // 2, 2, C)
    x = x.transpose(0, 1, 3, 2, 4, 5)
    return x.reshape(B, H // 2, W // 2, 4 * C)


def build_mix(pos_weight, neighbors, batch):
    """Host-side (numpy) (B, B) neighbour-mixing matrix; passing it as a plain
    array means a changed neighbour pattern does not retrace the jitted fwd."""
    w = np.asarray(pos_weight)
    mix = np.zeros((batch, batch), np.float32)
    for i, nbr in neighbors.items():
        if nbr is None:
            continue
        agent_idx = np.asarray(nbr[0], np.int32)
        pos_idx = np.asarray(nbr[1], np.int32)
        np.add.at(mix, (i, agent_idx), w[0, pos_idx])   # duplicates accumulate
    return jnp.asarray(mix)


def qnet_forward(kparams, obs_nhwc, mix, *, meta, batch_tile=256):
    """QNet.forward (dict-neighbors branch) as two batch-gridded Pallas calls.

    batch_tile: 256 on v6e/v7x (256x256 MXU), 128 on v5e (4x128x128 MXU).
    """
    B, H, W, _ = obs_nhwc.shape
    assert H == 8 and W == 8, "CNN (3x k=2,s=2,p=0) implies an 8x8 observation"

    # Quadtree reordering of the raw observation (one cheap XLA op) so all
    # three convs become plain block-diagonal matmuls inside the kernel.
    p = obs_nhwc
    for _ in range(3):
        p = _space_to_depth2(p)
    x_flat = p.reshape(B, -1).astype(jnp.bfloat16)

    TB = min(batch_tile, _round_up(B, 8))
    Bp = _round_up(B, TB)
    grid = (Bp // TB,)
    x_flat = jnp.pad(x_flat, ((0, Bp - B), (0, 0)))
    mix_p = jnp.pad(mix.astype(jnp.float32), ((0, Bp - B), (0, Bp - B)))

    obs_dim_p, msgc_w, act_dim, q_w = (meta["obs_dim_p"], meta["msgc_w"],
                                       meta["act_dim"], meta["q_w"])
    cparams = pltpu.CompilerParams(dimension_semantics=("parallel",))

    # --- stage 1: CNN + obs MLP + msg encoder --------------------------------
    s1_slabs, s1_bias = kparams["s1_slabs"], kparams["s1_bias"]
    x_feat, msg_c = pl.pallas_call(
        functools.partial(_stage1_kernel, widths=tuple(meta["s1_widths"]),
                          layers=meta["s1_layers"], split=meta["s1_split"]),
        grid=grid,
        in_specs=([pl.BlockSpec((TB, x_flat.shape[1]), lambda i: (i, 0))]
                  + [pl.BlockSpec(s.shape, lambda i: (0, 0)) for s in s1_slabs]
                  + [pl.BlockSpec(s1_bias.shape, lambda i: (0, 0))]),
        out_specs=[pl.BlockSpec((TB, obs_dim_p), lambda i: (i, 0)),
                   pl.BlockSpec((TB, msgc_w), lambda i: (i, 0))],
        out_shape=[jax.ShapeDtypeStruct((Bp, obs_dim_p), jnp.bfloat16),
                   jax.ShapeDtypeStruct((Bp, msgc_w), jnp.float32)],
        compiler_params=cparams,
    )(x_flat, *s1_slabs, s1_bias)

    # --- stage 2: mixing + msg decoder + fused dueling head ------------------
    s2_slabs, s2_bias = kparams["s2_slabs"], kparams["s2_bias"]
    q_pad = pl.pallas_call(
        functools.partial(_stage2_kernel, widths=tuple(meta["s2_widths"]),
                          layers=meta["s2_layers"], act_dim=act_dim,
                          obs_dim_p=obs_dim_p, msgc_w=msgc_w,
                          bc_off=meta["bc_off"], bd1_off=meta["bd1_off"]),
        grid=grid,
        in_specs=([pl.BlockSpec((TB, Bp), lambda i: (i, 0)),        # mix rows
                   pl.BlockSpec((Bp, msgc_w), lambda i: (0, 0)),    # ALL msgs
                   pl.BlockSpec((TB, obs_dim_p), lambda i: (i, 0))]  # x_feat
                  + [pl.BlockSpec(s.shape, lambda i: (0, 0)) for s in s2_slabs]
                  + [pl.BlockSpec(s2_bias.shape, lambda i: (0, 0))]),
        out_specs=pl.BlockSpec((TB, q_w), lambda i: (i, 0)),
        out_shape=jax.ShapeDtypeStruct((Bp, q_w), jnp.float32),
        compiler_params=cparams,
    )(mix_p, msg_c, x_feat, *s2_slabs, s2_bias)

    return q_pad[:B, :act_dim]


# ----------------------------------------------------------------------------
# Parameter construction, fusion, padding and slab packing
# ----------------------------------------------------------------------------
def _init_linear(key, fan_in, fan_out):
    kw, kb = jax.random.split(key)
    w = jax.random.normal(kw, (fan_in, fan_out), jnp.float32) / jnp.sqrt(
        jnp.float32(fan_in))
    b = 0.1 * jax.random.normal(kb, (1, fan_out), jnp.float32)
    return w, b


def _init_mlp(key, dims):
    keys = jax.random.split(key, len(dims) - 1)
    return [_init_linear(k, dims[i], dims[i + 1]) for i, k in enumerate(keys)]


def _to_bf16(layers):
    return [(w.astype(jnp.bfloat16), b) for w, b in layers]


def _block_diag(a, b):
    za = jnp.zeros((a.shape[0], b.shape[1]), a.dtype)
    zb = jnp.zeros((b.shape[0], a.shape[1]), b.dtype)
    return jnp.concatenate(
        [jnp.concatenate([a, za], axis=1), jnp.concatenate([zb, b], axis=1)], axis=0)


def _pad_chain(layers, in_width):
    """Zero-pad a sequential (W, b, relu) chain so every fan-out is a multiple of
    128 lanes and each layer's fan-in matches the previous padded fan-out."""
    out, prev = [], in_width
    for w, b, relu in layers:
        rows, cols = int(w.shape[0]), int(w.shape[1])
        cols_p = _round_up(cols, 128)
        w_p = jnp.pad(w, ((0, prev - rows), (0, cols_p - cols)))
        b_p = jnp.pad(jnp.asarray(b, jnp.float32).reshape(1, -1),
                      ((0, 0), (0, cols_p - cols)))
        out.append((w_p, b_p, relu))
        prev = cols_p
    return out


class _Packer:
    """Packs padded (W, b, relu) layers into per-output-width bf16 weight slabs
    plus one f32 bias slab; records static offsets so in-kernel unpacking is
    free static ref slicing (all offsets are (8,128)-aligned)."""

    def __init__(self):
        self._w, self._rows, self._b = {}, {}, []
        self._boff = 0
        self.layers = []

    def add_bias(self, b):
        b = jnp.asarray(b, jnp.float32).reshape(1, -1)
        off = self._boff
        self._b.append(b)
        self._boff += int(b.shape[1])
        return off

    def add(self, w, b, relu):
        w = jnp.asarray(w, jnp.bfloat16)
        rows, cols = int(w.shape[0]), int(w.shape[1])
        r0 = self._rows.get(cols, 0)
        self._w.setdefault(cols, []).append(w)
        self._rows[cols] = r0 + rows
        b0 = self.add_bias(b)
        self.layers.append(dict(width=cols, r0=r0, rows=rows, b0=b0,
                                relu=bool(relu)))

    def finalize(self):
        widths = sorted(self._w)
        slabs = [jnp.concatenate(self._w[c], axis=0) for c in widths]
        bias = jnp.concatenate(self._b, axis=1)
        return widths, slabs, bias, self.layers


def make_qnet_params(key, channel_in, nbr_radius, hidden_dim, action_dim, msg_dim):
    obs_dim = action_dim * 64
    middle_dim = action_dim * 32
    nbr_size = 2 * nbr_radius + 1
    k = jax.random.split(key, 8)

    # Conv weights stored as (4*cin, cout) with (kh, kw, cin) row ordering.
    # TODO(synk): real PyTorch Conv2d checkpoints are (cout, cin, kh, kw);
    # permute to (kh, kw, cin, cout) and reshape before loading here.
    cnn_channels = [channel_in, hidden_dim * 2, hidden_dim * 4, hidden_dim * 8]
    cnn_keys = jax.random.split(k[0], 3)
    cnn = _to_bf16([
        _init_linear(cnn_keys[i], 4 * cnn_channels[i], cnn_channels[i + 1])
        for i in range(3)])
    obs_mlp = _to_bf16(_init_mlp(k[1], [hidden_dim * 8, 512, 512, obs_dim]))
    msg_weight = _init_mlp(k[2], [2, 16, 1])          # stays f32; hoisted below
    msg_encoder = _to_bf16(
        _init_mlp(k[3], [obs_dim, msg_dim, msg_dim * 2, msg_dim * 2, msg_dim]))
    msg_decoder = _to_bf16(
        _init_mlp(k[4], [msg_dim, msg_dim * 2, msg_dim * 2, msg_dim, obs_dim]))
    fc_A = _to_bf16(
        _init_mlp(k[5], [obs_dim * 2, middle_dim, middle_dim // 2, action_dim]))
    fc_V = _to_bf16(
        _init_mlp(k[6], [obs_dim * 2, middle_dim, middle_dim // 2, 1]))

    # --- MsgWeightNet hoisted: softmax(MLP(relative_pos), dim=0).T is constant.
    # TODO(synk): nets.MLP / nets.CNN norm & dropout assumed identity (eval mode).
    ar = jnp.arange(-nbr_radius, nbr_radius + 1, dtype=jnp.float32)
    rel = ar[None, :] * jnp.ones((nbr_size, nbr_size), dtype=jnp.float32)
    relative_pos = jnp.stack([rel, rel.T]).reshape(2, -1).T            # (n*n, 2)
    logits = relative_pos
    for i, (w, b) in enumerate(msg_weight):
        logits = logits @ w + b
        if i < len(msg_weight) - 1:
            logits = jnp.maximum(logits, 0.0)
    pos_weight = jax.nn.softmax(logits, axis=0).T                      # (1, n*n)

    # --- stage 1 chain: CNN (kron over quadtree pixels) + obs MLP + encoder ---
    (w1, b1), (w2, b2), (w3, b3) = cnn
    cnn_layers = [
        (jnp.kron(jnp.eye(16, dtype=w1.dtype), w1), jnp.tile(b1, (1, 16)), True),
        (jnp.kron(jnp.eye(4, dtype=w2.dtype), w2), jnp.tile(b2, (1, 4)), True),
        (w3, b3, True),
    ]
    obs_layers = [(w, b, i < len(obs_mlp) - 1) for i, (w, b) in enumerate(obs_mlp)]
    # The encoder's last (linear) layer and the decoder's first matmul commute
    # with the (B, B) batch mixing -> compose them host-side; the bias term
    # b_enc4 @ W_dec1 is re-applied in stage 2 scaled by rowsum(mix).
    (we1, be1), (we2, be2), (we3, be3), (we4, be4) = msg_encoder
    (wd1, bd1), (wd2, bd2), (wd3, bd3), (wd4, bd4) = msg_decoder
    w_comp = (we4.astype(jnp.float32) @ wd1.astype(jnp.float32)).astype(jnp.bfloat16)
    bc_vec = be4 @ wd1.astype(jnp.float32)                             # (1, 2*msg)
    enc_layers = [(we1, be1, True), (we2, be2, True), (we3, be3, True),
                  (w_comp, jnp.zeros((1, w_comp.shape[1]), jnp.float32), False)]

    p1 = _Packer()
    for w, b, relu in _pad_chain(cnn_layers + obs_layers + enc_layers,
                                 64 * channel_in):
        p1.add(w, b, relu)
    s1_widths, s1_slabs, s1_bias, s1_layers = p1.finalize()

    obs_dim_p = _round_up(obs_dim, 128)
    msgc_w = _round_up(2 * msg_dim, 128)

    # --- stage 2: decoder layers 2..4 + fused dueling head --------------------
    dec_layers = [(wd2, bd2, True), (wd3, bd3, True), (wd4, bd4, False)]
    (wa1, ba1), (wa2, ba2), (wa3, ba3) = fc_A
    (wv1, bv1), (wv2, bv2), (wv3, bv3) = fc_V
    w_h1 = jnp.concatenate([wa1, wv1], axis=1)               # (2*obs_dim, 2*mid)
    wx = jnp.pad(w_h1[:obs_dim], ((0, obs_dim_p - obs_dim), (0, 0)))
    wm = jnp.pad(w_h1[obs_dim:], ((0, obs_dim_p - obs_dim), (0, 0)))
    head_layers = [
        (jnp.concatenate([wx, wm], axis=0),
         jnp.concatenate([ba1, bv1], axis=1), True),
        (_block_diag(wa2, wv2), jnp.concatenate([ba2, bv2], axis=1), True),
        (_block_diag(wa3, wv3), jnp.concatenate([ba3, bv3], axis=1), False),
    ]
    p2 = _Packer()
    for w, b, relu in _pad_chain(dec_layers, msgc_w):
        p2.add(w, b, relu)
    for w, b, relu in _pad_chain(head_layers, 2 * obs_dim_p):
        p2.add(w, b, relu)
    bc_off = p2.add_bias(jnp.pad(bc_vec, ((0, 0), (0, msgc_w - bc_vec.shape[1]))))
    bd1_off = p2.add_bias(jnp.pad(bd1, ((0, 0), (0, msgc_w - bd1.shape[1]))))
    s2_widths, s2_slabs, s2_bias, s2_layers = p2.finalize()

    meta = dict(
        act_dim=action_dim, obs_dim_p=obs_dim_p, msgc_w=msgc_w,
        q_w=s2_layers[-1]["width"],
        s1_widths=s1_widths, s1_layers=s1_layers, s1_split=6,
        s2_widths=s2_widths, s2_layers=s2_layers,
        bc_off=bc_off, bd1_off=bd1_off,
    )
    params = dict(
        kernel=dict(s1_slabs=s1_slabs, s1_bias=s1_bias,
                    s2_slabs=s2_slabs, s2_bias=s2_bias),
        cnn=cnn, obs_mlp=obs_mlp, msg_encoder=msg_encoder,
        msg_decoder=msg_decoder, fc_A=fc_A, fc_V=fc_V,
        pos_weight=pos_weight, msg_dim=msg_dim,
    )
    return params, meta


# ----------------------------------------------------------------------------
# Pure-JAX reference mirroring the ORIGINAL (unfused) module structure
# ----------------------------------------------------------------------------
def _ref_linear(x, w, b, relu):
    y = jnp.dot(x.astype(w.dtype), w, preferred_element_type=jnp.float32) + b
    return jnp.maximum(y, 0.0) if relu else y


def _ref_mlp(x, layers):
    n = len(layers)
    for i, (w, b) in enumerate(layers):
        x = _ref_linear(x, w, b, relu=(i < n - 1))
    return x


def reference_forward(params, obs_nhwc, neighbors):
    B = obs_nhwc.shape[0]
    x = obs_nhwc
    for w, b in params["cnn"]:                      # CNN, post-activation ReLU
        p = _space_to_depth2(x)
        Bq, Hq, Wq, Cq = p.shape
        y = _ref_linear(p.reshape(Bq * Hq * Wq, Cq), w, b, relu=True)
        x = y.reshape(Bq, Hq, Wq, w.shape[1])
    x = x.reshape(B, -1)                            # Flatten
    x = _ref_mlp(x, params["obs_mlp"])
    weight = params["pos_weight"]
    others_msgs = _ref_mlp(x, params["msg_encoder"])
    neighbor_msg = jnp.zeros((B, params["msg_dim"]), jnp.float32)
    for i, nbr in neighbors.items():
        if nbr is None:
            continue
        agent_idx, pos_idx = nbr
        row = jnp.dot(weight[:, pos_idx].astype(jnp.bfloat16),
                      others_msgs[agent_idx].astype(jnp.bfloat16),
                      preferred_element_type=jnp.float32)
        neighbor_msg = neighbor_msg.at[i].set(row[0])
    msg = _ref_mlp(neighbor_msg, params["msg_decoder"])
    xc = jnp.concatenate([x, msg], axis=1)
    A = _ref_mlp(xc, params["fc_A"])
    V = _ref_mlp(xc, params["fc_V"])
    return V + A - jnp.mean(A, axis=1, keepdims=True)


# ----------------------------------------------------------------------------
if __name__ == "__main__":
    # Small config: CNN (k=2,s=2,p=0) x3 needs spatial 8 -> 4 -> 2 -> 1.
    batch = 2
    channel_in = 4
    spatial = 8
    nbr_radius = 3          # 7x7 neighbourhood -> 49 relative positions
    hidden_dim = 4          # hidden_dim*8 = 32 features after CNN
    action_dim = 5          # obs_dim = 320, middle_dim = 160
    msg_dim = 16

    key = jax.random.PRNGKey(0)
    k_obs, k_params = jax.random.split(key)
    params, meta = make_qnet_params(
        k_params, channel_in, nbr_radius, hidden_dim, action_dim, msg_dim)

    # Observation in PyTorch NCHW convention; convert to NHWC for the kernel.
    obs_nchw = jax.random.normal(
        k_obs, (batch, channel_in, spatial, spatial), dtype=jnp.float32)
    obs_nhwc = jnp.transpose(obs_nchw, (0, 2, 3, 1))

    # neighbors dict branch: agent 0 hears agents [0, 1] at relative positions
    # [3, 27]; agent 1 has no neighbours (its mixed message stays zero).
    # TODO(synk): the `neighbors: list` branch (re-encoding each neighbour's own
    # observation) is not implemented; only the dict branch is covered.
    neighbors = {
        0: (np.array([0, 1], dtype=np.int32), np.array([3, 27], dtype=np.int32)),
        1: None,
    }
    mix = build_mix(params["pos_weight"], neighbors, batch)

    fwd = jax.jit(functools.partial(qnet_forward, meta=meta))
    Q = jax.block_until_ready(fwd(params["kernel"], obs_nhwc, mix))
    Q_ref = jax.block_until_ready(reference_forward(params, obs_nhwc, neighbors))

    assert Q.shape == (batch, action_dim), Q.shape
    assert bool(jnp.all(jnp.isfinite(Q)))
    # Tolerance covers bf16 MXU matmuls plus the host-side enc4@dec1 fold.
    assert bool(jnp.allclose(Q, Q_ref, rtol=2e-2, atol=2e-2)), (Q, Q_ref)
    print("KERNEL_OK")
</pallas_src>

<mosaic_0001>
module attributes {stable_mosaic.version = 11 : i64} {
  func.func @_stage1_kernel(%arg0: i32, %arg1: memref<8x256xbf16, #tpu.memory_space<vmem>>, %arg2: memref<1280x128xbf16, #tpu.memory_space<vmem>>, %arg3: memref<512x384xbf16, #tpu.memory_space<vmem>>, %arg4: memref<640x512xbf16, #tpu.memory_space<vmem>>, %arg5: memref<1x2304xf32, #tpu.memory_space<vmem>>, %arg6: memref<8x384xbf16, #tpu.memory_space<vmem>>, %arg7: memref<8x128xf32, #tpu.memory_space<vmem>>) attributes {dimension_semantics = [#tpu.dimension_semantics<parallel>], iteration_bounds = array<i64: 1>, scalar_prefetch = 0 : i64, scratch_operands = 0 : i64, tpu.core_type = #tpu.core_type<tc>, window_params = [{transform_indices = @transform_0, window_bounds = array<i64: 8, 256>}, {pipeline_mode = #tpu.pipeline_mode<synchronous>, transform_indices = @transform_1, window_bounds = array<i64: 1280, 128>}, {pipeline_mode = #tpu.pipeline_mode<synchronous>, transform_indices = @transform_2, window_bounds = array<i64: 512, 384>}, {pipeline_mode = #tpu.pipeline_mode<synchronous>, transform_indices = @transform_3, window_bounds = array<i64: 640, 512>}, {pipeline_mode = #tpu.pipeline_mode<synchronous>, transform_indices = @transform_4, window_bounds = array<i64: 1, 2304>}, {transform_indices = @transform_5, window_bounds = array<i64: 8, 384>}, {transform_indices = @transform_6, window_bounds = array<i64: 8, 128>}]} {
    %c0 = arith.constant 0 : index
    %c0_0 = arith.constant 0 : index
    %0 = vector.load %arg1[%c0, %c0_0] : memref<8x256xbf16, #tpu.memory_space<vmem>>, vector<8x256xbf16>
    %c0_1 = arith.constant 0 : index
    %c0_2 = arith.constant 0 : index
    %1 = vector.load %arg2[%c0_1, %c0_2] : memref<1280x128xbf16, #tpu.memory_space<vmem>>, vector<256x128xbf16>
    %c0_3 = arith.constant 0 : index
    %c0_4 = arith.constant 0 : index
    %2 = vector.load %arg5[%c0_3, %c0_4] : memref<1x2304xf32, #tpu.memory_space<vmem>>, vector<1x128xf32>
    %cst = arith.constant dense<0.000000e+00> : vector<8x128xf32>
    %3 = tpu.matmul %0, %1, %cst {dimension_numbers = #tpu.dot_dimension_numbers<[1], [0], [0], [1], [0, 0, 1, 1], [], []>} : vector<8x256xbf16>, vector<256x128xbf16>, vector<8x128xf32> -> vector<8x128xf32>
    %4 = vector.broadcast %2 : vector<1x128xf32> to vector<8x128xf32>
    %5 = arith.addf %3, %4 : vector<8x128xf32>
    %cst_5 = arith.constant 0.000000e+00 : f32
    %6 = vector.broadcast %cst_5 : f32 to vector<8x128xf32>
    %7 = arith.maximumf %5, %6 : vector<8x128xf32>
    %c256 = arith.constant 256 : index
    %c0_6 = arith.constant 0 : index
    %8 = vector.load %arg2[%c256, %c0_6] : memref<1280x128xbf16, #tpu.memory_space<vmem>>, vector<128x128xbf16>
    %c0_7 = arith.constant 0 : index
    %c128 = arith.constant 128 : index
    %9 = vector.load %arg5[%c0_7, %c128] : memref<1x2304xf32, #tpu.memory_space<vmem>>, vector<1x128xf32>
    %10 = arith.truncf %7 : vector<8x128xf32> to vector<8x128xbf16>
    %cst_8 = arith.constant dense<0.000000e+00> : vector<8x128xf32>
    %11 = tpu.matmul %10, %8, %cst_8 {dimension_numbers = #tpu.dot_dimension_numbers<[1], [0], [0], [1], [0, 0, 1, 1], [], []>} : vector<8x128xbf16>, vector<128x128xbf16>, vector<8x128xf32> -> vector<8x128xf32>
    %12 = vector.broadcast %9 : vector<1x128xf32> to vector<8x128xf32>
    %13 = arith.addf %11, %12 : vector<8x128xf32>
    %cst_9 = arith.constant 0.000000e+00 : f32
    %14 = vector.broadcast %cst_9 : f32 to vector<8x128xf32>
    %15 = arith.maximumf %13, %14 : vector<8x128xf32>
    %c384 = arith.constant 384 : index
    %c0_10 = arith.constant 0 : index
    %16 = vector.load %arg2[%c384, %c0_10] : memref<1280x128xbf16, #tpu.memory_space<vmem>>, vector<128x128xbf16>
    %c0_11 = arith.constant 0 : index
    %c256_12 = arith.constant 256 : index
    %17 = vector.load %arg5[%c0_11, %c256_12] : memref<1x2304xf32, #tpu.memory_space<vmem>>, vector<1x128xf32>
    %18 = arith.truncf %15 : vector<8x128xf32> to vector<8x128xbf16>
    %cst_13 = arith.constant dense<0.000000e+00> : vector<8x128xf32>
    %19 = tpu.matmul %18, %16, %cst_13 {dimension_numbers = #tpu.dot_dimension_numbers<[1], [0], [0], [1], [0, 0, 1, 1], [], []>} : vector<8x128xbf16>, vector<128x128xbf16>, vector<8x128xf32> -> vector<8x128xf32>
    %20 = vector.broadcast %17 : vector<1x128xf32> to vector<8x128xf32>
    %21 = arith.addf %19, %20 : vector<8x128xf32>
    %cst_14 = arith.constant 0.000000e+00 : f32
    %22 = vector.broadcast %cst_14 : f32 to vector<8x128xf32>
    %23 = arith.maximumf %21, %22 : vector<8x128xf32>
    %c0_15 = arith.constant 0 : index
    %c0_16 = arith.constant 0 : index
    %24 = vector.load %arg4[%c0_15, %c0_16] : memref<640x512xbf16, #tpu.memory_space<vmem>>, vector<128x512xbf16>
    %c0_17 = arith.constant 0 : index
    %c384_18 = arith.constant 384 : index
    %25 = vector.load %arg5[%c0_17, %c384_18] : memref<1x2304xf32, #tpu.memory_space<vmem>>, vector<1x512xf32>
    %26 = arith.truncf %23 : vector<8x128xf32> to vector<8x128xbf16>
    %cst_19 = arith.constant dense<0.000000e+00> : vector<8x512xf32>
    %27 = tpu.matmul %26, %24, %cst_19 {dimension_numbers = #tpu.dot_dimension_numbers<[1], [0], [0], [1], [0, 0, 1, 1], [], []>} : vector<8x128xbf16>, vector<128x512xbf16>, vector<8x512xf32> -> vector<8x512xf32>
    %28 = vector.broadcast %25 : vector<1x512xf32> to vector<8x512xf32>
    %29 = arith.addf %27, %28 : vector<8x512xf32>
    %cst_20 = arith.constant 0.000000e+00 : f32
    %30 = vector.broadcast %cst_20 : f32 to vector<8x512xf32>
    %31 = arith.maximumf %29, %30 : vector<8x512xf32>
    %c128_21 = arith.constant 128 : index
    %c0_22 = arith.constant 0 : index
    %32 = vector.load %arg4[%c128_21, %c0_22] : memref<640x512xbf16, #tpu.memory_space<vmem>>, vector<512x512xbf16>
    %c0_23 = arith.constant 0 : index
    %c896 = arith.constant 896 : index
    %33 = vector.load %arg5[%c0_23, %c896] : memref<1x2304xf32, #tpu.memory_space<vmem>>, vector<1x512xf32>
    %34 = arith.truncf %31 : vector<8x512xf32> to vector<8x512xbf16>
    %cst_24 = arith.constant dense<0.000000e+00> : vector<8x512xf32>
    %35 = tpu.matmul %34, %32, %cst_24 {dimension_numbers = #tpu.dot_dimension_numbers<[1], [0], [0], [1], [0, 0, 1, 1], [], []>} : vector<8x512xbf16>, vector<512x512xbf16>, vector<8x512xf32> -> vector<8x512xf32>
    %36 = vector.broadcast %33 : vector<1x512xf32> to vector<8x512xf32>
    %37 = arith.addf %35, %36 : vector<8x512xf32>
    %cst_25 = arith.constant 0.000000e+00 : f32
    %38 = vector.broadcast %cst_25 : f32 to vector<8x512xf32>
    %39 = arith.maximumf %37, %38 : vector<8x512xf32>
    %c0_26 = arith.constant 0 : index
    %c0_27 = arith.constant 0 : index
    %40 = vector.load %arg3[%c0_26, %c0_27] : memref<512x384xbf16, #tpu.memory_space<vmem>>, vector<512x384xbf16>
    %c0_28 = arith.constant 0 : index
    %c1408 = arith.constant 1408 : index
    %41 = vector.load %arg5[%c0_28, %c1408] : memref<1x2304xf32, #tpu.memory_space<vmem>>, vector<1x384xf32>
    %42 = arith.truncf %39 : vector<8x512xf32> to vector<8x512xbf16>
    %cst_29 = arith.constant dense<0.000000e+00> : vector<8x384xf32>
    %43 = tpu.matmul %42, %40, %cst_29 {dimension_numbers = #tpu.dot_dimension_numbers<[1], [0], [0], [1], [0, 0, 1, 1], [], []>} : vector<8x512xbf16>, vector<512x384xbf16>, vector<8x384xf32> -> vector<8x384xf32>
    %44 = vector.broadcast %41 : vector<1x384xf32> to vector<8x384xf32>
    %45 = arith.addf %43, %44 : vector<8x384xf32>
    %46 = arith.truncf %45 : vector<8x384xf32> to vector<8x384xbf16>
    %c0_30 = arith.constant 0 : index
    %c0_31 = arith.constant 0 : index
    %47 = vector.load %arg6[%c0_30, %c0_31] : memref<8x384xbf16, #tpu.memory_space<vmem>>, vector<8x384xbf16>
    tpu.vector_store %arg6[%c0_30, %c0_31], %46 {strides = array<i32>} : memref<8x384xbf16, #tpu.memory_space<vmem>>, vector<8x384xbf16>,
    %c512 = arith.constant 512 : index
    %c0_32 = arith.constant 0 : index
    %48 = vector.load %arg2[%c512, %c0_32] : memref<1280x128xbf16, #tpu.memory_space<vmem>>, vector<384x128xbf16>
    %c0_33 = arith.constant 0 : index
    %c1792 = arith.constant 1792 : index
    %49 = vector.load %arg5[%c0_33, %c1792] : memref<1x2304xf32, #tpu.memory_space<vmem>>, vector<1x128xf32>
    %50 = arith.truncf %45 : vector<8x384xf32> to vector<8x384xbf16>
    %cst_34 = arith.constant dense<0.000000e+00> : vector<8x128xf32>
    %51 = tpu.matmul %50, %48, %cst_34 {dimension_numbers = #tpu.dot_dimension_numbers<[1], [0], [0], [1], [0, 0, 1, 1], [], []>} : vector<8x384xbf16>, vector<384x128xbf16>, vector<8x128xf32> -> vector<8x128xf32>
    %52 = vector.broadcast %49 : vector<1x128xf32> to vector<8x128xf32>
    %53 = arith.addf %51, %52 : vector<8x128xf32>
    %cst_35 = arith.constant 0.000000e+00 : f32
    %54 = vector.broadcast %cst_35 : f32 to vector<8x128xf32>
    %55 = arith.maximumf %53, %54 : vector<8x128xf32>
    %c896_36 = arith.constant 896 : index
    %c0_37 = arith.constant 0 : index
    %56 = vector.load %arg2[%c896_36, %c0_37] : memref<1280x128xbf16, #tpu.memory_space<vmem>>, vector<128x128xbf16>
    %c0_38 = arith.constant 0 : index
    %c1920 = arith.constant 1920 : index
    %57 = vector.load %arg5[%c0_38, %c1920] : memref<1x2304xf32, #tpu.memory_space<vmem>>, vector<1x128xf32>
    %58 = arith.truncf %55 : vector<8x128xf32> to vector<8x128xbf16>
    %cst_39 = arith.constant dense<0.000000e+00> : vector<8x128xf32>
    %59 = tpu.matmul %58, %56, %cst_39 {dimension_numbers = #tpu.dot_dimension_numbers<[1], [0], [0], [1], [0, 0, 1, 1], [], []>} : vector<8x128xbf16>, vector<128x128xbf16>, vector<8x128xf32> -> vector<8x128xf32>
    %60 = vector.broadcast %57 : vector<1x128xf32> to vector<8x128xf32>
    %61 = arith.addf %59, %60 : vector<8x128xf32>
    %cst_40 = arith.constant 0.000000e+00 : f32
    %62 = vector.broadcast %cst_40 : f32 to vector<8x128xf32>
    %63 = arith.maximumf %61, %62 : vector<8x128xf32>
    %c1024 = arith.constant 1024 : index
    %c0_41 = arith.constant 0 : index
    %64 = vector.load %arg2[%c1024, %c0_41] : memref<1280x128xbf16, #tpu.memory_space<vmem>>, vector<128x128xbf16>
    %c0_42 = arith.constant 0 : index
    %c2048 = arith.constant 2048 : index
    %65 = vector.load %arg5[%c0_42, %c2048] : memref<1x2304xf32, #tpu.memory_space<vmem>>, vector<1x128xf32>
    %66 = arith.truncf %63 : vector<8x128xf32> to vector<8x128xbf16>
    %cst_43 = arith.constant dense<0.000000e+00> : vector<8x128xf32>
    %67 = tpu.matmul %66, %64, %cst_43 {dimension_numbers = #tpu.dot_dimension_numbers<[1], [0], [0], [1], [0, 0, 1, 1], [], []>} : vector<8x128xbf16>, vector<128x128xbf16>, vector<8x128xf32> -> vector<8x128xf32>
    %68 = vector.broadcast %65 : vector<1x128xf32> to vector<8x128xf32>
    %69 = arith.addf %67, %68 : vector<8x128xf32>
    %cst_44 = arith.constant 0.000000e+00 : f32
    %70 = vector.broadcast %cst_44 : f32 to vector<8x128xf32>
    %71 = arith.maximumf %69, %70 : vector<8x128xf32>
    %c1152 = arith.constant 1152 : index
    %c0_45 = arith.constant 0 : index
    %72 = vector.load %arg2[%c1152, %c0_45] : memref<1280x128xbf16, #tpu.memory_space<vmem>>, vector<128x128xbf16>
    %c0_46 = arith.constant 0 : index
    %c2176 = arith.constant 2176 : index
    %73 = vector.load %arg5[%c0_46, %c2176] : memref<1x2304xf32, #tpu.memory_space<vmem>>, vector<1x128xf32>
    %74 = arith.truncf %71 : vector<8x128xf32> to vector<8x128xbf16>
    %cst_47 = arith.constant dense<0.000000e+00> : vector<8x128xf32>
    %75 = tpu.matmul %74, %72, %cst_47 {dimension_numbers = #tpu.dot_dimension_numbers<[1], [0], [0], [1], [0, 0, 1, 1], [], []>} : vector<8x128xbf16>, vector<128x128xbf16>, vector<8x128xf32> -> vector<8x128xf32>
    %76 = vector.broadcast %73 : vector<1x128xf32> to vector<8x128xf32>
    %77 = arith.addf %75, %76 : vector<8x128xf32>
    %c0_48 = arith.constant 0 : index
    %c0_49 = arith.constant 0 : index
    %78 = vector.load %arg7[%c0_48, %c0_49] : memref<8x128xf32, #tpu.memory_space<vmem>>, vector<8x128xf32>
    tpu.vector_store %arg7[%c0_48, %c0_49], %77 {strides = array<i32>} : memref<8x128xf32, #tpu.memory_space<vmem>>, vector<8x128xf32>,
    return
  }
  func.func @transform_0(%arg0: i32) -> (i32, i32) {
    %c0_i32 = arith.constant 0 : i32
    %c0_i32_0 = arith.constant 0 : i32
    return %arg0, %c0_i32 : i32, i32
  }
  func.func @transform_1(%arg0: i32) -> (i32, i32) {
    %c0_i32 = arith.constant 0 : i32
    %c0_i32_0 = arith.constant 0 : i32
    %c0_i32_1 = arith.constant 0 : i32
    return %c0_i32, %c0_i32_0 : i32, i32
  }
  func.func @transform_2(%arg0: i32) -> (i32, i32) {
    %c0_i32 = arith.constant 0 : i32
    %c0_i32_0 = arith.constant 0 : i32
    %c0_i32_1 = arith.constant 0 : i32
    return %c0_i32, %c0_i32_0 : i32, i32
  }
  func.func @transform_3(%arg0: i32) -> (i32, i32) {
    %c0_i32 = arith.constant 0 : i32
    %c0_i32_0 = arith.constant 0 : i32
    %c0_i32_1 = arith.constant 0 : i32
    return %c0_i32, %c0_i32_0 : i32, i32
  }
  func.func @transform_4(%arg0: i32) -> (i32, i32) {
    %c0_i32 = arith.constant 0 : i32
    %c0_i32_0 = arith.constant 0 : i32
    %c0_i32_1 = arith.constant 0 : i32
    return %c0_i32, %c0_i32_0 : i32, i32
  }
  func.func @transform_5(%arg0: i32) -> (i32, i32) {
    %c0_i32 = arith.constant 0 : i32
    %c0_i32_0 = arith.constant 0 : i32
    return %arg0, %c0_i32 : i32, i32
  }
  func.func @transform_6(%arg0: i32) -> (i32, i32) {
    %c0_i32 = arith.constant 0 : i32
    %c0_i32_0 = arith.constant 0 : i32
    return %arg0, %c0_i32 : i32, i32
  }
}

module attributes {stable_mosaic.version = 11 : i64} {
  func.func @_stage2_kernel(%arg0: i32, %arg1: memref<8x8xf32, #tpu.memory_space<vmem>>, %arg2: memref<8x128xf32, #tpu.memory_space<vmem>>, %arg3: memref<8x384xbf16, #tpu.memory_space<vmem>>, %arg4: memref<512x128xbf16, #tpu.memory_space<vmem>>, %arg5: memref<384x256xbf16, #tpu.memory_space<vmem>>, %arg6: memref<896x384xbf16, #tpu.memory_space<vmem>>, %arg7: memref<1x1664xf32, #tpu.memory_space<vmem>>, %arg8: memref<8x128xf32, #tpu.memory_space<vmem>>) attributes {dimension_semantics = [#tpu.dimension_semantics<parallel>], iteration_bounds = array<i64: 1>, scalar_prefetch = 0 : i64, scratch_operands = 0 : i64, tpu.core_type = #tpu.core_type<tc>, window_params = [{transform_indices = @transform_0, window_bounds = array<i64: 8, 8>}, {pipeline_mode = #tpu.pipeline_mode<synchronous>, transform_indices = @transform_1, window_bounds = array<i64: 8, 128>}, {transform_indices = @transform_2, window_bounds = array<i64: 8, 384>}, {pipeline_mode = #tpu.pipeline_mode<synchronous>, transform_indices = @transform_3, window_bounds = array<i64: 512, 128>}, {pipeline_mode = #tpu.pipeline_mode<synchronous>, transform_indices = @transform_4, window_bounds = array<i64: 384, 256>}, {pipeline_mode = #tpu.pipeline_mode<synchronous>, transform_indices = @transform_5, window_bounds = array<i64: 896, 384>}, {pipeline_mode = #tpu.pipeline_mode<synchronous>, transform_indices = @transform_6, window_bounds = array<i64: 1, 1664>}, {transform_indices = @transform_7, window_bounds = array<i64: 8, 128>}]} {
    %c0 = arith.constant 0 : index
    %c0_0 = arith.constant 0 : index
    %0 = vector.load %arg1[%c0, %c0_0] : memref<8x8xf32, #tpu.memory_space<vmem>>, vector<8x8xf32>
    %1 = arith.truncf %0 : vector<8x8xf32> to vector<8x8xbf16>
    %c0_1 = arith.constant 0 : index
    %c0_2 = arith.constant 0 : index
    %2 = vector.load %arg2[%c0_1, %c0_2] : memref<8x128xf32, #tpu.memory_space<vmem>>, vector<8x128xf32>
    %3 = arith.truncf %2 : vector<8x128xf32> to vector<8x128xbf16>
    %cst = arith.constant dense<0.000000e+00> : vector<8x128xf32>
    %4 = tpu.matmul %1, %3, %cst {dimension_numbers = #tpu.dot_dimension_numbers<[1], [0], [0], [1], [0, 0, 1, 1], [], []>} : vector<8x8xbf16>, vector<8x128xbf16>, vector<8x128xf32> -> vector<8x128xf32>
    %cst_3 = arith.constant dense<0.000000e+00> : vector<8xf32>
    %5 = vector.multi_reduction <add>, %0, %cst_3 [1] : vector<8x8xf32> to vector<8xf32>
    %6 = vector.shape_cast %5 : vector<8xf32> to vector<8x1xf32>
    %c0_4 = arith.constant 0 : index
    %c1408 = arith.constant 1408 : index
    %7 = vector.load %arg7[%c0_4, %c1408] : memref<1x1664xf32, #tpu.memory_space<vmem>>, vector<1x128xf32>
    %c0_5 = arith.constant 0 : index
    %c1536 = arith.constant 1536 : index
    %8 = vector.load %arg7[%c0_5, %c1536] : memref<1x1664xf32, #tpu.memory_space<vmem>>, vector<1x128xf32>
    %9 = vector.broadcast %6 : vector<8x1xf32> to vector<8x128xf32>
    %10 = vector.broadcast %7 : vector<1x128xf32> to vector<8x128xf32>
    %11 = arith.mulf %9, %10 : vector<8x128xf32>
    %12 = arith.addf %4, %11 : vector<8x128xf32>
    %13 = vector.broadcast %8 : vector<1x128xf32> to vector<8x128xf32>
    %14 = arith.addf %12, %13 : vector<8x128xf32>
    %cst_6 = arith.constant 0.000000e+00 : f32
    %15 = vector.broadcast %cst_6 : f32 to vector<8x128xf32>
    %16 = arith.maximumf %14, %15 : vector<8x128xf32>
    %c0_7 = arith.constant 0 : index
    %c0_8 = arith.constant 0 : index
    %17 = vector.load %arg4[%c0_7, %c0_8] : memref<512x128xbf16, #tpu.memory_space<vmem>>, vector<128x128xbf16>
    %c0_9 = arith.constant 0 : index
    %c0_10 = arith.constant 0 : index
    %18 = vector.load %arg7[%c0_9, %c0_10] : memref<1x1664xf32, #tpu.memory_space<vmem>>, vector<1x128xf32>
    %19 = arith.truncf %16 : vector<8x128xf32> to vector<8x128xbf16>
    %cst_11 = arith.constant dense<0.000000e+00> : vector<8x128xf32>
    %20 = tpu.matmul %19, %17, %cst_11 {dimension_numbers = #tpu.dot_dimension_numbers<[1], [0], [0], [1], [0, 0, 1, 1], [], []>} : vector<8x128xbf16>, vector<128x128xbf16>, vector<8x128xf32> -> vector<8x128xf32>
    %21 = vector.broadcast %18 : vector<1x128xf32> to vector<8x128xf32>
    %22 = arith.addf %20, %21 : vector<8x128xf32>
    %cst_12 = arith.constant 0.000000e+00 : f32
    %23 = vector.broadcast %cst_12 : f32 to vector<8x128xf32>
    %24 = arith.maximumf %22, %23 : vector<8x128xf32>
    %c128 = arith.constant 128 : index
    %c0_13 = arith.constant 0 : index
    %25 = vector.load %arg4[%c128, %c0_13] : memref<512x128xbf16, #tpu.memory_space<vmem>>, vector<128x128xbf16>
    %c0_14 = arith.constant 0 : index
    %c128_15 = arith.constant 128 : index
    %26 = vector.load %arg7[%c0_14, %c128_15] : memref<1x1664xf32, #tpu.memory_space<vmem>>, vector<1x128xf32>
    %27 = arith.truncf %24 : vector<8x128xf32> to vector<8x128xbf16>
    %cst_16 = arith.constant dense<0.000000e+00> : vector<8x128xf32>
    %28 = tpu.matmul %27, %25, %cst_16 {dimension_numbers = #tpu.dot_dimension_numbers<[1], [0], [0], [1], [0, 0, 1, 1], [], []>} : vector<8x128xbf16>, vector<128x128xbf16>, vector<8x128xf32> -> vector<8x128xf32>
    %29 = vector.broadcast %26 : vector<1x128xf32> to vector<8x128xf32>
    %30 = arith.addf %28, %29 : vector<8x128xf32>
    %cst_17 = arith.constant 0.000000e+00 : f32
    %31 = vector.broadcast %cst_17 : f32 to vector<8x128xf32>
    %32 = arith.maximumf %30, %31 : vector<8x128xf32>
    %c0_18 = arith.constant 0 : index
    %c0_19 = arith.constant 0 : index
    %33 = vector.load %arg6[%c0_18, %c0_19] : memref<896x384xbf16, #tpu.memory_space<vmem>>, vector<128x384xbf16>
    %c0_20 = arith.constant 0 : index
    %c256 = arith.constant 256 : index
    %34 = vector.load %arg7[%c0_20, %c256] : memref<1x1664xf32, #tpu.memory_space<vmem>>, vector<1x384xf32>
    %35 = arith.truncf %32 : vector<8x128xf32> to vector<8x128xbf16>
    %cst_21 = arith.constant dense<0.000000e+00> : vector<8x384xf32>
    %36 = tpu.matmul %35, %33, %cst_21 {dimension_numbers = #tpu.dot_dimension_numbers<[1], [0], [0], [1], [0, 0, 1, 1], [], []>} : vector<8x128xbf16>, vector<128x384xbf16>, vector<8x384xf32> -> vector<8x384xf32>
    %37 = vector.broadcast %34 : vector<1x384xf32> to vector<8x384xf32>
    %38 = arith.addf %36, %37 : vector<8x384xf32>
    %c128_22 = arith.constant 128 : index
    %c0_23 = arith.constant 0 : index
    %39 = vector.load %arg6[%c128_22, %c0_23] : memref<896x384xbf16, #tpu.memory_space<vmem>>, vector<384x384xbf16>
    %c512 = arith.constant 512 : index
    %c0_24 = arith.constant 0 : index
    %40 = vector.load %arg6[%c512, %c0_24] : memref<896x384xbf16, #tpu.memory_space<vmem>>, vector<384x384xbf16>
    %c0_25 = arith.constant 0 : index
    %c640 = arith.constant 640 : index
    %41 = vector.load %arg7[%c0_25, %c640] : memref<1x1664xf32, #tpu.memory_space<vmem>>, vector<1x384xf32>
    %c0_26 = arith.constant 0 : index
    %c0_27 = arith.constant 0 : index
    %42 = vector.load %arg3[%c0_26, %c0_27] : memref<8x384xbf16, #tpu.memory_space<vmem>>, vector<8x384xbf16>
    %cst_28 = arith.constant dense<0.000000e+00> : vector<8x384xf32>
    %43 = tpu.matmul %42, %39, %cst_28 {dimension_numbers = #tpu.dot_dimension_numbers<[1], [0], [0], [1], [0, 0, 1, 1], [], []>} : vector<8x384xbf16>, vector<384x384xbf16>, vector<8x384xf32> -> vector<8x384xf32>
    %44 = arith.truncf %38 : vector<8x384xf32> to vector<8x384xbf16>
    %cst_29 = arith.constant dense<0.000000e+00> : vector<8x384xf32>
    %45 = tpu.matmul %44, %40, %cst_29 {dimension_numbers = #tpu.dot_dimension_numbers<[1], [0], [0], [1], [0, 0, 1, 1], [], []>} : vector<8x384xbf16>, vector<384x384xbf16>, vector<8x384xf32> -> vector<8x384xf32>
    %46 = arith.addf %43, %45 : vector<8x384xf32>
    %47 = vector.broadcast %41 : vector<1x384xf32> to vector<8x384xf32>
    %48 = arith.addf %46, %47 : vector<8x384xf32>
    %cst_30 = arith.constant 0.000000e+00 : f32
    %49 = vector.broadcast %cst_30 : f32 to vector<8x384xf32>
    %50 = arith.maximumf %48, %49 : vector<8x384xf32>
    %c0_31 = arith.constant 0 : index
    %c0_32 = arith.constant 0 : index
    %51 = vector.load %arg5[%c0_31, %c0_32] : memref<384x256xbf16, #tpu.memory_space<vmem>>, vector<384x256xbf16>
    %c0_33 = arith.constant 0 : index
    %c1024 = arith.constant 1024 : index
    %52 = vector.load %arg7[%c0_33, %c1024] : memref<1x1664xf32, #tpu.memory_space<vmem>>, vector<1x256xf32>
    %53 = arith.truncf %50 : vector<8x384xf32> to vector<8x384xbf16>
    %cst_34 = arith.constant dense<0.000000e+00> : vector<8x256xf32>
    %54 = tpu.matmul %53, %51, %cst_34 {dimension_numbers = #tpu.dot_dimension_numbers<[1], [0], [0], [1], [0, 0, 1, 1], [], []>} : vector<8x384xbf16>, vector<384x256xbf16>, vector<8x256xf32> -> vector<8x256xf32>
    %55 = vector.broadcast %52 : vector<1x256xf32> to vector<8x256xf32>
    %56 = arith.addf %54, %55 : vector<8x256xf32>
    %cst_35 = arith.constant 0.000000e+00 : f32
    %57 = vector.broadcast %cst_35 : f32 to vector<8x256xf32>
    %58 = arith.maximumf %56, %57 : vector<8x256xf32>
    %c256_36 = arith.constant 256 : index
    %c0_37 = arith.constant 0 : index
    %59 = vector.load %arg4[%c256_36, %c0_37] : memref<512x128xbf16, #tpu.memory_space<vmem>>, vector<256x128xbf16>
    %c0_38 = arith.constant 0 : index
    %c1280 = arith.constant 1280 : index
    %60 = vector.load %arg7[%c0_38, %c1280] : memref<1x1664xf32, #tpu.memory_space<vmem>>, vector<1x128xf32>
    %61 = arith.truncf %58 : vector<8x256xf32> to vector<8x256xbf16>
    %cst_39 = arith.constant dense<0.000000e+00> : vector<8x128xf32>
    %62 = tpu.matmul %61, %59, %cst_39 {dimension_numbers = #tpu.dot_dimension_numbers<[1], [0], [0], [1], [0, 0, 1, 1], [], []>} : vector<8x256xbf16>, vector<256x128xbf16>, vector<8x128xf32> -> vector<8x128xf32>
    %63 = vector.broadcast %60 : vector<1x128xf32> to vector<8x128xf32>
    %64 = arith.addf %62, %63 : vector<8x128xf32>
    %65 = vector.extract_strided_slice %64 {offsets = [0, 5], sizes = [8, 1], strides = [1, 1]} : vector<8x128xf32> to vector<8x1xf32>
    %cst_40 = arith.constant dense<0.000000e+00> : vector<8xf32>
    %66 = vector.multi_reduction <add>, %64, %cst_40 [1] : vector<8x128xf32> to vector<8xf32>
    %67 = vector.shape_cast %66 : vector<8xf32> to vector<8x1xf32>
    %68 = arith.subf %67, %65 : vector<8x1xf32>
    %cst_41 = arith.constant 2.000000e-01 : f32
    %69 = vector.broadcast %cst_41 : f32 to vector<8x1xf32>
    %70 = arith.mulf %68, %69 : vector<8x1xf32>
    %71 = vector.broadcast %65 : vector<8x1xf32> to vector<8x128xf32>
    %72 = arith.addf %64, %71 : vector<8x128xf32>
    %73 = vector.broadcast %70 : vector<8x1xf32> to vector<8x128xf32>
    %74 = arith.subf %72, %73 : vector<8x128xf32>
    %c0_42 = arith.constant 0 : index
    %c0_43 = arith.constant 0 : index
    %75 = vector.load %arg8[%c0_42, %c0_43] : memref<8x128xf32, #tpu.memory_space<vmem>>, vector<8x128xf32>
    tpu.vector_store %arg8[%c0_42, %c0_43], %74 {strides = array<i32>} : memref<8x128xf32, #tpu.memory_space<vmem>>, vector<8x128xf32>,
    return
  }
  func.func @transform_0(%arg0: i32) -> (i32, i32) {
    %c0_i32 = arith.constant 0 : i32
    %c0_i32_0 = arith.constant 0 : i32
    return %arg0, %c0_i32 : i32, i32
  }
  func.func @transform_1(%arg0: i32) -> (i32, i32) {
    %c0_i32 = arith.constant 0 : i32
    %c0_i32_0 = arith.constant 0 : i32
    %c0_i32_1 = arith.constant 0 : i32
    return %c0_i32, %c0_i32_0 : i32, i32
  }
  func.func @transform_2(%arg0: i32) -> (i32, i32) {
    %c0_i32 = arith.constant 0 : i32
    %c0_i32_0 = arith.constant 0 : i32
    return %arg0, %c0_i32 : i32, i32
  }
  func.func @transform_3(%arg0: i32) -> (i32, i32) {
    %c0_i32 = arith.constant 0 : i32
    %c0_i32_0 = arith.constant 0 : i32
    %c0_i32_1 = arith.constant 0 : i32
    return %c0_i32, %c0_i32_0 : i32, i32
  }
  func.func @transform_4(%arg0: i32) -> (i32, i32) {
    %c0_i32 = arith.constant 0 : i32
    %c0_i32_0 = arith.constant 0 : i32
    %c0_i32_1 = arith.constant 0 : i32
    return %c0_i32, %c0_i32_0 : i32, i32
  }
  func.func @transform_5(%arg0: i32) -> (i32, i32) {
    %c0_i32 = arith.constant 0 : i32
    %c0_i32_0 = arith.constant 0 : i32
    %c0_i32_1 = arith.constant 0 : i32
    return %c0_i32, %c0_i32_0 : i32, i32
  }
  func.func @transform_6(%arg0: i32) -> (i32, i32) {
    %c0_i32 = arith.constant 0 : i32
    %c0_i32_0 = arith.constant 0 : i32
    %c0_i32_1 = arith.constant 0 : i32
    return %c0_i32, %c0_i32_0 : i32, i32
  }
  func.func @transform_7(%arg0: i32) -> (i32, i32) {
    %c0_i32 = arith.constant 0 : i32
    %c0_i32_0 = arith.constant 0 : i32
    return %arg0, %c0_i32 : i32, i32
  }
}

</mosaic_0001>

<llo_original>
// kernel: qnet_forward.3
$region0: #{qnet_forward.3}
  #allocation0 [shape = 'u32[]', space=smem, size = 0x4, offset = 0x4, fixed_abs, tag = 'smem constant byte address 0x4 - core index']
  #allocation1 [shape = 'u32[72,128]{1,0:T(1,128)}', space=vmem, size = 0x9000, scoped, tag = 'internal scratch']
  %s0 = inlined_call_operand.vmem [shape: f32[8,8], index: 0, kind: input, shape index: {}]
  %s1 = inlined_call_operand.vmem [shape: f32[8,128], index: 1, kind: input, shape index: {}]
  %s2 = inlined_call_operand.vmem [shape: bf16[8,384], index: 2, kind: input, shape index: {}]
  %s3 = inlined_call_operand.hbm [shape: bf16[512,128], index: 3, kind: input, shape index: {}]
  %s4 = inlined_call_operand.vmem [shape: bf16[384,256], index: 4, kind: input, shape index: {}]
  %s5 = inlined_call_operand.hbm [shape: bf16[896,384], index: 5, kind: input, shape index: {}]
  %s6 = inlined_call_operand.hbm [shape: f32[1,1664], index: 6, kind: input, shape index: {}]
  %s7 = inlined_call_operand.vmem [shape: f32[8,128], index: 7, kind: output, shape index: {}]
  %s8 = sld [smem:[#allocation0]]
  $region50: #{qnet_forward.3} parent=0
    _
  %s10 = ssub.s32 1, %s8
  %s11 = scalar_select 0, %s10, %s8
  $region1: #{qnet_forward.3} parent=0
    #allocation2 [shape = 'u8[131072]{0}', space=vmem, size = 0x20000, scoped, tag = 'input window, operand 3, single buffered']
    #allocation3 [shape = 's32[1]{0}', space=sflag, size = 0x4, scoped, tag = 'scoped memory for qnet_forward.3']
    #allocation4 [shape = 'u8[688128]{0}', space=vmem, size = 0xa8000, scoped, tag = 'input window, operand 5, single buffered']
    #allocation5 [shape = 's32[1]{0}', space=sflag, size = 0x4, scoped, tag = 'scoped memory for qnet_forward.3']
    #allocation6 [shape = 'u8[6656]{0}', space=vmem, size = 0x1c00, scoped, tag = 'input window, operand 6, single buffered']
    %12 = vsyncpa [#allocation3], 0
    %13 = vsyncpa [#allocation5], 0
    // Predicated region
    $region2: #{qnet_forward.3} parent=1 // pred_check
      _
    $region3: #{qnet_forward.3} parent=1 // pred_check_branch
      %15 = sbr.rel (0) target = $region5
    $region4: #{qnet_forward.3} parent=1 // pred_region
      _
    $region5: #{qnet_forward.3} parent=1 // pred_fallthru
      _
    // Predicated region
    $region6: #{qnet_forward.3} parent=1 // pred_check
      _
    $region7: #{qnet_forward.3} parent=1 // pred_check_branch
      %17 = sbr.rel (0) target = $region9
    $region8: #{qnet_forward.3} parent=1 // pred_region
      _
    $region9: #{qnet_forward.3} parent=1 // pred_fallthru
      _
    // Predicated region
    $region10: #{qnet_forward.3} parent=1 // pred_check
      _
    $region11: #{qnet_forward.3} parent=1 // pred_check_branch
      %19 = sbr.rel (0) target = $region13
    $region12: #{qnet_forward.3} parent=1 // pred_region
      _
    $region13: #{qnet_forward.3} parent=1 // pred_fallthru
      _
    // Predicated region
    $region14: #{qnet_forward.3} parent=1 // pred_check
      _
    $region15: #{qnet_forward.3} parent=1 // pred_check_branch
      %21 = sbr.rel (0) target = $region17
    $region16: #{qnet_forward.3} parent=1 // pred_region
      %23 = vsyncadd [#allocation3], 0
      %s24 = sshll.u32 %s3, 4
      %s25 = int_to_ptr.hbm [resolvable:$true] %s24
      %s26 = sshll.u32 [#allocation2], 4
      %s27 = int_to_ptr.vmem [resolvable:$true] %s26
      %32 = dma.hbm_to_vmem [thread:$0]  %s25, 4096, %s27, [#allocation3], 64, 64, 4
    $region17: #{qnet_forward.3} parent=1 // pred_fallthru
      _
    // Predicated region
    $region18: #{qnet_forward.3} parent=1 // pred_check
      _
    $region19: #{qnet_forward.3} parent=1 // pred_check_branch
      %34 = sbr.rel (0) target = $region21
    $region20: #{qnet_forward.3} parent=1 // pred_region
      _
    $region21: #{qnet_forward.3} parent=1 // pred_fallthru
      _
    // Predicated region
    $region22: #{qnet_forward.3} parent=1 // pred_check
      _
    $region23: #{qnet_forward.3} parent=1 // pred_check_branch
      %36 = sbr.rel (0) target = $region25
    $region24: #{qnet_forward.3} parent=1 // pred_region
      %38 = vsyncadd [#allocation5], 0
      %s39 = sshll.u32 %s5, 4
      %s40 = int_to_ptr.hbm [resolvable:$true] %s39
      %s41 = sshll.u32 [#allocation4], 4
      %s42 = int_to_ptr.vmem [resolvable:$true] %s41
      %47 = dma.hbm_to_vmem [thread:$0]  %s40, 21504, %s42, [#allocation5], 192, 192, 12
    $region25: #{qnet_forward.3} parent=1 // pred_fallthru
      _
    // Predicated region
    $region26: #{qnet_forward.3} parent=1 // pred_check
      _
    $region27: #{qnet_forward.3} parent=1 // pred_check_branch
      %49 = sbr.rel (0) target = $region29
    $region28: #{qnet_forward.3} parent=1 // pred_region
      %51 = vsyncadd [#allocation5], 0
      %s53 = sshll.u32 %s6, 4
      %s54 = int_to_ptr.hbm [resolvable:$true] %s53
      %s55 = sshll.u32 [#allocation6], 4
      %s56 = int_to_ptr.vmem [resolvable:$true] %s55
      %58 = dma.hbm_to_vmem [thread:$0]  %s54, 208, %s56, [#allocation5]
    $region29: #{qnet_forward.3} parent=1 // pred_fallthru
      _
    // Predicated region
    $region30: #{qnet_forward.3} parent=1 // pred_check
      _
    $region31: #{qnet_forward.3} parent=1 // pred_check_branch
      %60 = sbr.rel (0) target = $region33
    $region32: #{qnet_forward.3} parent=1 // pred_region
      %62 = dma.done [#allocation3], 4096
    $region33: #{qnet_forward.3} parent=1 // pred_fallthru
      _
    // Predicated region
    $region34: #{qnet_forward.3} parent=1 // pred_check
      _
    $region35: #{qnet_forward.3} parent=1 // pred_check_branch
      %64 = sbr.rel (0) target = $region37
    $region36: #{qnet_forward.3} parent=1 // pred_region
      %66 = dma.done [#allocation5], 21504
    $region37: #{qnet_forward.3} parent=1 // pred_fallthru
      _
    // Predicated region
    $region38: #{qnet_forward.3} parent=1 // pred_check
      _
    $region39: #{qnet_forward.3} parent=1 // pred_check_branch
      %68 = sbr.rel (0) target = $region41
    $region40: #{qnet_forward.3} parent=1 // pred_region
      %70 = dma.done [#allocation5], 208
    $region41: #{qnet_forward.3} parent=1 // pred_fallthru
      _
    %v72 = vld [vmem:[%s0] sm:$0xff]
    %v73 = vpack.c.bf16 %v72, %v72
    %v74 = vld [vmem:[%s1] sm:$0xff]
    %v75 = vpack.c.bf16 %v74, %v74
    %vm76 = vcmask 64512
    %v77 = vsel %vm76, %v72, 0.0
    %78 = vadd.xlane.f32.xlu0 %v77
    %v79 = vpop.xlane.xlu0 %78
    %v80 = vld [vmem:[#allocation6 + $0xb] sm:$0x1]
    %v81 = vld [vmem:[#allocation6 + $0xc] sm:$0x1]
    %v83 = vperm.slane %v80, 0
    %v85 = vmul.f32 %v79, %v83
    %v87 = vsel %vm76, %v73, 0
    %vm89 = vcmask 1043456
    %v91 = vsel %vm89, %v75, 0
    %93 = vmatpush.bf16.msra.mxu0 0
    %94 = vmatpush.bf16.msra.mxu0 0
    %95 = vmatpush.bf16.msra.mxu0 0
    %96 = vmatpush.bf16.msra.mxu0 0
    %97 = vmatpush.bf16.msra.mxu0 0
    %98 = vmatpush.bf16.msra.mxu0 0
    %99 = vmatpush.bf16.msra.mxu0 0
    %100 = vmatpush.bf16.msra.mxu0 %v91
    %101 = vmatmul.bf16.gmra.mxu0 %v87
    %v102 = vpop.f32.mrf.mxu0
    %v103 = vadd.f32 %v85, %v102
    %v104 = vpop.f32.mrf.mxu0
    %105 = vdwg.mxu0
    %v107 = vperm.slane %v81, 0
    %v109 = vadd.f32 %v103, %v107
    %v110 = vmax.f32 %v109, 0.0
    %v111 = vld [vmem:[#allocation2] sm:$0xf]
    %v112 = vld [vmem:[#allocation2 + $0x4] sm:$0xf]
    %v113 = vld [vmem:[#allocation2 + $0x8] sm:$0xf]
    %v114 = vld [vmem:[#allocation2 + $0xc] sm:$0xf]
    %v115 = vld [vmem:[#allocation2 + $0x10] sm:$0xf]
    %v116 = vld [vmem:[#allocation2 + $0x14] sm:$0xf]
    %v117 = vld [vmem:[#allocation2 + $0x18] sm:$0xf]
    %v118 = vld [vmem:[#allocation2 + $0x1c] sm:$0xf]
    %v119 = vld [vmem:[#allocation2 + $0x20] sm:$0xf]
    %v120 = vld [vmem:[#allocation2 + $0x24] sm:$0xf]
    %v121 = vld [vmem:[#allocation2 + $0x28] sm:$0xf]
    %v122 = vld [vmem:[#allocation2 + $0x2c] sm:$0xf]
    %v123 = vld [vmem:[#allocation2 + $0x30] sm:$0xf]
    %v124 = vld [vmem:[#allocation2 + $0x34] sm:$0xf]
    %v125 = vld [vmem:[#allocation2 + $0x38] sm:$0xf]
    %v126 = vld [vmem:[#allocation2 + $0x3c] sm:$0xf]
    %v127 = vld [vmem:[#allocation6] sm:$0x1]
    %v128 = vpack.c.bf16 %v110, %v110
    %v130 = vperm.slane %v127, 0
    %v148 = vunpack.c.l.b16 %v111
    %v149 = vunpack.c.l.b16 %v112
    %v150 = vunpack.c.l.b16 %v113
    %v151 = vunpack.c.l.b16 %v114
    %v152 = vunpack.c.l.b16 %v115
    %v153 = vunpack.c.l.b16 %v116
    %v154 = vunpack.c.l.b16 %v117
    %v155 = vunpack.c.l.b16 %v118
    %v156 = vunpack.c.l.b16 %v119
    %v157 = vunpack.c.l.b16 %v120
    %v158 = vunpack.c.l.b16 %v121
    %v159 = vunpack.c.l.b16 %v122
    %v160 = vunpack.c.l.b16 %v123
    %v161 = vunpack.c.l.b16 %v124
    %v162 = vunpack.c.l.b16 %v125
    %v163 = vunpack.c.l.b16 %v126
    %v164 = vpack.c.b16 %v149, %v148
    %v165 = vpack.c.b16 %v151, %v150
    %v166 = vpack.c.b16 %v153, %v152
    %v167 = vpack.c.b16 %v155, %v154
    %v168 = vpack.c.b16 %v157, %v156
    %v169 = vpack.c.b16 %v159, %v158
    %v170 = vpack.c.b16 %v161, %v160
    %v171 = vpack.c.b16 %v163, %v162
    %180 = vmatpush.bf16.msra.mxu0 %v171
    %181 = vmatpush.bf16.msra.mxu0 %v170
    %182 = vmatpush.bf16.msra.mxu0 %v169
    %183 = vmatpush.bf16.msra.mxu0 %v168
    %184 = vmatpush.bf16.msra.mxu0 %v167
    %185 = vmatpush.bf16.msra.mxu0 %v166
    %186 = vmatpush.bf16.msra.mxu0 %v165
    %187 = vmatpush.bf16.msra.mxu0 %v164
    %188 = vmatmul.bf16.gmra.mxu0 %v128
    %v189 = vpop.f32.mrf.mxu0
    %v190 = vadd.f32 %v130, %v189
    %v191 = vpop.f32.mrf.mxu0
    %192 = vdwg.mxu0
    %v193 = vmax.f32 %v190, 0.0
    %v194 = vld [vmem:[#allocation2 + $0x40] sm:$0xf]
    %v195 = vld [vmem:[#allocation2 + $0x44] sm:$0xf]
    %v196 = vld [vmem:[#allocation2 + $0x48] sm:$0xf]
    %v197 = vld [vmem:[#allocation2 + $0x4c] sm:$0xf]
    %v198 = vld [vmem:[#allocation2 + $0x50] sm:$0xf]
    %v199 = vld [vmem:[#allocation2 + $0x54] sm:$0xf]
    %v200 = vld [vmem:[#allocation2 + $0x58] sm:$0xf]
    %v201 = vld [vmem:[#allocation2 + $0x5c] sm:$0xf]
    %v202 = vld [vmem:[#allocation2 + $0x60] sm:$0xf]
    %v203 = vld [vmem:[#allocation2 + $0x64] sm:$0xf]
    %v204 = vld [vmem:[#allocation2 + $0x68] sm:$0xf]
    %v205 = vld [vmem:[#allocation2 + $0x6c] sm:$0xf]
    %v206 = vld [vmem:[#allocation2 + $0x70] sm:$0xf]
    %v207 = vld [vmem:[#allocation2 + $0x74] sm:$0xf]
    %v208 = vld [vmem:[#allocation2 + $0x78] sm:$0xf]
    %v209 = vld [vmem:[#allocation2 + $0x7c] sm:$0xf]
    %v210 = vld [vmem:[#allocation6 + $0x1] sm:$0x1]
    %v211 = vpack.c.bf16 %v193, %v193
    %v213 = vperm.slane %v210, 0
    %v231 = vunpack.c.l.b16 %v194
    %v232 = vunpack.c.l.b16 %v195
    %v233 = vunpack.c.l.b16 %v196
    %v234 = vunpack.c.l.b16 %v197
    %v235 = vunpack.c.l.b16 %v198
    %v236 = vunpack.c.l.b16 %v199
    %v237 = vunpack.c.l.b16 %v200
    %v238 = vunpack.c.l.b16 %v201
    %v239 = vunpack.c.l.b16 %v202
    %v240 = vunpack.c.l.b16 %v203
    %v241 = vunpack.c.l.b16 %v204
    %v242 = vunpack.c.l.b16 %v205
    %v243 = vunpack.c.l.b16 %v206
    %v244 = vunpack.c.l.b16 %v207
    %v245 = vunpack.c.l.b16 %v208
    %v246 = vunpack.c.l.b16 %v209
    %v247 = vpack.c.b16 %v232, %v231
    %v248 = vpack.c.b16 %v234, %v233
    %v249 = vpack.c.b16 %v236, %v235
    %v250 = vpack.c.b16 %v238, %v237
    %v251 = vpack.c.b16 %v240, %v239
    %v252 = vpack.c.b16 %v242, %v241
    %v253 = vpack.c.b16 %v244, %v243
    %v254 = vpack.c.b16 %v246, %v245
    %263 = vmatpush.bf16.msra.mxu0 %v254
    %264 = vmatpush.bf16.msra.mxu0 %v253
    %265 = vmatpush.bf16.msra.mxu0 %v252
    %266 = vmatpush.bf16.msra.mxu0 %v251
    %267 = vmatpush.bf16.msra.mxu0 %v250
    %268 = vmatpush.bf16.msra.mxu0 %v249
    %269 = vmatpush.bf16.msra.mxu0 %v248
    %270 = vmatpush.bf16.msra.mxu0 %v247
    %271 = vmatmul.bf16.gmra.mxu0 %v211
    %v272 = vpop.f32.mrf.mxu0
    %v273 = vadd.f32 %v213, %v272
    %v274 = vpop.f32.mrf.mxu0
    %275 = vdwg.mxu0
    %v276 = vmax.f32 %v273, 0.0
    %v277 = vld [vmem:[#allocation4] sm:$0xff]
    %v278 = vld [vmem:[#allocation4 + $0x8] sm:$0xf]
    %v279 = vld [vmem:[#allocation4 + $0xc] sm:$0xff]
    %v280 = vld [vmem:[#allocation4 + $0x14] sm:$0xf]
    %v281 = vld [vmem:[#allocation4 + $0x18] sm:$0xff]
    %v282 = vld [vmem:[#allocation4 + $0x20] sm:$0xf]
    %v283 = vld [vmem:[#allocation4 + $0x24] sm:$0xff]
    %v284 = vld [vmem:[#allocation4 + $0x2c] sm:$0xf]
    %v285 = vld [vmem:[#allocation4 + $0x30] sm:$0xff]
    %v286 = vld [vmem:[#allocation4 + $0x38] sm:$0xf]
    %v287 = vld [vmem:[#allocation4 + $0x3c] sm:$0xff]
    %v288 = vld [vmem:[#allocation4 + $0x44] sm:$0xf]
    %v289 = vld [vmem:[#allocation4 + $0x48] sm:$0xff]
    %v290 = vld [vmem:[#allocation4 + $0x50] sm:$0xf]
    %v291 = vld [vmem:[#allocation4 + $0x54] sm:$0xff]
    %v292 = vld [vmem:[#allocation4 + $0x5c] sm:$0xf]
    %v293 = vld [vmem:[#allocation4 + $0x60] sm:$0xff]
    %v294 = vld [vmem:[#allocation4 + $0x68] sm:$0xf]
    %v295 = vld [vmem:[#allocation4 + $0x6c] sm:$0xff]
    %v296 = vld [vmem:[#allocation4 + $0x74] sm:$0xf]
    %v297 = vld [vmem:[#allocation4 + $0x78] sm:$0xff]
    %v298 = vld [vmem:[#allocation4 + $0x80] sm:$0xf]
    %v299 = vld [vmem:[#allocation4 + $0x84] sm:$0xff]
    %v300 = vld [vmem:[#allocation4 + $0x8c] sm:$0xf]
    %v301 = vld [vmem:[#allocation4 + $0x90] sm:$0xff]
    %v302 = vld [vmem:[#allocation4 + $0x98] sm:$0xf]
    %v303 = vld [vmem:[#allocation4 + $0x9c] sm:$0xff]
    %v304 = vld [vmem:[#allocation4 + $0xa4] sm:$0xf]
    %v305 = vld [vmem:[#allocation4 + $0xa8] sm:$0xff]
    %v306 = vld [vmem:[#allocation4 + $0xb0] sm:$0xf]
    %v307 = vld [vmem:[#allocation4 + $0xb4] sm:$0xff]
    %v308 = vld [vmem:[#allocation4 + $0xbc] sm:$0xf]
    %v309 = vld [vmem:[#allocation6 + $0x2] sm:$0x7]
    %v310 = vpack.c.bf16 %v276, %v276
    %v312 = vperm.slane %v309, 0
    %v313 = vperm.slane %v309, 1
    %v314 = vperm.slane %v309, 2
    %v350 = vunpack.c.l.b16 %v277
    %v351 = vunpack.c.h.b16 %v277
    %v352 = vunpack.c.l.b16 %v278
    %v353 = vunpack.c.l.b16 %v279
    %v354 = vunpack.c.h.b16 %v279
    %v355 = vunpack.c.l.b16 %v280
    %v356 = vunpack.c.l.b16 %v281
    %v357 = vunpack.c.h.b16 %v281
    %v358 = vunpack.c.l.b16 %v282
    %v359 = vunpack.c.l.b16 %v283
    %v360 = vunpack.c.h.b16 %v283
    %v361 = vunpack.c.l.b16 %v284
    %v362 = vunpack.c.l.b16 %v285
    %v363 = vunpack.c.h.b16 %v285
    %v364 = vunpack.c.l.b16 %v286
    %v365 = vunpack.c.l.b16 %v287
    %v366 = vunpack.c.h.b16 %v287
    %v367 = vunpack.c.l.b16 %v288
    %v368 = vunpack.c.l.b16 %v289
    %v369 = vunpack.c.h.b16 %v289
    %v370 = vunpack.c.l.b16 %v290
    %v371 = vunpack.c.l.b16 %v291
    %v372 = vunpack.c.h.b16 %v291
    %v373 = vunpack.c.l.b16 %v292
    %v374 = vunpack.c.l.b16 %v293
    %v375 = vunpack.c.h.b16 %v293
    %v376 = vunpack.c.l.b16 %v294
    %v377 = vunpack.c.l.b16 %v295
    %v378 = vunpack.c.h.b16 %v295
    %v379 = vunpack.c.l.b16 %v296
    %v380 = vunpack.c.l.b16 %v297
    %v381 = vunpack.c.h.b16 %v297
    %v382 = vunpack.c.l.b16 %v298
    %v383 = vunpack.c.l.b16 %v299
    %v384 = vunpack.c.h.b16 %v299
    %v385 = vunpack.c.l.b16 %v300
    %v386 = vunpack.c.l.b16 %v301
    %v387 = vunpack.c.h.b16 %v301
    %v388 = vunpack.c.l.b16 %v302
    %v389 = vunpack.c.l.b16 %v303
    %v390 = vunpack.c.h.b16 %v303
    %v391 = vunpack.c.l.b16 %v304
    %v392 = vunpack.c.l.b16 %v305
    %v393 = vunpack.c.h.b16 %v305
    %v394 = vunpack.c.l.b16 %v306
    %v395 = vunpack.c.l.b16 %v307
    %v396 = vunpack.c.h.b16 %v307
    %v397 = vunpack.c.l.b16 %v308
    %v398 = vpack.c.b16 %v353, %v350
    %v399 = vpack.c.b16 %v354, %v351
    %v400 = vpack.c.b16 %v355, %v352
    %v401 = vpack.c.b16 %v359, %v356
    %v402 = vpack.c.b16 %v360, %v357
    %v403 = vpack.c.b16 %v361, %v358
    %v404 = vpack.c.b16 %v365, %v362
    %v405 = vpack.c.b16 %v366, %v363
    %v406 = vpack.c.b16 %v367, %v364
    %v407 = vpack.c.b16 %v371, %v368
    %v408 = vpack.c.b16 %v372, %v369
    %v409 = vpack.c.b16 %v373, %v370
    %v410 = vpack.c.b16 %v377, %v374
    %v411 = vpack.c.b16 %v378, %v375
    %v412 = vpack.c.b16 %v379, %v376
    %v413 = vpack.c.b16 %v383, %v380
    %v414 = vpack.c.b16 %v384, %v381
    %v415 = vpack.c.b16 %v385, %v382
    %v416 = vpack.c.b16 %v389, %v386
    %v417 = vpack.c.b16 %v390, %v387
    %v418 = vpack.c.b16 %v391, %v388
    %v419 = vpack.c.b16 %v395, %v392
    %v420 = vpack.c.b16 %v396, %v393
    %v421 = vpack.c.b16 %v397, %v394
    %446 = vmatpush.bf16.msra.mxu0 %v419
    %447 = vmatpush.bf16.msra.mxu0 %v416
    %448 = vmatpush.bf16.msra.mxu0 %v413
    %449 = vmatpush.bf16.msra.mxu0 %v410
    %450 = vmatpush.bf16.msra.mxu0 %v407
    %451 = vmatpush.bf16.msra.mxu0 %v404
    %452 = vmatpush.bf16.msra.mxu0 %v401
    %453 = vmatpush.bf16.msra.mxu0 %v398
    %454 = vmatmul.bf16.gmra.mxu0 %v310
    %v455 = vpop.f32.mrf.mxu0
    %v456 = vadd.f32 %v312, %v455
    %v457 = vpop.f32.mrf.mxu0
    %458 = vdwg.mxu0
    %459 = vmatpush.bf16.msra.mxu0 %v420
    %460 = vmatpush.bf16.msra.mxu0 %v417
    %461 = vmatpush.bf16.msra.mxu0 %v414
    %462 = vmatpush.bf16.msra.mxu0 %v411
    %463 = vmatpush.bf16.msra.mxu0 %v408
    %464 = vmatpush.bf16.msra.mxu0 %v405
    %465 = vmatpush.bf16.msra.mxu0 %v402
    %466 = vmatpush.bf16.msra.mxu0 %v399
    %467 = vmatmul.bf16.gmra.mxu0 %v310
    %v468 = vpop.f32.mrf.mxu0
    %v469 = vadd.f32 %v313, %v468
    %v470 = vpop.f32.mrf.mxu0
    %471 = vdwg.mxu0
    %472 = vmatpush.bf16.msra.mxu0 %v421
    %473 = vmatpush.bf16.msra.mxu0 %v418
    %474 = vmatpush.bf16.msra.mxu0 %v415
    %475 = vmatpush.bf16.msra.mxu0 %v412
    %476 = vmatpush.bf16.msra.mxu0 %v409
    %477 = vmatpush.bf16.msra.mxu0 %v406
    %478 = vmatpush.bf16.msra.mxu0 %v403
    %479 = vmatpush.bf16.msra.mxu0 %v400
    %480 = vmatmul.bf16.gmra.mxu0 %v310
    %v481 = vpop.f32.mrf.mxu0
    %v482 = vadd.f32 %v314, %v481
    %v483 = vpop.f32.mrf.mxu0
    %484 = vdwg.mxu0
    %v485 = vld [vmem:[#allocation4 + $0xc0] sm:$0xff]
    %v486 = vld [vmem:[#allocation4 + $0xc8] sm:$0xf]
    %v487 = vld [vmem:[#allocation4 + $0xcc] sm:$0xff]
    %v488 = vld [vmem:[#allocation4 + $0xd4] sm:$0xf]
    %v489 = vld [vmem:[#allocation4 + $0xd8] sm:$0xff]
    %v490 = vld [vmem:[#allocation4 + $0xe0] sm:$0xf]
    %v491 = vld [vmem:[#allocation4 + $0xe4] sm:$0xff]
    %v492 = vld [vmem:[#allocation4 + $0xec] sm:$0xf]
    %v493 = vld [vmem:[#allocation4 + $0xf0] sm:$0xff]
    %v494 = vld [vmem:[#allocation4 + $0xf8] sm:$0xf]
    %v495 = vld [vmem:[#allocation4 + $0xfc] sm:$0xff]
    %v496 = vld [vmem:[#allocation4 + $0x104] sm:$0xf]
    %v497 = vld [vmem:[#allocation4 + $0x108] sm:$0xff]
    %v498 = vld [vmem:[#allocation4 + $0x110] sm:$0xf]
    %v499 = vld [vmem:[#allocation4 + $0x114] sm:$0xff]
    %v500 = vld [vmem:[#allocation4 + $0x11c] sm:$0xf]
    %v501 = vld [vmem:[#allocation4 + $0x120] sm:$0xff]
    %v502 = vld [vmem:[#allocation4 + $0x128] sm:$0xf]
    %v503 = vld [vmem:[#allocation4 + $0x12c] sm:$0xff]
    %v504 = vld [vmem:[#allocation4 + $0x134] sm:$0xf]
    %v505 = vld [vmem:[#allocation4 + $0x138] sm:$0xff]
    %v506 = vld [vmem:[#allocation4 + $0x140] sm:$0xf]
    %v507 = vld [vmem:[#allocation4 + $0x144] sm:$0xff]
    %v508 = vld [vmem:[#allocation4 + $0x14c] sm:$0xf]
    %v509 = vld [vmem:[#allocation4 + $0x150] sm:$0xff]
    %v510 = vld [vmem:[#allocation4 + $0x158] sm:$0xf]
    %v511 = vld [vmem:[#allocation4 + $0x15c] sm:$0xff]
    %v512 = vld [vmem:[#allocation4 + $0x164] sm:$0xf]
    %v513 = vld [vmem:[#allocation4 + $0x168] sm:$0xff]
    %v514 = vld [vmem:[#allocation4 + $0x170] sm:$0xf]
    %v515 = vld [vmem:[#allocation4 + $0x174] sm:$0xff]
    %v516 = vld [vmem:[#allocation4 + $0x17c] sm:$0xf]
    %v517 = vld [vmem:[#allocation4 + $0x180] sm:$0xff]
    %v518 = vld [vmem:[#allocation4 + $0x188] sm:$0xf]
    %v519 = vld [vmem:[#allocation4 + $0x18c] sm:$0xff]
    %v520 = vld [vmem:[#allocation4 + $0x194] sm:$0xf]
    %v521 = vld [vmem:[#allocation4 + $0x198] sm:$0xff]
    %v522 = vld [vmem:[#allocation4 + $0x1a0] sm:$0xf]
    %v523 = vld [vmem:[#allocation4 + $0x1a4] sm:$0xff]
    %v524 = vld [vmem:[#allocation4 + $0x1ac] sm:$0xf]
    %v525 = vld [vmem:[#allocation4 + $0x1b0] sm:$0xff]
    %v526 = vld [vmem:[#allocation4 + $0x1b8] sm:$0xf]
    %v527 = vld [vmem:[#allocation4 + $0x1bc] sm:$0xff]
    %v528 = vld [vmem:[#allocation4 + $0x1c4] sm:$0xf]
    %v529 = vld [vmem:[#allocation4 + $0x1c8] sm:$0xff]
    %v530 = vld [vmem:[#allocation4 + $0x1d0] sm:$0xf]
    %v531 = vld [vmem:[#allocation4 + $0x1d4] sm:$0xff]
    %v532 = vld [vmem:[#allocation4 + $0x1dc] sm:$0xf]
    %v533 = vld [vmem:[#allocation4 + $0x1e0] sm:$0xff]
    %v534 = vld [vmem:[#allocation4 + $0x1e8] sm:$0xf]
    %v535 = vld [vmem:[#allocation4 + $0x1ec] sm:$0xff]
    %v536 = vld [vmem:[#allocation4 + $0x1f4] sm:$0xf]
    %v537 = vld [vmem:[#allocation4 + $0x1f8] sm:$0xff]
    %v538 = vld [vmem:[#allocation4 + $0x200] sm:$0xf]
    %v539 = vld [vmem:[#allocation4 + $0x204] sm:$0xff]
    %v540 = vld [vmem:[#allocation4 + $0x20c] sm:$0xf]
    %v541 = vld [vmem:[#allocation4 + $0x210] sm:$0xff]
    %v542 = vld [vmem:[#allocation4 + $0x218] sm:$0xf]
    %v543 = vld [vmem:[#allocation4 + $0x21c] sm:$0xff]
    %v544 = vld [vmem:[#allocation4 + $0x224] sm:$0xf]
    %v545 = vld [vmem:[#allocation4 + $0x228] sm:$0xff]
    %v546 = vld [vmem:[#allocation4 + $0x230] sm:$0xf]
    %v547 = vld [vmem:[#allocation4 + $0x234] sm:$0xff]
    %v548 = vld [vmem:[#allocation4 + $0x23c] sm:$0xf]
    %v549 = vld [vmem:[#allocation4 + $0x240] sm:$0xff]
    %v550 = vld [vmem:[#allocation4 + $0x248] sm:$0xf]
    %v551 = vld [vmem:[#allocation4 + $0x24c] sm:$0xff]
    %v552 = vld [vmem:[#allocation4 + $0x254] sm:$0xf]
    %v553 = vld [vmem:[#allocation4 + $0x258] sm:$0xff]
    %v554 = vld [vmem:[#allocation4 + $0x260] sm:$0xf]
    %v555 = vld [vmem:[#allocation4 + $0x264] sm:$0xff]
    %v556 = vld [vmem:[#allocation4 + $0x26c] sm:$0xf]
    %v557 = vld [vmem:[#allocation4 + $0x270] sm:$0xff]
    %v558 = vld [vmem:[#allocation4 + $0x278] sm:$0xf]
    %v559 = vld [vmem:[#allocation4 + $0x27c] sm:$0xff]
    %v560 = vld [vmem:[#allocation4 + $0x284] sm:$0xf]
    %v561 = vld [vmem:[#allocation4 + $0x288] sm:$0xff]
    %v562 = vld [vmem:[#allocation4 + $0x290] sm:$0xf]
    %v563 = vld [vmem:[#allocation4 + $0x294] sm:$0xff]
    %v564 = vld [vmem:[#allocation4 + $0x29c] sm:$0xf]
    %v565 = vld [vmem:[#allocation4 + $0x2a0] sm:$0xff]
    %v566 = vld [vmem:[#allocation4 + $0x2a8] sm:$0xf]
    %v567 = vld [vmem:[#allocation4 + $0x2ac] sm:$0xff]
    %v568 = vld [vmem:[#allocation4 + $0x2b4] sm:$0xf]
    %v569 = vld [vmem:[#allocation4 + $0x2b8] sm:$0xff]
    %v570 = vld [vmem:[#allocation4 + $0x2c0] sm:$0xf]
    %v571 = vld [vmem:[#allocation4 + $0x2c4] sm:$0xff]
    %v572 = vld [vmem:[#allocation4 + $0x2cc] sm:$0xf]
    %v573 = vld [vmem:[#allocation4 + $0x2d0] sm:$0xff]
    %v574 = vld [vmem:[#allocation4 + $0x2d8] sm:$0xf]
    %v575 = vld [vmem:[#allocation4 + $0x2dc] sm:$0xff]
    %v576 = vld [vmem:[#allocation4 + $0x2e4] sm:$0xf]
    %v577 = vld [vmem:[#allocation4 + $0x2e8] sm:$0xff]
    %v578 = vld [vmem:[#allocation4 + $0x2f0] sm:$0xf]
    %v579 = vld [vmem:[#allocation4 + $0x2f4] sm:$0xff]
    %v580 = vld [vmem:[#allocation4 + $0x2fc] sm:$0xf]
    %v581 = vld [vmem:[#allocation4 + $0x300] sm:$0xff]
    %v582 = vld [vmem:[#allocation4 + $0x308] sm:$0xf]
    %v583 = vld [vmem:[#allocation4 + $0x30c] sm:$0xff]
    %v584 = vld [vmem:[#allocation4 + $0x314] sm:$0xf]
    %v585 = vld [vmem:[#allocation4 + $0x318] sm:$0xff]
    %v586 = vld [vmem:[#allocation4 + $0x320] sm:$0xf]
    %v587 = vld [vmem:[#allocation4 + $0x324] sm:$0xff]
    %v588 = vld [vmem:[#allocation4 + $0x32c] sm:$0xf]
    %v589 = vld [vmem:[#allocation4 + $0x330] sm:$0xff]
    %v590 = vld [vmem:[#allocation4 + $0x338] sm:$0xf]
    %v591 = vld [vmem:[#allocation4 + $0x33c] sm:$0xff]
    %v592 = vld [vmem:[#allocation4 + $0x344] sm:$0xf]
    %v593 = vld [vmem:[#allocation4 + $0x348] sm:$0xff]
    %v594 = vld [vmem:[#allocation4 + $0x350] sm:$0xf]
    %v595 = vld [vmem:[#allocation4 + $0x354] sm:$0xff]
    %v596 = vld [vmem:[#allocation4 + $0x35c] sm:$0xf]
    %v597 = vld [vmem:[#allocation4 + $0x360] sm:$0xff]
    %v598 = vld [vmem:[#allocation4 + $0x368] sm:$0xf]
    %v599 = vld [vmem:[#allocation4 + $0x36c] sm:$0xff]
    %v600 = vld [vmem:[#allocation4 + $0x374] sm:$0xf]
    %v601 = vld [vmem:[#allocation4 + $0x378] sm:$0xff]
    %v602 = vld [vmem:[#allocation4 + $0x380] sm:$0xf]
    %v603 = vld [vmem:[#allocation4 + $0x384] sm:$0xff]
    %v604 = vld [vmem:[#allocation4 + $0x38c] sm:$0xf]
    %v605 = vld [vmem:[#allocation4 + $0x390] sm:$0xff]
    %v606 = vld [vmem:[#allocation4 + $0x398] sm:$0xf]
    %v607 = vld [vmem:[#allocation4 + $0x39c] sm:$0xff]
    %v608 = vld [vmem:[#allocation4 + $0x3a4] sm:$0xf]
    %v609 = vld [vmem:[#allocation4 + $0x3a8] sm:$0xff]
    %v610 = vld [vmem:[#allocation4 + $0x3b0] sm:$0xf]
    %v611 = vld [vmem:[#allocation4 + $0x3b4] sm:$0xff]
    %v612 = vld [vmem:[#allocation4 + $0x3bc] sm:$0xf]
    %v613 = vld [vmem:[#allocation4 + $0x3c0] sm:$0xff]
    %v614 = vld [vmem:[#allocation4 + $0x3c8] sm:$0xf]
    %v615 = vld [vmem:[#allocation4 + $0x3cc] sm:$0xff]
    %v616 = vld [vmem:[#allocation4 + $0x3d4] sm:$0xf]
    %v617 = vld [vmem:[#allocation4 + $0x3d8] sm:$0xff]
    %v618 = vld [vmem:[#allocation4 + $0x3e0] sm:$0xf]
    %v619 = vld [vmem:[#allocation4 + $0x3e4] sm:$0xff]
    %v620 = vld [vmem:[#allocation4 + $0x3ec] sm:$0xf]
    %v621 = vld [vmem:[#allocation4 + $0x3f0] sm:$0xff]
    %v622 = vld [vmem:[#allocation4 + $0x3f8] sm:$0xf]
    %v623 = vld [vmem:[#allocation4 + $0x3fc] sm:$0xff]
    %v624 = vld [vmem:[#allocation4 + $0x404] sm:$0xf]
    %v625 = vld [vmem:[#allocation4 + $0x408] sm:$0xff]
    %v626 = vld [vmem:[#allocation4 + $0x410] sm:$0xf]
    %v627 = vld [vmem:[#allocation4 + $0x414] sm:$0xff]
    %v628 = vld [vmem:[#allocation4 + $0x41c] sm:$0xf]
    %v629 = vld [vmem:[#allocation4 + $0x420] sm:$0xff]
    %v630 = vld [vmem:[#allocation4 + $0x428] sm:$0xf]
    %v631 = vld [vmem:[#allocation4 + $0x42c] sm:$0xff]
    %v632 = vld [vmem:[#allocation4 + $0x434] sm:$0xf]
    %v633 = vld [vmem:[#allocation4 + $0x438] sm:$0xff]
    %v634 = vld [vmem:[#allocation4 + $0x440] sm:$0xf]
    %v635 = vld [vmem:[#allocation4 + $0x444] sm:$0xff]
    %v636 = vld [vmem:[#allocation4 + $0x44c] sm:$0xf]
    %v637 = vld [vmem:[#allocation4 + $0x450] sm:$0xff]
    %v638 = vld [vmem:[#allocation4 + $0x458] sm:$0xf]
    %v639 = vld [vmem:[#allocation4 + $0x45c] sm:$0xff]
    %v640 = vld [vmem:[#allocation4 + $0x464] sm:$0xf]
    %v641 = vld [vmem:[#allocation4 + $0x468] sm:$0xff]
    %v642 = vld [vmem:[#allocation4 + $0x470] sm:$0xf]
    %v643 = vld [vmem:[#allocation4 + $0x474] sm:$0xff]
    %v644 = vld [vmem:[#allocation4 + $0x47c] sm:$0xf]
    %v645 = vld [vmem:[#allocation4 + $0x480] sm:$0xff]
    %v646 = vld [vmem:[#allocation4 + $0x488] sm:$0xf]
    %v647 = vld [vmem:[#allocation4 + $0x48c] sm:$0xff]
    %v648 = vld [vmem:[#allocation4 + $0x494] sm:$0xf]
    %v649 = vld [vmem:[#allocation4 + $0x498] sm:$0xff]
    %v650 = vld [vmem:[#allocation4 + $0x4a0] sm:$0xf]
    %v651 = vld [vmem:[#allocation4 + $0x4a4] sm:$0xff]
    %v652 = vld [vmem:[#allocation4 + $0x4ac] sm:$0xf]
    %v653 = vld [vmem:[#allocation4 + $0x4b0] sm:$0xff]
    %v654 = vld [vmem:[#allocation4 + $0x4b8] sm:$0xf]
    %v655 = vld [vmem:[#allocation4 + $0x4bc] sm:$0xff]
    %v656 = vld [vmem:[#allocation4 + $0x4c4] sm:$0xf]
    %v657 = vld [vmem:[#allocation4 + $0x4c8] sm:$0xff]
    %v658 = vld [vmem:[#allocation4 + $0x4d0] sm:$0xf]
    %v659 = vld [vmem:[#allocation4 + $0x4d4] sm:$0xff]
    %v660 = vld [vmem:[#allocation4 + $0x4dc] sm:$0xf]
    %v661 = vld [vmem:[#allocation4 + $0x4e0] sm:$0xff]
    %v662 = vld [vmem:[#allocation4 + $0x4e8] sm:$0xf]
    %v663 = vld [vmem:[#allocation4 + $0x4ec] sm:$0xff]
    %v664 = vld [vmem:[#allocation4 + $0x4f4] sm:$0xf]
    %v665 = vld [vmem:[#allocation4 + $0x4f8] sm:$0xff]
    %v666 = vld [vmem:[#allocation4 + $0x500] sm:$0xf]
    %v667 = vld [vmem:[#allocation4 + $0x504] sm:$0xff]
    %v668 = vld [vmem:[#allocation4 + $0x50c] sm:$0xf]
    %v669 = vld [vmem:[#allocation4 + $0x510] sm:$0xff]
    %v670 = vld [vmem:[#allocation4 + $0x518] sm:$0xf]
    %v671 = vld [vmem:[#allocation4 + $0x51c] sm:$0xff]
    %v672 = vld [vmem:[#allocation4 + $0x524] sm:$0xf]
    %v673 = vld [vmem:[#allocation4 + $0x528] sm:$0xff]
    %v674 = vld [vmem:[#allocation4 + $0x530] sm:$0xf]
    %v675 = vld [vmem:[#allocation4 + $0x534] sm:$0xff]
    %v676 = vld [vmem:[#allocation4 + $0x53c] sm:$0xf]
    %v677 = vld [vmem:[#allocation6 + $0x5] sm:$0x7]
    %v678 = vld [vmem:[%s2] sm:$0xff]
    %v679 = vld [vmem:[%s2 + $0x8] sm:$0xf]
    %v680 = vpack.c.bf16 %v456, %v456
    %v681 = vpack.c.bf16 %v469, %v469
    %v682 = vpack.c.bf16 %v482, %v482
    %v779 = vunpack.c.l.b16 %v581
    %v780 = vunpack.c.h.b16 %v581
    %v781 = vunpack.c.l.b16 %v582
    %v782 = vunpack.c.l.b16 %v583
    %v783 = vunpack.c.h.b16 %v583
    %v784 = vunpack.c.l.b16 %v584
    %v785 = vunpack.c.l.b16 %v585
    %v786 = vunpack.c.h.b16 %v585
    %v787 = vunpack.c.l.b16 %v586
    %v788 = vunpack.c.l.b16 %v587
    %v789 = vunpack.c.h.b16 %v587
    %v790 = vunpack.c.l.b16 %v588
    %v791 = vunpack.c.l.b16 %v589
    %v792 = vunpack.c.h.b16 %v589
    %v793 = vunpack.c.l.b16 %v590
    %v794 = vunpack.c.l.b16 %v591
    %v795 = vunpack.c.h.b16 %v591
    %v796 = vunpack.c.l.b16 %v592
    %v797 = vunpack.c.l.b16 %v593
    %v798 = vunpack.c.h.b16 %v593
    %v799 = vunpack.c.l.b16 %v594
    %v800 = vunpack.c.l.b16 %v595
    %v801 = vunpack.c.h.b16 %v595
    %v802 = vunpack.c.l.b16 %v596
    %v803 = vunpack.c.l.b16 %v597
    %v804 = vunpack.c.h.b16 %v597
    %v805 = vunpack.c.l.b16 %v598
    %v806 = vunpack.c.l.b16 %v599
    %v807 = vunpack.c.h.b16 %v599
    %v808 = vunpack.c.l.b16 %v600
    %v809 = vunpack.c.l.b16 %v601
    %v810 = vunpack.c.h.b16 %v601
    %v811 = vunpack.c.l.b16 %v602
    %v812 = vunpack.c.l.b16 %v603
    %v813 = vunpack.c.h.b16 %v603
    %v814 = vunpack.c.l.b16 %v604
    %v815 = vunpack.c.l.b16 %v605
    %v816 = vunpack.c.h.b16 %v605
    %v817 = vunpack.c.l.b16 %v606
    %v818 = vunpack.c.l.b16 %v607
    %v819 = vunpack.c.h.b16 %v607
    %v820 = vunpack.c.l.b16 %v608
    %v821 = vunpack.c.l.b16 %v609
    %v822 = vunpack.c.h.b16 %v609
    %v823 = vunpack.c.l.b16 %v610
    %v824 = vunpack.c.l.b16 %v611
    %v825 = vunpack.c.h.b16 %v611
    %v826 = vunpack.c.l.b16 %v612
    %v827 = vunpack.c.l.b16 %v613
    %v828 = vunpack.c.h.b16 %v613
    %v829 = vunpack.c.l.b16 %v614
    %v830 = vunpack.c.l.b16 %v615
    %v831 = vunpack.c.h.b16 %v615
    %v832 = vunpack.c.l.b16 %v616
    %v833 = vunpack.c.l.b16 %v617
    %v834 = vunpack.c.h.b16 %v617
    %v835 = vunpack.c.l.b16 %v618
    %v836 = vunpack.c.l.b16 %v619
    %v837 = vunpack.c.h.b16 %v619
    %v838 = vunpack.c.l.b16 %v620
    %v839 = vunpack.c.l.b16 %v621
    %v840 = vunpack.c.h.b16 %v621
    %v841 = vunpack.c.l.b16 %v622
    %v842 = vunpack.c.l.b16 %v623
    %v843 = vunpack.c.h.b16 %v623
    %v844 = vunpack.c.l.b16 %v624
    %v845 = vunpack.c.l.b16 %v625
    %v846 = vunpack.c.h.b16 %v625
    %v847 = vunpack.c.l.b16 %v626
    %v848 = vunpack.c.l.b16 %v627
    %v849 = vunpack.c.h.b16 %v627
    %v850 = vunpack.c.l.b16 %v628
    %v851 = vunpack.c.l.b16 %v629
    %v852 = vunpack.c.h.b16 %v629
    %v853 = vunpack.c.l.b16 %v630
    %v854 = vunpack.c.l.b16 %v631
    %v855 = vunpack.c.h.b16 %v631
    %v856 = vunpack.c.l.b16 %v632
    %v857 = vunpack.c.l.b16 %v633
    %v858 = vunpack.c.h.b16 %v633
    %v859 = vunpack.c.l.b16 %v634
    %v860 = vunpack.c.l.b16 %v635
    %v861 = vunpack.c.h.b16 %v635
    %v862 = vunpack.c.l.b16 %v636
    %v863 = vunpack.c.l.b16 %v637
    %v864 = vunpack.c.h.b16 %v637
    %v865 = vunpack.c.l.b16 %v638
    %v866 = vunpack.c.l.b16 %v639
    %v867 = vunpack.c.h.b16 %v639
    %v868 = vunpack.c.l.b16 %v640
    %v869 = vunpack.c.l.b16 %v641
    %v870 = vunpack.c.h.b16 %v641
    %v871 = vunpack.c.l.b16 %v642
    %v872 = vunpack.c.l.b16 %v643
    %v873 = vunpack.c.h.b16 %v643
    %v874 = vunpack.c.l.b16 %v644
    %v875 = vunpack.c.l.b16 %v645
    %v876 = vunpack.c.h.b16 %v645
    %v877 = vunpack.c.l.b16 %v646
    %v878 = vunpack.c.l.b16 %v647
    %v879 = vunpack.c.h.b16 %v647
    %v880 = vunpack.c.l.b16 %v648
    %v881 = vunpack.c.l.b16 %v649
    %v882 = vunpack.c.h.b16 %v649
    %v883 = vunpack.c.l.b16 %v650
    %v884 = vunpack.c.l.b16 %v651
    %v885 = vunpack.c.h.b16 %v651
    %v886 = vunpack.c.l.b16 %v652
    %v887 = vunpack.c.l.b16 %v653
    %v888 = vunpack.c.h.b16 %v653
    %v889 = vunpack.c.l.b16 %v654
    %v890 = vunpack.c.l.b16 %v655
    %v891 = vunpack.c.h.b16 %v655
    %v892 = vunpack.c.l.b16 %v656
    %v893 = vunpack.c.l.b16 %v657
    %v894 = vunpack.c.h.b16 %v657
    %v895 = vunpack.c.l.b16 %v658
    %v896 = vunpack.c.l.b16 %v659
    %v897 = vunpack.c.h.b16 %v659
    %v898 = vunpack.c.l.b16 %v660
    %v899 = vunpack.c.l.b16 %v661
    %v900 = vunpack.c.h.b16 %v661
    %v901 = vunpack.c.l.b16 %v662
    %v902 = vunpack.c.l.b16 %v663
    %v903 = vunpack.c.h.b16 %v663
    %v904 = vunpack.c.l.b16 %v664
    %v905 = vunpack.c.l.b16 %v665
    %v906 = vunpack.c.h.b16 %v665
    %v907 = vunpack.c.l.b16 %v666
    %v908 = vunpack.c.l.b16 %v667
    %v909 = vunpack.c.h.b16 %v667
    %v910 = vunpack.c.l.b16 %v668
    %v911 = vunpack.c.l.b16 %v669
    %v912 = vunpack.c.h.b16 %v669
    %v913 = vunpack.c.l.b16 %v670
    %v914 = vunpack.c.l.b16 %v671
    %v915 = vunpack.c.h.b16 %v671
    %v916 = vunpack.c.l.b16 %v672
    %v917 = vunpack.c.l.b16 %v673
    %v918 = vunpack.c.h.b16 %v673
    %v919 = vunpack.c.l.b16 %v674
    %v920 = vunpack.c.l.b16 %v675
    %v921 = vunpack.c.h.b16 %v675
    %v922 = vunpack.c.l.b16 %v676
    %v923 = vpack.c.b16 %v782, %v779
    %v924 = vpack.c.b16 %v783, %v780
    %v925 = vpack.c.b16 %v784, %v781
    %v926 = vpack.c.b16 %v788, %v785
    %v927 = vpack.c.b16 %v789, %v786
    %v928 = vpack.c.b16 %v790, %v787
    %v929 = vpack.c.b16 %v794, %v791
    %v930 = vpack.c.b16 %v795, %v792
    %v931 = vpack.c.b16 %v796, %v793
    %v932 = vpack.c.b16 %v800, %v797
    %v933 = vpack.c.b16 %v801, %v798
    %v934 = vpack.c.b16 %v802, %v799
    %v935 = vpack.c.b16 %v806, %v803
    %v936 = vpack.c.b16 %v807, %v804
    %v937 = vpack.c.b16 %v808, %v805
    %v938 = vpack.c.b16 %v812, %v809
    %v939 = vpack.c.b16 %v813, %v810
    %v940 = vpack.c.b16 %v814, %v811
    %v941 = vpack.c.b16 %v818, %v815
    %v942 = vpack.c.b16 %v819, %v816
    %v943 = vpack.c.b16 %v820, %v817
    %v944 = vpack.c.b16 %v824, %v821
    %v945 = vpack.c.b16 %v825, %v822
    %v946 = vpack.c.b16 %v826, %v823
    %v947 = vpack.c.b16 %v830, %v827
    %v948 = vpack.c.b16 %v831, %v828
    %v949 = vpack.c.b16 %v832, %v829
    %v950 = vpack.c.b16 %v836, %v833
    %v951 = vpack.c.b16 %v837, %v834
    %v952 = vpack.c.b16 %v838, %v835
    %v953 = vpack.c.b16 %v842, %v839
    %v954 = vpack.c.b16 %v843, %v840
    %v955 = vpack.c.b16 %v844, %v841
    %v956 = vpack.c.b16 %v848, %v845
    %v957 = vpack.c.b16 %v849, %v846
    %v958 = vpack.c.b16 %v850, %v847
    %v959 = vpack.c.b16 %v854, %v851
    %v960 = vpack.c.b16 %v855, %v852
    %v961 = vpack.c.b16 %v856, %v853
    %v962 = vpack.c.b16 %v860, %v857
    %v963 = vpack.c.b16 %v861, %v858
    %v964 = vpack.c.b16 %v862, %v859
    %v965 = vpack.c.b16 %v866, %v863
    %v966 = vpack.c.b16 %v867, %v864
    %v967 = vpack.c.b16 %v868, %v865
    %v968 = vpack.c.b16 %v872, %v869
    %v969 = vpack.c.b16 %v873, %v870
    %v970 = vpack.c.b16 %v874, %v871
    %v971 = vpack.c.b16 %v878, %v875
    %v972 = vpack.c.b16 %v879, %v876
    %v973 = vpack.c.b16 %v880, %v877
    %v974 = vpack.c.b16 %v884, %v881
    %v975 = vpack.c.b16 %v885, %v882
    %v976 = vpack.c.b16 %v886, %v883
    %v977 = vpack.c.b16 %v890, %v887
    %v978 = vpack.c.b16 %v891, %v888
    %v979 = vpack.c.b16 %v892, %v889
    %v980 = vpack.c.b16 %v896, %v893
    %v981 = vpack.c.b16 %v897, %v894
    %v982 = vpack.c.b16 %v898, %v895
    %v983 = vpack.c.b16 %v902, %v899
    %v984 = vpack.c.b16 %v903, %v900
    %v985 = vpack.c.b16 %v904, %v901
    %v986 = vpack.c.b16 %v908, %v905
    %v987 = vpack.c.b16 %v909, %v906
    %v988 = vpack.c.b16 %v910, %v907
    %v989 = vpack.c.b16 %v914, %v911
    %v990 = vpack.c.b16 %v915, %v912
    %v991 = vpack.c.b16 %v916, %v913
    %v992 = vpack.c.b16 %v920, %v917
    %v993 = vpack.c.b16 %v921, %v918
    %v994 = vpack.c.b16 %v922, %v919
    %1067 = vmatpush.bf16.msra.mxu0 %v944
    %1068 = vmatpush.bf16.msra.mxu0 %v941
    %1069 = vmatpush.bf16.msra.mxu0 %v938
    %1070 = vmatpush.bf16.msra.mxu0 %v935
    %1071 = vmatpush.bf16.msra.mxu0 %v932
    %1072 = vmatpush.bf16.msra.mxu0 %v929
    %1073 = vmatpush.bf16.msra.mxu0 %v926
    %1074 = vmatpush.bf16.msra.mxu0 %v923
    %1075 = vmatmul.bf16.gmra.mxu0 %v680
    %v1076 = vpop.f32.mrf.mxu0
    %v1077 = vadd.f32 0.0, %v1076
    %v1078 = vpop.f32.mrf.mxu0
    %1079 = vdwg.mxu0
    %1080 = vmatpush.bf16.msra.mxu0 %v968
    %1081 = vmatpush.bf16.msra.mxu0 %v965
    %1082 = vmatpush.bf16.msra.mxu0 %v962
    %1083 = vmatpush.bf16.msra.mxu0 %v959
    %1084 = vmatpush.bf16.msra.mxu0 %v956
    %1085 = vmatpush.bf16.msra.mxu0 %v953
    %1086 = vmatpush.bf16.msra.mxu0 %v950
    %1087 = vmatpush.bf16.msra.mxu0 %v947
    %1088 = vmatmul.bf16.gmra.mxu0 %v681
    %v1089 = vpop.f32.mrf.mxu0
    %v1090 = vadd.f32 %v1077, %v1089
    %v1091 = vpop.f32.mrf.mxu0
    %1092 = vdwg.mxu0
    %1093 = vmatpush.bf16.msra.mxu0 %v992
    %1094 = vmatpush.bf16.msra.mxu0 %v989
    %1095 = vmatpush.bf16.msra.mxu0 %v986
    %1096 = vmatpush.bf16.msra.mxu0 %v983
    %1097 = vmatpush.bf16.msra.mxu0 %v980
    %1098 = vmatpush.bf16.msra.mxu0 %v977
    %1099 = vmatpush.bf16.msra.mxu0 %v974
    %1100 = vmatpush.bf16.msra.mxu0 %v971
    %1101 = vmatmul.bf16.gmra.mxu0 %v682
    %v1102 = vpop.f32.mrf.mxu0
    %v1103 = vadd.f32 %v1090, %v1102
    %v1104 = vpop.f32.mrf.mxu0
    %1105 = vdwg.mxu0
    %1106 = vmatpush.bf16.msra.mxu0 %v945
    %1107 = vmatpush.bf16.msra.mxu0 %v942
    %1108 = vmatpush.bf16.msra.mxu0 %v939
    %1109 = vmatpush.bf16.msra.mxu0 %v936
    %1110 = vmatpush.bf16.msra.mxu0 %v933
    %1111 = vmatpush.bf16.msra.mxu0 %v930
    %1112 = vmatpush.bf16.msra.mxu0 %v927
    %1113 = vmatpush.bf16.msra.mxu0 %v924
    %1114 = vmatmul.bf16.gmra.mxu0 %v680
    %v1115 = vpop.f32.mrf.mxu0
    %v1116 = vadd.f32 0.0, %v1115
    %v1117 = vpop.f32.mrf.mxu0
    %1118 = vdwg.mxu0
    %1119 = vmatpush.bf16.msra.mxu0 %v969
    %1120 = vmatpush.bf16.msra.mxu0 %v966
    %1121 = vmatpush.bf16.msra.mxu0 %v963
    %1122 = vmatpush.bf16.msra.mxu0 %v960
    %1123 = vmatpush.bf16.msra.mxu0 %v957
    %1124 = vmatpush.bf16.msra.mxu0 %v954
    %1125 = vmatpush.bf16.msra.mxu0 %v951
    %1126 = vmatpush.bf16.msra.mxu0 %v948
    %1127 = vmatmul.bf16.gmra.mxu0 %v681
    %v1128 = vpop.f32.mrf.mxu0
    %v1129 = vadd.f32 %v1116, %v1128
    %v1130 = vpop.f32.mrf.mxu0
    %1131 = vdwg.mxu0
    %1132 = vmatpush.bf16.msra.mxu0 %v993
    %1133 = vmatpush.bf16.msra.mxu0 %v990
    %1134 = vmatpush.bf16.msra.mxu0 %v987
    %1135 = vmatpush.bf16.msra.mxu0 %v984
    %1136 = vmatpush.bf16.msra.mxu0 %v981
    %1137 = vmatpush.bf16.msra.mxu0 %v978
    %1138 = vmatpush.bf16.msra.mxu0 %v975
    %1139 = vmatpush.bf16.msra.mxu0 %v972
    %1140 = vmatmul.bf16.gmra.mxu0 %v682
    %v1141 = vpop.f32.mrf.mxu0
    %v1142 = vadd.f32 %v1129, %v1141
    %v1143 = vpop.f32.mrf.mxu0
    %1144 = vdwg.mxu0
    %1145 = vmatpush.bf16.msra.mxu0 %v946
    %1146 = vmatpush.bf16.msra.mxu0 %v943
    %1147 = vmatpush.bf16.msra.mxu0 %v940
    %1148 = vmatpush.bf16.msra.mxu0 %v937
    %1149 = vmatpush.bf16.msra.mxu0 %v934
    %1150 = vmatpush.bf16.msra.mxu0 %v931
    %1151 = vmatpush.bf16.msra.mxu0 %v928
    %1152 = vmatpush.bf16.msra.mxu0 %v925
    %1153 = vmatmul.bf16.gmra.mxu0 %v680
    %v1154 = vpop.f32.mrf.mxu0
    %v1155 = vadd.f32 0.0, %v1154
    %v1156 = vpop.f32.mrf.mxu0
    %1157 = vdwg.mxu0
    %1158 = vmatpush.bf16.msra.mxu0 %v970
    %1159 = vmatpush.bf16.msra.mxu0 %v967
    %1160 = vmatpush.bf16.msra.mxu0 %v964
    %1161 = vmatpush.bf16.msra.mxu0 %v961
    %1162 = vmatpush.bf16.msra.mxu0 %v958
    %1163 = vmatpush.bf16.msra.mxu0 %v955
    %1164 = vmatpush.bf16.msra.mxu0 %v952
    %1165 = vmatpush.bf16.msra.mxu0 %v949
    %1166 = vmatmul.bf16.gmra.mxu0 %v681
    %v1167 = vpop.f32.mrf.mxu0
    %v1168 = vadd.f32 %v1155, %v1167
    %v1169 = vpop.f32.mrf.mxu0
    %1170 = vdwg.mxu0
    %1171 = vmatpush.bf16.msra.mxu0 %v994
    %1172 = vmatpush.bf16.msra.mxu0 %v991
    %1173 = vmatpush.bf16.msra.mxu0 %v988
    %1174 = vmatpush.bf16.msra.mxu0 %v985
    %1175 = vmatpush.bf16.msra.mxu0 %v982
    %1176 = vmatpush.bf16.msra.mxu0 %v979
    %1177 = vmatpush.bf16.msra.mxu0 %v976
    %1178 = vmatpush.bf16.msra.mxu0 %v973
    %1179 = vmatmul.bf16.gmra.mxu0 %v682
    %v1180 = vpop.f32.mrf.mxu0
    %v1181 = vadd.f32 %v1168, %v1180
    %v1182 = vpop.f32.mrf.mxu0
    %1183 = vdwg.mxu0
    %v1186 = vunpack.c.l.b16 %v678
    %v1187 = vunpack.c.h.b16 %v678
    %v1188 = vunpack.c.l.b16 %v679
    %v1189 = vpack.c.b16 %v1186, %v1186
    %v1190 = vpack.c.b16 %v1187, %v1187
    %v1191 = vpack.c.b16 %v1188, %v1188
    %v1291 = vunpack.c.l.b16 %v485
    %v1292 = vunpack.c.h.b16 %v485
    %v1293 = vunpack.c.l.b16 %v486
    %v1294 = vunpack.c.l.b16 %v487
    %v1295 = vunpack.c.h.b16 %v487
    %v1296 = vunpack.c.l.b16 %v488
    %v1297 = vunpack.c.l.b16 %v489
    %v1298 = vunpack.c.h.b16 %v489
    %v1299 = vunpack.c.l.b16 %v490
    %v1300 = vunpack.c.l.b16 %v491
    %v1301 = vunpack.c.h.b16 %v491
    %v1302 = vunpack.c.l.b16 %v492
    %v1303 = vunpack.c.l.b16 %v493
    %v1304 = vunpack.c.h.b16 %v493
    %v1305 = vunpack.c.l.b16 %v494
    %v1306 = vunpack.c.l.b16 %v495
    %v1307 = vunpack.c.h.b16 %v495
    %v1308 = vunpack.c.l.b16 %v496
    %v1309 = vunpack.c.l.b16 %v497
    %v1310 = vunpack.c.h.b16 %v497
    %v1311 = vunpack.c.l.b16 %v498
    %v1312 = vunpack.c.l.b16 %v499
    %v1313 = vunpack.c.h.b16 %v499
    %v1314 = vunpack.c.l.b16 %v500
    %v1315 = vunpack.c.l.b16 %v501
    %v1316 = vunpack.c.h.b16 %v501
    %v1317 = vunpack.c.l.b16 %v502
    %v1318 = vunpack.c.l.b16 %v503
    %v1319 = vunpack.c.h.b16 %v503
    %v1320 = vunpack.c.l.b16 %v504
    %v1321 = vunpack.c.l.b16 %v505
    %v1322 = vunpack.c.h.b16 %v505
    %v1323 = vunpack.c.l.b16 %v506
    %v1324 = vunpack.c.l.b16 %v507
    %v1325 = vunpack.c.h.b16 %v507
    %v1326 = vunpack.c.l.b16 %v508
    %v1327 = vunpack.c.l.b16 %v509
    %v1328 = vunpack.c.h.b16 %v509
    %v1329 = vunpack.c.l.b16 %v510
    %v1330 = vunpack.c.l.b16 %v511
    %v1331 = vunpack.c.h.b16 %v511
    %v1332 = vunpack.c.l.b16 %v512
    %v1333 = vunpack.c.l.b16 %v513
    %v1334 = vunpack.c.h.b16 %v513
    %v1335 = vunpack.c.l.b16 %v514
    %v1336 = vunpack.c.l.b16 %v515
    %v1337 = vunpack.c.h.b16 %v515
    %v1338 = vunpack.c.l.b16 %v516
    %v1339 = vunpack.c.l.b16 %v517
    %v1340 = vunpack.c.h.b16 %v517
    %v1341 = vunpack.c.l.b16 %v518
    %v1342 = vunpack.c.l.b16 %v519
    %v1343 = vunpack.c.h.b16 %v519
    %v1344 = vunpack.c.l.b16 %v520
    %v1345 = vunpack.c.l.b16 %v521
    %v1346 = vunpack.c.h.b16 %v521
    %v1347 = vunpack.c.l.b16 %v522
    %v1348 = vunpack.c.l.b16 %v523
    %v1349 = vunpack.c.h.b16 %v523
    %v1350 = vunpack.c.l.b16 %v524
    %v1351 = vunpack.c.l.b16 %v525
    %v1352 = vunpack.c.h.b16 %v525
    %v1353 = vunpack.c.l.b16 %v526
    %v1354 = vunpack.c.l.b16 %v527
    %v1355 = vunpack.c.h.b16 %v527
    %v1356 = vunpack.c.l.b16 %v528
    %v1357 = vunpack.c.l.b16 %v529
    %v1358 = vunpack.c.h.b16 %v529
    %v1359 = vunpack.c.l.b16 %v530
    %v1360 = vunpack.c.l.b16 %v531
    %v1361 = vunpack.c.h.b16 %v531
    %v1362 = vunpack.c.l.b16 %v532
    %v1363 = vunpack.c.l.b16 %v533
    %v1364 = vunpack.c.h.b16 %v533
    %v1365 = vunpack.c.l.b16 %v534
    %v1366 = vunpack.c.l.b16 %v535
    %v1367 = vunpack.c.h.b16 %v535
    %v1368 = vunpack.c.l.b16 %v536
    %v1369 = vunpack.c.l.b16 %v537
    %v1370 = vunpack.c.h.b16 %v537
    %v1371 = vunpack.c.l.b16 %v538
    %v1372 = vunpack.c.l.b16 %v539
    %v1373 = vunpack.c.h.b16 %v539
    %v1374 = vunpack.c.l.b16 %v540
    %v1375 = vunpack.c.l.b16 %v541
    %v1376 = vunpack.c.h.b16 %v541
    %v1377 = vunpack.c.l.b16 %v542
    %v1378 = vunpack.c.l.b16 %v543
    %v1379 = vunpack.c.h.b16 %v543
    %v1380 = vunpack.c.l.b16 %v544
    %v1381 = vunpack.c.l.b16 %v545
    %v1382 = vunpack.c.h.b16 %v545
    %v1383 = vunpack.c.l.b16 %v546
    %v1384 = vunpack.c.l.b16 %v547
    %v1385 = vunpack.c.h.b16 %v547
    %v1386 = vunpack.c.l.b16 %v548
    %v1387 = vunpack.c.l.b16 %v549
    %v1388 = vunpack.c.h.b16 %v549
    %v1389 = vunpack.c.l.b16 %v550
    %v1390 = vunpack.c.l.b16 %v551
    %v1391 = vunpack.c.h.b16 %v551
    %v1392 = vunpack.c.l.b16 %v552
    %v1393 = vunpack.c.l.b16 %v553
    %v1394 = vunpack.c.h.b16 %v553
    %v1395 = vunpack.c.l.b16 %v554
    %v1396 = vunpack.c.l.b16 %v555
    %v1397 = vunpack.c.h.b16 %v555
    %v1398 = vunpack.c.l.b16 %v556
    %v1399 = vunpack.c.l.b16 %v557
    %v1400 = vunpack.c.h.b16 %v557
    %v1401 = vunpack.c.l.b16 %v558
    %v1402 = vunpack.c.l.b16 %v559
    %v1403 = vunpack.c.h.b16 %v559
    %v1404 = vunpack.c.l.b16 %v560
    %v1405 = vunpack.c.l.b16 %v561
    %v1406 = vunpack.c.h.b16 %v561
    %v1407 = vunpack.c.l.b16 %v562
    %v1408 = vunpack.c.l.b16 %v563
    %v1409 = vunpack.c.h.b16 %v563
    %v1410 = vunpack.c.l.b16 %v564
    %v1411 = vunpack.c.l.b16 %v565
    %v1412 = vunpack.c.h.b16 %v565
    %v1413 = vunpack.c.l.b16 %v566
    %v1414 = vunpack.c.l.b16 %v567
    %v1415 = vunpack.c.h.b16 %v567
    %v1416 = vunpack.c.l.b16 %v568
    %v1417 = vunpack.c.l.b16 %v569
    %v1418 = vunpack.c.h.b16 %v569
    %v1419 = vunpack.c.l.b16 %v570
    %v1420 = vunpack.c.l.b16 %v571
    %v1421 = vunpack.c.h.b16 %v571
    %v1422 = vunpack.c.l.b16 %v572
    %v1423 = vunpack.c.l.b16 %v573
    %v1424 = vunpack.c.h.b16 %v573
    %v1425 = vunpack.c.l.b16 %v574
    %v1426 = vunpack.c.l.b16 %v575
    %v1427 = vunpack.c.h.b16 %v575
    %v1428 = vunpack.c.l.b16 %v576
    %v1429 = vunpack.c.l.b16 %v577
    %v1430 = vunpack.c.h.b16 %v577
    %v1431 = vunpack.c.l.b16 %v578
    %v1432 = vunpack.c.l.b16 %v579
    %v1433 = vunpack.c.h.b16 %v579
    %v1434 = vunpack.c.l.b16 %v580
    %v1435 = vpack.c.b16 %v1294, %v1291
    %v1436 = vpack.c.b16 %v1295, %v1292
    %v1437 = vpack.c.b16 %v1296, %v1293
    %v1438 = vpack.c.b16 %v1300, %v1297
    %v1439 = vpack.c.b16 %v1301, %v1298
    %v1440 = vpack.c.b16 %v1302, %v1299
    %v1441 = vpack.c.b16 %v1306, %v1303
    %v1442 = vpack.c.b16 %v1307, %v1304
    %v1443 = vpack.c.b16 %v1308, %v1305
    %v1444 = vpack.c.b16 %v1312, %v1309
    %v1445 = vpack.c.b16 %v1313, %v1310
    %v1446 = vpack.c.b16 %v1314, %v1311
    %v1447 = vpack.c.b16 %v1318, %v1315
    %v1448 = vpack.c.b16 %v1319, %v1316
    %v1449 = vpack.c.b16 %v1320, %v1317
    %v1450 = vpack.c.b16 %v1324, %v1321
    %v1451 = vpack.c.b16 %v1325, %v1322
    %v1452 = vpack.c.b16 %v1326, %v1323
    %v1453 = vpack.c.b16 %v1330, %v1327
    %v1454 = vpack.c.b16 %v1331, %v1328
    %v1455 = vpack.c.b16 %v1332, %v1329
    %v1456 = vpack.c.b16 %v1336, %v1333
    %v1457 = vpack.c.b16 %v1337, %v1334
    %v1458 = vpack.c.b16 %v1338, %v1335
    %v1459 = vpack.c.b16 %v1342, %v1339
    %v1460 = vpack.c.b16 %v1343, %v1340
    %v1461 = vpack.c.b16 %v1344, %v1341
    %v1462 = vpack.c.b16 %v1348, %v1345
    %v1463 = vpack.c.b16 %v1349, %v1346
    %v1464 = vpack.c.b16 %v1350, %v1347
    %v1465 = vpack.c.b16 %v1354, %v1351
    %v1466 = vpack.c.b16 %v1355, %v1352
    %v1467 = vpack.c.b16 %v1356, %v1353
    %v1468 = vpack.c.b16 %v1360, %v1357
    %v1469 = vpack.c.b16 %v1361, %v1358
    %v1470 = vpack.c.b16 %v1362, %v1359
    %v1471 = vpack.c.b16 %v1366, %v1363
    %v1472 = vpack.c.b16 %v1367, %v1364
    %v1473 = vpack.c.b16 %v1368, %v1365
    %v1474 = vpack.c.b16 %v1372, %v1369
    %v1475 = vpack.c.b16 %v1373, %v1370
    %v1476 = vpack.c.b16 %v1374, %v1371
    %v1477 = vpack.c.b16 %v1378, %v1375
    %v1478 = vpack.c.b16 %v1379, %v1376
    %v1479 = vpack.c.b16 %v1380, %v1377
    %v1480 = vpack.c.b16 %v1384, %v1381
    %v1481 = vpack.c.b16 %v1385, %v1382
    %v1482 = vpack.c.b16 %v1386, %v1383
    %v1483 = vpack.c.b16 %v1390, %v1387
    %v1484 = vpack.c.b16 %v1391, %v1388
    %v1485 = vpack.c.b16 %v1392, %v1389
    %v1486 = vpack.c.b16 %v1396, %v1393
    %v1487 = vpack.c.b16 %v1397, %v1394
    %v1488 = vpack.c.b16 %v1398, %v1395
    %v1489 = vpack.c.b16 %v1402, %v1399
    %v1490 = vpack.c.b16 %v1403, %v1400
    %v1491 = vpack.c.b16 %v1404, %v1401
    %v1492 = vpack.c.b16 %v1408, %v1405
    %v1493 = vpack.c.b16 %v1409, %v1406
    %v1494 = vpack.c.b16 %v1410, %v1407
    %v1495 = vpack.c.b16 %v1414, %v1411
    %v1496 = vpack.c.b16 %v1415, %v1412
    %v1497 = vpack.c.b16 %v1416, %v1413
    %v1498 = vpack.c.b16 %v1420, %v1417
    %v1499 = vpack.c.b16 %v1421, %v1418
    %v1500 = vpack.c.b16 %v1422, %v1419
    %v1501 = vpack.c.b16 %v1426, %v1423
    %v1502 = vpack.c.b16 %v1427, %v1424
    %v1503 = vpack.c.b16 %v1428, %v1425
    %v1504 = vpack.c.b16 %v1432, %v1429
    %v1505 = vpack.c.b16 %v1433, %v1430
    %v1506 = vpack.c.b16 %v1434, %v1431
    %1579 = vmatpush.bf16.msra.mxu0 %v1456
    %1580 = vmatpush.bf16.msra.mxu0 %v1453
    %1581 = vmatpush.bf16.msra.mxu0 %v1450
    %1582 = vmatpush.bf16.msra.mxu0 %v1447
    %1583 = vmatpush.bf16.msra.mxu0 %v1444
    %1584 = vmatpush.bf16.msra.mxu0 %v1441
    %1585 = vmatpush.bf16.msra.mxu0 %v1438
    %1586 = vmatpush.bf16.msra.mxu0 %v1435
    %1587 = vmatmul.bf16.gmra.mxu0 %v1189
    %v1588 = vpop.f32.mrf.mxu0
    %v1589 = vadd.f32 %v1103, %v1588
    %v1590 = vpop.f32.mrf.mxu0
    %1591 = vdwg.mxu0
    %1592 = vmatpush.bf16.msra.mxu0 %v1480
    %1593 = vmatpush.bf16.msra.mxu0 %v1477
    %1594 = vmatpush.bf16.msra.mxu0 %v1474
    %1595 = vmatpush.bf16.msra.mxu0 %v1471
    %1596 = vmatpush.bf16.msra.mxu0 %v1468
    %1597 = vmatpush.bf16.msra.mxu0 %v1465
    %1598 = vmatpush.bf16.msra.mxu0 %v1462
    %1599 = vmatpush.bf16.msra.mxu0 %v1459
    %1600 = vmatmul.bf16.gmra.mxu0 %v1190
    %v1601 = vpop.f32.mrf.mxu0
    %v1602 = vadd.f32 %v1589, %v1601
    %v1603 = vpop.f32.mrf.mxu0
    %1604 = vdwg.mxu0
    %1605 = vmatpush.bf16.msra.mxu0 %v1504
    %1606 = vmatpush.bf16.msra.mxu0 %v1501
    %1607 = vmatpush.bf16.msra.mxu0 %v1498
    %1608 = vmatpush.bf16.msra.mxu0 %v1495
    %1609 = vmatpush.bf16.msra.mxu0 %v1492
    %1610 = vmatpush.bf16.msra.mxu0 %v1489
    %1611 = vmatpush.bf16.msra.mxu0 %v1486
    %1612 = vmatpush.bf16.msra.mxu0 %v1483
    %1613 = vmatmul.bf16.gmra.mxu0 %v1191
    %v1614 = vpop.f32.mrf.mxu0
    %v1615 = vadd.f32 %v1602, %v1614
    %v1616 = vpop.f32.mrf.mxu0
    %1617 = vdwg.mxu0
    %1618 = vmatpush.bf16.msra.mxu0 %v1457
    %1619 = vmatpush.bf16.msra.mxu0 %v1454
    %1620 = vmatpush.bf16.msra.mxu0 %v1451
    %1621 = vmatpush.bf16.msra.mxu0 %v1448
    %1622 = vmatpush.bf16.msra.mxu0 %v1445
    %1623 = vmatpush.bf16.msra.mxu0 %v1442
    %1624 = vmatpush.bf16.msra.mxu0 %v1439
    %1625 = vmatpush.bf16.msra.mxu0 %v1436
    %1626 = vmatmul.bf16.gmra.mxu0 %v1189
    %v1627 = vpop.f32.mrf.mxu0
    %v1628 = vadd.f32 %v1142, %v1627
    %v1629 = vpop.f32.mrf.mxu0
    %1630 = vdwg.mxu0
    %1631 = vmatpush.bf16.msra.mxu0 %v1481
    %1632 = vmatpush.bf16.msra.mxu0 %v1478
    %1633 = vmatpush.bf16.msra.mxu0 %v1475
    %1634 = vmatpush.bf16.msra.mxu0 %v1472
    %1635 = vmatpush.bf16.msra.mxu0 %v1469
    %1636 = vmatpush.bf16.msra.mxu0 %v1466
    %1637 = vmatpush.bf16.msra.mxu0 %v1463
    %1638 = vmatpush.bf16.msra.mxu0 %v1460
    %1639 = vmatmul.bf16.gmra.mxu0 %v1190
    %v1640 = vpop.f32.mrf.mxu0
    %v1641 = vadd.f32 %v1628, %v1640
    %v1642 = vpop.f32.mrf.mxu0
    %1643 = vdwg.mxu0
    %1644 = vmatpush.bf16.msra.mxu0 %v1505
    %1645 = vmatpush.bf16.msra.mxu0 %v1502
    %1646 = vmatpush.bf16.msra.mxu0 %v1499
    %1647 = vmatpush.bf16.msra.mxu0 %v1496
    %1648 = vmatpush.bf16.msra.mxu0 %v1493
    %1649 = vmatpush.bf16.msra.mxu0 %v1490
    %1650 = vmatpush.bf16.msra.mxu0 %v1487
    %1651 = vmatpush.bf16.msra.mxu0 %v1484
    %1652 = vmatmul.bf16.gmra.mxu0 %v1191
    %v1653 = vpop.f32.mrf.mxu0
    %v1654 = vadd.f32 %v1641, %v1653
    %v1655 = vpop.f32.mrf.mxu0
    %1656 = vdwg.mxu0
    %1657 = vmatpush.bf16.msra.mxu0 %v1458
    %1658 = vmatpush.bf16.msra.mxu0 %v1455
    %1659 = vmatpush.bf16.msra.mxu0 %v1452
    %1660 = vmatpush.bf16.msra.mxu0 %v1449
    %1661 = vmatpush.bf16.msra.mxu0 %v1446
    %1662 = vmatpush.bf16.msra.mxu0 %v1443
    %1663 = vmatpush.bf16.msra.mxu0 %v1440
    %1664 = vmatpush.bf16.msra.mxu0 %v1437
    %1665 = vmatmul.bf16.gmra.mxu0 %v1189
    %v1666 = vpop.f32.mrf.mxu0
    %v1667 = vadd.f32 %v1181, %v1666
    %v1668 = vpop.f32.mrf.mxu0
    %1669 = vdwg.mxu0
    %1670 = vmatpush.bf16.msra.mxu0 %v1482
    %1671 = vmatpush.bf16.msra.mxu0 %v1479
    %1672 = vmatpush.bf16.msra.mxu0 %v1476
    %1673 = vmatpush.bf16.msra.mxu0 %v1473
    %1674 = vmatpush.bf16.msra.mxu0 %v1470
    %1675 = vmatpush.bf16.msra.mxu0 %v1467
    %1676 = vmatpush.bf16.msra.mxu0 %v1464
    %1677 = vmatpush.bf16.msra.mxu0 %v1461
    %1678 = vmatmul.bf16.gmra.mxu0 %v1190
    %v1679 = vpop.f32.mrf.mxu0
    %v1680 = vadd.f32 %v1667, %v1679
    %v1681 = vpop.f32.mrf.mxu0
    %1682 = vdwg.mxu0
    %1683 = vmatpush.bf16.msra.mxu0 %v1506
    %1684 = vmatpush.bf16.msra.mxu0 %v1503
    %1685 = vmatpush.bf16.msra.mxu0 %v1500
    %1686 = vmatpush.bf16.msra.mxu0 %v1497
    %1687 = vmatpush.bf16.msra.mxu0 %v1494
    %1688 = vmatpush.bf16.msra.mxu0 %v1491
    %1689 = vmatpush.bf16.msra.mxu0 %v1488
    %1690 = vmatpush.bf16.msra.mxu0 %v1485
    %1691 = vmatmul.bf16.gmra.mxu0 %v1191
    %v1692 = vpop.f32.mrf.mxu0
    %v1693 = vadd.f32 %v1680, %v1692
    %v1694 = vpop.f32.mrf.mxu0
    %1695 = vdwg.mxu0
    %v1697 = vperm.slane %v677, 0
    %v1698 = vperm.slane %v677, 1
    %v1699 = vperm.slane %v677, 2
    %v1703 = vadd.f32 %v1615, %v1697
    %v1704 = vadd.f32 %v1654, %v1698
    %v1705 = vadd.f32 %v1693, %v1699
    %v1706 = vmax.f32 %v1703, 0.0
    %v1707 = vmax.f32 %v1704, 0.0
    %v1708 = vmax.f32 %v1705, 0.0
    %v1709 = vld [vmem:[%s4] sm:$0xff]
    %v1710 = vld [vmem:[%s4 + $0x8] sm:$0xff]
    %v1711 = vld [vmem:[%s4 + $0x10] sm:$0xff]
    %v1712 = vld [vmem:[%s4 + $0x18] sm:$0xff]
    %v1713 = vld [vmem:[%s4 + $0x20] sm:$0xff]
    %v1714 = vld [vmem:[%s4 + $0x28] sm:$0xff]
    %v1715 = vld [vmem:[%s4 + $0x30] sm:$0xff]
    %v1716 = vld [vmem:[%s4 + $0x38] sm:$0xff]
    %v1717 = vld [vmem:[%s4 + $0x40] sm:$0xff]
    %v1718 = vld [vmem:[%s4 + $0x48] sm:$0xff]
    %v1719 = vld [vmem:[%s4 + $0x50] sm:$0xff]
    %v1720 = vld [vmem:[%s4 + $0x58] sm:$0xff]
    %v1721 = vld [vmem:[%s4 + $0x60] sm:$0xff]
    %v1722 = vld [vmem:[%s4 + $0x68] sm:$0xff]
    %v1723 = vld [vmem:[%s4 + $0x70] sm:$0xff]
    %v1724 = vld [vmem:[%s4 + $0x78] sm:$0xff]
    %v1725 = vld [vmem:[%s4 + $0x80] sm:$0xff]
    %v1726 = vld [vmem:[%s4 + $0x88] sm:$0xff]
    %v1727 = vld [vmem:[%s4 + $0x90] sm:$0xff]
    %v1728 = vld [vmem:[%s4 + $0x98] sm:$0xff]
    %v1729 = vld [vmem:[%s4 + $0xa0] sm:$0xff]
    %v1730 = vld [vmem:[%s4 + $0xa8] sm:$0xff]
    %v1731 = vld [vmem:[%s4 + $0xb0] sm:$0xff]
    %v1732 = vld [vmem:[%s4 + $0xb8] sm:$0xff]
    %v1733 = vld [vmem:[%s4 + $0xc0] sm:$0xff]
    %v1734 = vld [vmem:[%s4 + $0xc8] sm:$0xff]
    %v1735 = vld [vmem:[%s4 + $0xd0] sm:$0xff]
    %v1736 = vld [vmem:[%s4 + $0xd8] sm:$0xff]
    %v1737 = vld [vmem:[%s4 + $0xe0] sm:$0xff]
    %v1738 = vld [vmem:[%s4 + $0xe8] sm:$0xff]
    %v1739 = vld [vmem:[%s4 + $0xf0] sm:$0xff]
    %v1740 = vld [vmem:[%s4 + $0xf8] sm:$0xff]
    %v1741 = vld [vmem:[%s4 + $0x100] sm:$0xff]
    %v1742 = vld [vmem:[%s4 + $0x108] sm:$0xff]
    %v1743 = vld [vmem:[%s4 + $0x110] sm:$0xff]
    %v1744 = vld [vmem:[%s4 + $0x118] sm:$0xff]
    %v1745 = vld [vmem:[%s4 + $0x120] sm:$0xff]
    %v1746 = vld [vmem:[%s4 + $0x128] sm:$0xff]
    %v1747 = vld [vmem:[%s4 + $0x130] sm:$0xff]
    %v1748 = vld [vmem:[%s4 + $0x138] sm:$0xff]
    %v1749 = vld [vmem:[%s4 + $0x140] sm:$0xff]
    %v1750 = vld [vmem:[%s4 + $0x148] sm:$0xff]
    %v1751 = vld [vmem:[%s4 + $0x150] sm:$0xff]
    %v1752 = vld [vmem:[%s4 + $0x158] sm:$0xff]
    %v1753 = vld [vmem:[%s4 + $0x160] sm:$0xff]
    %v1754 = vld [vmem:[%s4 + $0x168] sm:$0xff]
    %v1755 = vld [vmem:[%s4 + $0x170] sm:$0xff]
    %v1756 = vld [vmem:[%s4 + $0x178] sm:$0xff]
    %v1757 = vld [vmem:[#allocation6 + $0x8] sm:$0x3]
    %v1758 = vpack.c.bf16 %v1706, %v1706
    %v1759 = vpack.c.bf16 %v1707, %v1707
    %v1760 = vpack.c.bf16 %v1708, %v1708
    %v1762 = vperm.slane %v1757, 0
    %v1763 = vperm.slane %v1757, 1
    %v1814 = vunpack.c.l.b16 %v1709
    %v1815 = vunpack.c.h.b16 %v1709
    %v1816 = vunpack.c.l.b16 %v1710
    %v1817 = vunpack.c.h.b16 %v1710
    %v1818 = vunpack.c.l.b16 %v1711
    %v1819 = vunpack.c.h.b16 %v1711
    %v1820 = vunpack.c.l.b16 %v1712
    %v1821 = vunpack.c.h.b16 %v1712
    %v1822 = vunpack.c.l.b16 %v1713
    %v1823 = vunpack.c.h.b16 %v1713
    %v1824 = vunpack.c.l.b16 %v1714
    %v1825 = vunpack.c.h.b16 %v1714
    %v1826 = vunpack.c.l.b16 %v1715
    %v1827 = vunpack.c.h.b16 %v1715
    %v1828 = vunpack.c.l.b16 %v1716
    %v1829 = vunpack.c.h.b16 %v1716
    %v1830 = vunpack.c.l.b16 %v1717
    %v1831 = vunpack.c.h.b16 %v1717
    %v1832 = vunpack.c.l.b16 %v1718
    %v1833 = vunpack.c.h.b16 %v1718
    %v1834 = vunpack.c.l.b16 %v1719
    %v1835 = vunpack.c.h.b16 %v1719
    %v1836 = vunpack.c.l.b16 %v1720
    %v1837 = vunpack.c.h.b16 %v1720
    %v1838 = vunpack.c.l.b16 %v1721
    %v1839 = vunpack.c.h.b16 %v1721
    %v1840 = vunpack.c.l.b16 %v1722
    %v1841 = vunpack.c.h.b16 %v1722
    %v1842 = vunpack.c.l.b16 %v1723
    %v1843 = vunpack.c.h.b16 %v1723
    %v1844 = vunpack.c.l.b16 %v1724
    %v1845 = vunpack.c.h.b16 %v1724
    %v1846 = vunpack.c.l.b16 %v1725
    %v1847 = vunpack.c.h.b16 %v1725
    %v1848 = vunpack.c.l.b16 %v1726
    %v1849 = vunpack.c.h.b16 %v1726
    %v1850 = vunpack.c.l.b16 %v1727
    %v1851 = vunpack.c.h.b16 %v1727
    %v1852 = vunpack.c.l.b16 %v1728
    %v1853 = vunpack.c.h.b16 %v1728
    %v1854 = vunpack.c.l.b16 %v1729
    %v1855 = vunpack.c.h.b16 %v1729
    %v1856 = vunpack.c.l.b16 %v1730
    %v1857 = vunpack.c.h.b16 %v1730
    %v1858 = vunpack.c.l.b16 %v1731
    %v1859 = vunpack.c.h.b16 %v1731
    %v1860 = vunpack.c.l.b16 %v1732
    %v1861 = vunpack.c.h.b16 %v1732
    %v1862 = vunpack.c.l.b16 %v1733
    %v1863 = vunpack.c.h.b16 %v1733
    %v1864 = vunpack.c.l.b16 %v1734
    %v1865 = vunpack.c.h.b16 %v1734
    %v1866 = vunpack.c.l.b16 %v1735
    %v1867 = vunpack.c.h.b16 %v1735
    %v1868 = vunpack.c.l.b16 %v1736
    %v1869 = vunpack.c.h.b16 %v1736
    %v1870 = vunpack.c.l.b16 %v1737
    %v1871 = vunpack.c.h.b16 %v1737
    %v1872 = vunpack.c.l.b16 %v1738
    %v1873 = vunpack.c.h.b16 %v1738
    %v1874 = vunpack.c.l.b16 %v1739
    %v1875 = vunpack.c.h.b16 %v1739
    %v1876 = vunpack.c.l.b16 %v1740
    %v1877 = vunpack.c.h.b16 %v1740
    %v1878 = vunpack.c.l.b16 %v1741
    %v1879 = vunpack.c.h.b16 %v1741
    %v1880 = vunpack.c.l.b16 %v1742
    %v1881 = vunpack.c.h.b16 %v1742
    %v1882 = vunpack.c.l.b16 %v1743
    %v1883 = vunpack.c.h.b16 %v1743
    %v1884 = vunpack.c.l.b16 %v1744
    %v1885 = vunpack.c.h.b16 %v1744
    %v1886 = vunpack.c.l.b16 %v1745
    %v1887 = vunpack.c.h.b16 %v1745
    %v1888 = vunpack.c.l.b16 %v1746
    %v1889 = vunpack.c.h.b16 %v1746
    %v1890 = vunpack.c.l.b16 %v1747
    %v1891 = vunpack.c.h.b16 %v1747
    %v1892 = vunpack.c.l.b16 %v1748
    %v1893 = vunpack.c.h.b16 %v1748
    %v1894 = vunpack.c.l.b16 %v1749
    %v1895 = vunpack.c.h.b16 %v1749
    %v1896 = vunpack.c.l.b16 %v1750
    %v1897 = vunpack.c.h.b16 %v1750
    %v1898 = vunpack.c.l.b16 %v1751
    %v1899 = vunpack.c.h.b16 %v1751
    %v1900 = vunpack.c.l.b16 %v1752
    %v1901 = vunpack.c.h.b16 %v1752
    %v1902 = vunpack.c.l.b16 %v1753
    %v1903 = vunpack.c.h.b16 %v1753
    %v1904 = vunpack.c.l.b16 %v1754
    %v1905 = vunpack.c.h.b16 %v1754
    %v1906 = vunpack.c.l.b16 %v1755
    %v1907 = vunpack.c.h.b16 %v1755
    %v1908 = vunpack.c.l.b16 %v1756
    %v1909 = vunpack.c.h.b16 %v1756
    %v1910 = vpack.c.b16 %v1816, %v1814
    %v1911 = vpack.c.b16 %v1817, %v1815
    %v1912 = vpack.c.b16 %v1820, %v1818
    %v1913 = vpack.c.b16 %v1821, %v1819
    %v1914 = vpack.c.b16 %v1824, %v1822
    %v1915 = vpack.c.b16 %v1825, %v1823
    %v1916 = vpack.c.b16 %v1828, %v1826
    %v1917 = vpack.c.b16 %v1829, %v1827
    %v1918 = vpack.c.b16 %v1832, %v1830
    %v1919 = vpack.c.b16 %v1833, %v1831
    %v1920 = vpack.c.b16 %v1836, %v1834
    %v1921 = vpack.c.b16 %v1837, %v1835
    %v1922 = vpack.c.b16 %v1840, %v1838
    %v1923 = vpack.c.b16 %v1841, %v1839
    %v1924 = vpack.c.b16 %v1844, %v1842
    %v1925 = vpack.c.b16 %v1845, %v1843
    %v1926 = vpack.c.b16 %v1848, %v1846
    %v1927 = vpack.c.b16 %v1849, %v1847
    %v1928 = vpack.c.b16 %v1852, %v1850
    %v1929 = vpack.c.b16 %v1853, %v1851
    %v1930 = vpack.c.b16 %v1856, %v1854
    %v1931 = vpack.c.b16 %v1857, %v1855
    %v1932 = vpack.c.b16 %v1860, %v1858
    %v1933 = vpack.c.b16 %v1861, %v1859
    %v1934 = vpack.c.b16 %v1864, %v1862
    %v1935 = vpack.c.b16 %v1865, %v1863
    %v1936 = vpack.c.b16 %v1868, %v1866
    %v1937 = vpack.c.b16 %v1869, %v1867
    %v1938 = vpack.c.b16 %v1872, %v1870
    %v1939 = vpack.c.b16 %v1873, %v1871
    %v1940 = vpack.c.b16 %v1876, %v1874
    %v1941 = vpack.c.b16 %v1877, %v1875
    %v1942 = vpack.c.b16 %v1880, %v1878
    %v1943 = vpack.c.b16 %v1881, %v1879
    %v1944 = vpack.c.b16 %v1884, %v1882
    %v1945 = vpack.c.b16 %v1885, %v1883
    %v1946 = vpack.c.b16 %v1888, %v1886
    %v1947 = vpack.c.b16 %v1889, %v1887
    %v1948 = vpack.c.b16 %v1892, %v1890
    %v1949 = vpack.c.b16 %v1893, %v1891
    %v1950 = vpack.c.b16 %v1896, %v1894
    %v1951 = vpack.c.b16 %v1897, %v1895
    %v1952 = vpack.c.b16 %v1900, %v1898
    %v1953 = vpack.c.b16 %v1901, %v1899
    %v1954 = vpack.c.b16 %v1904, %v1902
    %v1955 = vpack.c.b16 %v1905, %v1903
    %v1956 = vpack.c.b16 %v1908, %v1906
    %v1957 = vpack.c.b16 %v1909, %v1907
    %2006 = vmatpush.bf16.msra.mxu0 %v1924
    %2007 = vmatpush.bf16.msra.mxu0 %v1922
    %2008 = vmatpush.bf16.msra.mxu0 %v1920
    %2009 = vmatpush.bf16.msra.mxu0 %v1918
    %2010 = vmatpush.bf16.msra.mxu0 %v1916
    %2011 = vmatpush.bf16.msra.mxu0 %v1914
    %2012 = vmatpush.bf16.msra.mxu0 %v1912
    %2013 = vmatpush.bf16.msra.mxu0 %v1910
    %2014 = vmatmul.bf16.gmra.mxu0 %v1758
    %v2015 = vpop.f32.mrf.mxu0
    %v2016 = vadd.f32 %v1762, %v2015
    %v2017 = vpop.f32.mrf.mxu0
    %2018 = vdwg.mxu0
    %2019 = vmatpush.bf16.msra.mxu0 %v1940
    %2020 = vmatpush.bf16.msra.mxu0 %v1938
    %2021 = vmatpush.bf16.msra.mxu0 %v1936
    %2022 = vmatpush.bf16.msra.mxu0 %v1934
    %2023 = vmatpush.bf16.msra.mxu0 %v1932
    %2024 = vmatpush.bf16.msra.mxu0 %v1930
    %2025 = vmatpush.bf16.msra.mxu0 %v1928
    %2026 = vmatpush.bf16.msra.mxu0 %v1926
    %2027 = vmatmul.bf16.gmra.mxu0 %v1759
    %v2028 = vpop.f32.mrf.mxu0
    %v2029 = vadd.f32 %v2016, %v2028
    %v2030 = vpop.f32.mrf.mxu0
    %2031 = vdwg.mxu0
    %2032 = vmatpush.bf16.msra.mxu0 %v1956
    %2033 = vmatpush.bf16.msra.mxu0 %v1954
    %2034 = vmatpush.bf16.msra.mxu0 %v1952
    %2035 = vmatpush.bf16.msra.mxu0 %v1950
    %2036 = vmatpush.bf16.msra.mxu0 %v1948
    %2037 = vmatpush.bf16.msra.mxu0 %v1946
    %2038 = vmatpush.bf16.msra.mxu0 %v1944
    %2039 = vmatpush.bf16.msra.mxu0 %v1942
    %2040 = vmatmul.bf16.gmra.mxu0 %v1760
    %v2041 = vpop.f32.mrf.mxu0
    %v2042 = vadd.f32 %v2029, %v2041
    %v2043 = vpop.f32.mrf.mxu0
    %2044 = vdwg.mxu0
    %2045 = vmatpush.bf16.msra.mxu0 %v1925
    %2046 = vmatpush.bf16.msra.mxu0 %v1923
    %2047 = vmatpush.bf16.msra.mxu0 %v1921
    %2048 = vmatpush.bf16.msra.mxu0 %v1919
    %2049 = vmatpush.bf16.msra.mxu0 %v1917
    %2050 = vmatpush.bf16.msra.mxu0 %v1915
    %2051 = vmatpush.bf16.msra.mxu0 %v1913
    %2052 = vmatpush.bf16.msra.mxu0 %v1911
    %2053 = vmatmul.bf16.gmra.mxu0 %v1758
    %v2054 = vpop.f32.mrf.mxu0
    %v2055 = vadd.f32 %v1763, %v2054
    %v2056 = vpop.f32.mrf.mxu0
    %2057 = vdwg.mxu0
    %2058 = vmatpush.bf16.msra.mxu0 %v1941
    %2059 = vmatpush.bf16.msra.mxu0 %v1939
    %2060 = vmatpush.bf16.msra.mxu0 %v1937
    %2061 = vmatpush.bf16.msra.mxu0 %v1935
    %2062 = vmatpush.bf16.msra.mxu0 %v1933
    %2063 = vmatpush.bf16.msra.mxu0 %v1931
    %2064 = vmatpush.bf16.msra.mxu0 %v1929
    %2065 = vmatpush.bf16.msra.mxu0 %v1927
    %2066 = vmatmul.bf16.gmra.mxu0 %v1759
    %v2067 = vpop.f32.mrf.mxu0
    %v2068 = vadd.f32 %v2055, %v2067
    %v2069 = vpop.f32.mrf.mxu0
    %2070 = vdwg.mxu0
    %2071 = vmatpush.bf16.msra.mxu0 %v1957
    %2072 = vmatpush.bf16.msra.mxu0 %v1955
    %2073 = vmatpush.bf16.msra.mxu0 %v1953
    %2074 = vmatpush.bf16.msra.mxu0 %v1951
    %2075 = vmatpush.bf16.msra.mxu0 %v1949
    %2076 = vmatpush.bf16.msra.mxu0 %v1947
    %2077 = vmatpush.bf16.msra.mxu0 %v1945
    %2078 = vmatpush.bf16.msra.mxu0 %v1943
    %2079 = vmatmul.bf16.gmra.mxu0 %v1760
    %v2080 = vpop.f32.mrf.mxu0
    %v2081 = vadd.f32 %v2068, %v2080
    %v2082 = vpop.f32.mrf.mxu0
    %2083 = vdwg.mxu0
    %v2084 = vmax.f32 %v2042, 0.0
    %v2085 = vmax.f32 %v2081, 0.0
    %v2086 = vld [vmem:[#allocation2 + $0x80] sm:$0xf]
    %v2087 = vld [vmem:[#allocation2 + $0x84] sm:$0xf]
    %v2088 = vld [vmem:[#allocation2 + $0x88] sm:$0xf]
    %v2089 = vld [vmem:[#allocation2 + $0x8c] sm:$0xf]
    %v2090 = vld [vmem:[#allocation2 + $0x90] sm:$0xf]
    %v2091 = vld [vmem:[#allocation2 + $0x94] sm:$0xf]
    %v2092 = vld [vmem:[#allocation2 + $0x98] sm:$0xf]
    %v2093 = vld [vmem:[#allocation2 + $0x9c] sm:$0xf]
    %v2094 = vld [vmem:[#allocation2 + $0xa0] sm:$0xf]
    %v2095 = vld [vmem:[#allocation2 + $0xa4] sm:$0xf]
    %v2096 = vld [vmem:[#allocation2 + $0xa8] sm:$0xf]
    %v2097 = vld [vmem:[#allocation2 + $0xac] sm:$0xf]
    %v2098 = vld [vmem:[#allocation2 + $0xb0] sm:$0xf]
    %v2099 = vld [vmem:[#allocation2 + $0xb4] sm:$0xf]
    %v2100 = vld [vmem:[#allocation2 + $0xb8] sm:$0xf]
    %v2101 = vld [vmem:[#allocation2 + $0xbc] sm:$0xf]
    %v2102 = vld [vmem:[#allocation2 + $0xc0] sm:$0xf]
    %v2103 = vld [vmem:[#allocation2 + $0xc4] sm:$0xf]
    %v2104 = vld [vmem:[#allocation2 + $0xc8] sm:$0xf]
    %v2105 = vld [vmem:[#allocation2 + $0xcc] sm:$0xf]
    %v2106 = vld [vmem:[#allocation2 + $0xd0] sm:$0xf]
    %v2107 = vld [vmem:[#allocation2 + $0xd4] sm:$0xf]
    %v2108 = vld [vmem:[#allocation2 + $0xd8] sm:$0xf]
    %v2109 = vld [vmem:[#allocation2 + $0xdc] sm:$0xf]
    %v2110 = vld [vmem:[#allocation2 + $0xe0] sm:$0xf]
    %v2111 = vld [vmem:[#allocation2 + $0xe4] sm:$0xf]
    %v2112 = vld [vmem:[#allocation2 + $0xe8] sm:$0xf]
    %v2113 = vld [vmem:[#allocation2 + $0xec] sm:$0xf]
    %v2114 = vld [vmem:[#allocation2 + $0xf0] sm:$0xf]
    %v2115 = vld [vmem:[#allocation2 + $0xf4] sm:$0xf]
    %v2116 = vld [vmem:[#allocation2 + $0xf8] sm:$0xf]
    %v2117 = vld [vmem:[#allocation2 + $0xfc] sm:$0xf]
    %v2118 = vld [vmem:[#allocation6 + $0xa] sm:$0x1]
    %v2119 = vpack.c.bf16 %v2084, %v2084
    %v2120 = vpack.c.bf16 %v2085, %v2085
    %v2122 = vperm.slane %v2118, 0
    %v2156 = vunpack.c.l.b16 %v2086
    %v2157 = vunpack.c.l.b16 %v2087
    %v2158 = vunpack.c.l.b16 %v2088
    %v2159 = vunpack.c.l.b16 %v2089
    %v2160 = vunpack.c.l.b16 %v2090
    %v2161 = vunpack.c.l.b16 %v2091
    %v2162 = vunpack.c.l.b16 %v2092
    %v2163 = vunpack.c.l.b16 %v2093
    %v2164 = vunpack.c.l.b16 %v2094
    %v2165 = vunpack.c.l.b16 %v2095
    %v2166 = vunpack.c.l.b16 %v2096
    %v2167 = vunpack.c.l.b16 %v2097
    %v2168 = vunpack.c.l.b16 %v2098
    %v2169 = vunpack.c.l.b16 %v2099
    %v2170 = vunpack.c.l.b16 %v2100
    %v2171 = vunpack.c.l.b16 %v2101
    %v2172 = vunpack.c.l.b16 %v2102
    %v2173 = vunpack.c.l.b16 %v2103
    %v2174 = vunpack.c.l.b16 %v2104
    %v2175 = vunpack.c.l.b16 %v2105
    %v2176 = vunpack.c.l.b16 %v2106
    %v2177 = vunpack.c.l.b16 %v2107
    %v2178 = vunpack.c.l.b16 %v2108
    %v2179 = vunpack.c.l.b16 %v2109
    %v2180 = vunpack.c.l.b16 %v2110
    %v2181 = vunpack.c.l.b16 %v2111
    %v2182 = vunpack.c.l.b16 %v2112
    %v2183 = vunpack.c.l.b16 %v2113
    %v2184 = vunpack.c.l.b16 %v2114
    %v2185 = vunpack.c.l.b16 %v2115
    %v2186 = vunpack.c.l.b16 %v2116
    %v2187 = vunpack.c.l.b16 %v2117
    %v2188 = vpack.c.b16 %v2157, %v2156
    %v2189 = vpack.c.b16 %v2159, %v2158
    %v2190 = vpack.c.b16 %v2161, %v2160
    %v2191 = vpack.c.b16 %v2163, %v2162
    %v2192 = vpack.c.b16 %v2165, %v2164
    %v2193 = vpack.c.b16 %v2167, %v2166
    %v2194 = vpack.c.b16 %v2169, %v2168
    %v2195 = vpack.c.b16 %v2171, %v2170
    %v2196 = vpack.c.b16 %v2173, %v2172
    %v2197 = vpack.c.b16 %v2175, %v2174
    %v2198 = vpack.c.b16 %v2177, %v2176
    %v2199 = vpack.c.b16 %v2179, %v2178
    %v2200 = vpack.c.b16 %v2181, %v2180
    %v2201 = vpack.c.b16 %v2183, %v2182
    %v2202 = vpack.c.b16 %v2185, %v2184
    %v2203 = vpack.c.b16 %v2187, %v2186
    %2220 = vmatpush.bf16.msra.mxu0 %v2195
    %2221 = vmatpush.bf16.msra.mxu0 %v2194
    %2222 = vmatpush.bf16.msra.mxu0 %v2193
    %2223 = vmatpush.bf16.msra.mxu0 %v2192
    %2224 = vmatpush.bf16.msra.mxu0 %v2191
    %2225 = vmatpush.bf16.msra.mxu0 %v2190
    %2226 = vmatpush.bf16.msra.mxu0 %v2189
    %2227 = vmatpush.bf16.msra.mxu0 %v2188
    %2228 = vmatmul.bf16.gmra.mxu0 %v2119
    %v2229 = vpop.f32.mrf.mxu0
    %v2230 = vadd.f32 %v2122, %v2229
    %v2231 = vpop.f32.mrf.mxu0
    %2232 = vdwg.mxu0
    %2233 = vmatpush.bf16.msra.mxu0 %v2203
    %2234 = vmatpush.bf16.msra.mxu0 %v2202
    %2235 = vmatpush.bf16.msra.mxu0 %v2201
    %2236 = vmatpush.bf16.msra.mxu0 %v2200
    %2237 = vmatpush.bf16.msra.mxu0 %v2199
    %2238 = vmatpush.bf16.msra.mxu0 %v2198
    %2239 = vmatpush.bf16.msra.mxu0 %v2197
    %2240 = vmatpush.bf16.msra.mxu0 %v2196
    %2241 = vmatmul.bf16.gmra.mxu0 %v2120
    %v2242 = vpop.f32.mrf.mxu0
    %v2243 = vadd.f32 %v2230, %v2242
    %v2244 = vpop.f32.mrf.mxu0
    %2245 = vdwg.mxu0
    %2246 = vadd.xlane.f32.xlu0 %v2243
    %v2247 = vpop.xlane.xlu0 %2246
    %v2248 = vsub.f32 %v2247, %v2243
    %v2249 = vmul.f32 %v2248, 0.2
    %2251 = vset.pattern.permute.xlu0 5
    %2252 = vperm.xlu0 %2251, %v2243
    %v2253 = vpop.permute.xlu0 %2252
    %v2255 = vadd.f32 %v2243, %v2253
    %2257 = vset.pattern.permute.xlu0 5
    %2258 = vperm.xlu0 %2257, %v2249
    %v2259 = vpop.permute.xlu0 %2258
    %v2261 = vsub.f32 %v2255, %v2259
    %2262 = vst [vmem:[%s7] sm:$0xff] %v2261
    // Predicated region
    $region42: #{qnet_forward.3} parent=1 // pred_check
      _
    $region43: #{qnet_forward.3} parent=1 // pred_check_branch
      %2264 = sbr.rel (0) target = $region45
    $region44: #{qnet_forward.3} parent=1 // pred_region
      _
    $region45: #{qnet_forward.3} parent=1 // pred_fallthru
      _
    // Predicated region
    $region46: #{qnet_forward.3} parent=1 // pred_check
      _
    $region47: #{qnet_forward.3} parent=1 // pred_check_branch
      %2266 = sbr.rel (0) target = $region49
    $region48: #{qnet_forward.3} parent=1 // pred_region
      _
    $region49: #{qnet_forward.3} parent=1 // pred_fallthru
      _
    %2267 = vsyncpa [#allocation3], 1
    %2268 = vsyncpa [#allocation5], 1

// kernel: qnet_forward.2
$region0: #{qnet_forward.2}
  #allocation0 [shape = 'u32[]', space=smem, size = 0x4, offset = 0x4, fixed_abs, tag = 'smem constant byte address 0x4 - core index']
  #allocation1 [shape = 'u32[72,128]{1,0:T(1,128)}', space=vmem, size = 0x9000, scoped, tag = 'internal scratch']
  %s0 = inlined_call_operand.vmem [shape: bf16[8,256], index: 0, kind: input, shape index: {}]
  %s1 = inlined_call_operand.hbm [shape: bf16[1280,128], index: 1, kind: input, shape index: {}]
  %s2 = inlined_call_operand.hbm [shape: bf16[512,384], index: 2, kind: input, shape index: {}]
  %s3 = inlined_call_operand.hbm [shape: bf16[640,512], index: 3, kind: input, shape index: {}]
  %s4 = inlined_call_operand.vmem [shape: f32[1,2304], index: 4, kind: input, shape index: {}]
  %s5 = inlined_call_operand.vmem [shape: bf16[8,384], index: 5, kind: output, shape index: {0}]
  %s6 = inlined_call_operand.vmem [shape: f32[8,128], index: 6, kind: output, shape index: {1}]
  %7 = xla_tuple %s5, %s6
  %s8 = sld [smem:[#allocation0]]
  $region50: #{qnet_forward.2} parent=0
    _
  %s10 = ssub.s32 1, %s8
  %s11 = scalar_select 0, %s10, %s8
  $region1: #{qnet_forward.2} parent=0
    #allocation2 [shape = 'u8[327680]{0}', space=vmem, size = 0x50000, scoped, tag = 'input window, operand 1, single buffered']
    #allocation3 [shape = 's32[1]{0}', space=sflag, size = 0x4, scoped, tag = 'scoped memory for qnet_forward.2']
    #allocation4 [shape = 'u8[393216]{0}', space=vmem, size = 0x60000, scoped, tag = 'input window, operand 2, single buffered']
    #allocation5 [shape = 's32[1]{0}', space=sflag, size = 0x4, scoped, tag = 'scoped memory for qnet_forward.2']
    #allocation6 [shape = 'u8[655360]{0}', space=vmem, size = 0xa0000, scoped, tag = 'input window, operand 3, single buffered']
    %12 = vsyncpa [#allocation3], 0
    %13 = vsyncpa [#allocation5], 0
    // Predicated region
    $region2: #{qnet_forward.2} parent=1 // pred_check
      _
    $region3: #{qnet_forward.2} parent=1 // pred_check_branch
      %15 = sbr.rel (0) target = $region5
    $region4: #{qnet_forward.2} parent=1 // pred_region
      _
    $region5: #{qnet_forward.2} parent=1 // pred_fallthru
      _
    // Predicated region
    $region6: #{qnet_forward.2} parent=1 // pred_check
      _
    $region7: #{qnet_forward.2} parent=1 // pred_check_branch
      %17 = sbr.rel (0) target = $region9
    $region8: #{qnet_forward.2} parent=1 // pred_region
      %19 = vsyncadd [#allocation3], 0
      %s20 = sshll.u32 %s1, 4
      %s21 = int_to_ptr.hbm [resolvable:$true] %s20
      %s22 = sshll.u32 [#allocation2], 4
      %s23 = int_to_ptr.vmem [resolvable:$true] %s22
      %28 = dma.hbm_to_vmem [thread:$0]  %s21, 10240, %s23, [#allocation3], 64, 64, 4
    $region9: #{qnet_forward.2} parent=1 // pred_fallthru
      _
    // Predicated region
    $region10: #{qnet_forward.2} parent=1 // pred_check
      _
    $region11: #{qnet_forward.2} parent=1 // pred_check_branch
      %30 = sbr.rel (0) target = $region13
    $region12: #{qnet_forward.2} parent=1 // pred_region
      %32 = vsyncadd [#allocation5], 0
      %s33 = sshll.u32 %s2, 4
      %s34 = int_to_ptr.hbm [resolvable:$true] %s33
      %s35 = sshll.u32 [#allocation4], 4
      %s36 = int_to_ptr.vmem [resolvable:$true] %s35
      %41 = dma.hbm_to_vmem [thread:$0]  %s34, 12288, %s36, [#allocation5], 192, 192, 12
    $region13: #{qnet_forward.2} parent=1 // pred_fallthru
      _
    // Predicated region
    $region14: #{qnet_forward.2} parent=1 // pred_check
      _
    $region15: #{qnet_forward.2} parent=1 // pred_check_branch
      %43 = sbr.rel (0) target = $region17
    $region16: #{qnet_forward.2} parent=1 // pred_region
      %45 = vsyncadd [#allocation5], 0
      %s46 = sshll.u32 %s3, 4
      %s47 = int_to_ptr.hbm [resolvable:$true] %s46
      %s48 = sshll.u32 [#allocation6], 4
      %s49 = int_to_ptr.vmem [resolvable:$true] %s48
      %54 = dma.hbm_to_vmem [thread:$0]  %s47, 20480, %s49, [#allocation5], 256, 256, 16
    $region17: #{qnet_forward.2} parent=1 // pred_fallthru
      _
    // Predicated region
    $region18: #{qnet_forward.2} parent=1 // pred_check
      _
    $region19: #{qnet_forward.2} parent=1 // pred_check_branch
      %56 = sbr.rel (0) target = $region21
    $region20: #{qnet_forward.2} parent=1 // pred_region
      _
    $region21: #{qnet_forward.2} parent=1 // pred_fallthru
      _
    // Predicated region
    $region22: #{qnet_forward.2} parent=1 // pred_check
      _
    $region23: #{qnet_forward.2} parent=1 // pred_check_branch
      %58 = sbr.rel (0) target = $region25
    $region24: #{qnet_forward.2} parent=1 // pred_region
      %60 = dma.done [#allocation3], 10240
    $region25: #{qnet_forward.2} parent=1 // pred_fallthru
      _
    // Predicated region
    $region26: #{qnet_forward.2} parent=1 // pred_check
      _
    $region27: #{qnet_forward.2} parent=1 // pred_check_branch
      %62 = sbr.rel (0) target = $region29
    $region28: #{qnet_forward.2} parent=1 // pred_region
      %64 = dma.done [#allocation5], 12288
    $region29: #{qnet_forward.2} parent=1 // pred_fallthru
      _
    // Predicated region
    $region30: #{qnet_forward.2} parent=1 // pred_check
      _
    $region31: #{qnet_forward.2} parent=1 // pred_check_branch
      %66 = sbr.rel (0) target = $region33
    $region32: #{qnet_forward.2} parent=1 // pred_region
      %68 = dma.done [#allocation5], 20480
    $region33: #{qnet_forward.2} parent=1 // pred_fallthru
      _
    %v69 = vld [vmem:[%s0] sm:$0xff]
    %v70 = vld [vmem:[#allocation2] sm:$0xf]
    %v71 = vld [vmem:[#allocation2 + $0x4] sm:$0xf]
    %v72 = vld [vmem:[#allocation2 + $0x8] sm:$0xf]
    %v73 = vld [vmem:[#allocation2 + $0xc] sm:$0xf]
    %v74 = vld [vmem:[#allocation2 + $0x10] sm:$0xf]
    %v75 = vld [vmem:[#allocation2 + $0x14] sm:$0xf]
    %v76 = vld [vmem:[#allocation2 + $0x18] sm:$0xf]
    %v77 = vld [vmem:[#allocation2 + $0x1c] sm:$0xf]
    %v78 = vld [vmem:[#allocation2 + $0x20] sm:$0xf]
    %v79 = vld [vmem:[#allocation2 + $0x24] sm:$0xf]
    %v80 = vld [vmem:[#allocation2 + $0x28] sm:$0xf]
    %v81 = vld [vmem:[#allocation2 + $0x2c] sm:$0xf]
    %v82 = vld [vmem:[#allocation2 + $0x30] sm:$0xf]
    %v83 = vld [vmem:[#allocation2 + $0x34] sm:$0xf]
    %v84 = vld [vmem:[#allocation2 + $0x38] sm:$0xf]
    %v85 = vld [vmem:[#allocation2 + $0x3c] sm:$0xf]
    %v86 = vld [vmem:[#allocation2 + $0x40] sm:$0xf]
    %v87 = vld [vmem:[#allocation2 + $0x44] sm:$0xf]
    %v88 = vld [vmem:[#allocation2 + $0x48] sm:$0xf]
    %v89 = vld [vmem:[#allocation2 + $0x4c] sm:$0xf]
    %v90 = vld [vmem:[#allocation2 + $0x50] sm:$0xf]
    %v91 = vld [vmem:[#allocation2 + $0x54] sm:$0xf]
    %v92 = vld [vmem:[#allocation2 + $0x58] sm:$0xf]
    %v93 = vld [vmem:[#allocation2 + $0x5c] sm:$0xf]
    %v94 = vld [vmem:[#allocation2 + $0x60] sm:$0xf]
    %v95 = vld [vmem:[#allocation2 + $0x64] sm:$0xf]
    %v96 = vld [vmem:[#allocation2 + $0x68] sm:$0xf]
    %v97 = vld [vmem:[#allocation2 + $0x6c] sm:$0xf]
    %v98 = vld [vmem:[#allocation2 + $0x70] sm:$0xf]
    %v99 = vld [vmem:[#allocation2 + $0x74] sm:$0xf]
    %v100 = vld [vmem:[#allocation2 + $0x78] sm:$0xf]
    %v101 = vld [vmem:[#allocation2 + $0x7c] sm:$0xf]
    %v102 = vld [vmem:[%s4] sm:$0x1]
    %v104 = vperm.slane %v102, 0
    %v107 = vunpack.c.l.b16 %v69
    %v108 = vunpack.c.h.b16 %v69
    %v109 = vpack.c.b16 %v107, %v107
    %v110 = vpack.c.b16 %v108, %v108
    %v145 = vunpack.c.l.b16 %v70
    %v146 = vunpack.c.l.b16 %v71
    %v147 = vunpack.c.l.b16 %v72
    %v148 = vunpack.c.l.b16 %v73
    %v149 = vunpack.c.l.b16 %v74
    %v150 = vunpack.c.l.b16 %v75
    %v151 = vunpack.c.l.b16 %v76
    %v152 = vunpack.c.l.b16 %v77
    %v153 = vunpack.c.l.b16 %v78
    %v154 = vunpack.c.l.b16 %v79
    %v155 = vunpack.c.l.b16 %v80
    %v156 = vunpack.c.l.b16 %v81
    %v157 = vunpack.c.l.b16 %v82
    %v158 = vunpack.c.l.b16 %v83
    %v159 = vunpack.c.l.b16 %v84
    %v160 = vunpack.c.l.b16 %v85
    %v161 = vunpack.c.l.b16 %v86
    %v162 = vunpack.c.l.b16 %v87
    %v163 = vunpack.c.l.b16 %v88
    %v164 = vunpack.c.l.b16 %v89
    %v165 = vunpack.c.l.b16 %v90
    %v166 = vunpack.c.l.b16 %v91
    %v167 = vunpack.c.l.b16 %v92
    %v168 = vunpack.c.l.b16 %v93
    %v169 = vunpack.c.l.b16 %v94
    %v170 = vunpack.c.l.b16 %v95
    %v171 = vunpack.c.l.b16 %v96
    %v172 = vunpack.c.l.b16 %v97
    %v173 = vunpack.c.l.b16 %v98
    %v174 = vunpack.c.l.b16 %v99
    %v175 = vunpack.c.l.b16 %v100
    %v176 = vunpack.c.l.b16 %v101
    %v177 = vpack.c.b16 %v146, %v145
    %v178 = vpack.c.b16 %v148, %v147
    %v179 = vpack.c.b16 %v150, %v149
    %v180 = vpack.c.b16 %v152, %v151
    %v181 = vpack.c.b16 %v154, %v153
    %v182 = vpack.c.b16 %v156, %v155
    %v183 = vpack.c.b16 %v158, %v157
    %v184 = vpack.c.b16 %v160, %v159
    %v185 = vpack.c.b16 %v162, %v161
    %v186 = vpack.c.b16 %v164, %v163
    %v187 = vpack.c.b16 %v166, %v165
    %v188 = vpack.c.b16 %v168, %v167
    %v189 = vpack.c.b16 %v170, %v169
    %v190 = vpack.c.b16 %v172, %v171
    %v191 = vpack.c.b16 %v174, %v173
    %v192 = vpack.c.b16 %v176, %v175
    %209 = vmatpush.bf16.msra.mxu0 %v184
    %210 = vmatpush.bf16.msra.mxu0 %v183
    %211 = vmatpush.bf16.msra.mxu0 %v182
    %212 = vmatpush.bf16.msra.mxu0 %v181
    %213 = vmatpush.bf16.msra.mxu0 %v180
    %214 = vmatpush.bf16.msra.mxu0 %v179
    %215 = vmatpush.bf16.msra.mxu0 %v178
    %216 = vmatpush.bf16.msra.mxu0 %v177
    %217 = vmatmul.bf16.gmra.mxu0 %v109
    %v218 = vpop.f32.mrf.mxu0
    %v219 = vadd.f32 %v104, %v218
    %v220 = vpop.f32.mrf.mxu0
    %221 = vdwg.mxu0
    %222 = vmatpush.bf16.msra.mxu0 %v192
    %223 = vmatpush.bf16.msra.mxu0 %v191
    %224 = vmatpush.bf16.msra.mxu0 %v190
    %225 = vmatpush.bf16.msra.mxu0 %v189
    %226 = vmatpush.bf16.msra.mxu0 %v188
    %227 = vmatpush.bf16.msra.mxu0 %v187
    %228 = vmatpush.bf16.msra.mxu0 %v186
    %229 = vmatpush.bf16.msra.mxu0 %v185
    %230 = vmatmul.bf16.gmra.mxu0 %v110
    %v231 = vpop.f32.mrf.mxu0
    %v232 = vadd.f32 %v219, %v231
    %v233 = vpop.f32.mrf.mxu0
    %234 = vdwg.mxu0
    %v235 = vmax.f32 %v232, 0.0
    %v236 = vld [vmem:[#allocation2 + $0x80] sm:$0xf]
    %v237 = vld [vmem:[#allocation2 + $0x84] sm:$0xf]
    %v238 = vld [vmem:[#allocation2 + $0x88] sm:$0xf]
    %v239 = vld [vmem:[#allocation2 + $0x8c] sm:$0xf]
    %v240 = vld [vmem:[#allocation2 + $0x90] sm:$0xf]
    %v241 = vld [vmem:[#allocation2 + $0x94] sm:$0xf]
    %v242 = vld [vmem:[#allocation2 + $0x98] sm:$0xf]
    %v243 = vld [vmem:[#allocation2 + $0x9c] sm:$0xf]
    %v244 = vld [vmem:[#allocation2 + $0xa0] sm:$0xf]
    %v245 = vld [vmem:[#allocation2 + $0xa4] sm:$0xf]
    %v246 = vld [vmem:[#allocation2 + $0xa8] sm:$0xf]
    %v247 = vld [vmem:[#allocation2 + $0xac] sm:$0xf]
    %v248 = vld [vmem:[#allocation2 + $0xb0] sm:$0xf]
    %v249 = vld [vmem:[#allocation2 + $0xb4] sm:$0xf]
    %v250 = vld [vmem:[#allocation2 + $0xb8] sm:$0xf]
    %v251 = vld [vmem:[#allocation2 + $0xbc] sm:$0xf]
    %v252 = vld [vmem:[%s4 + $0x1] sm:$0x1]
    %v253 = vpack.c.bf16 %v235, %v235
    %v255 = vperm.slane %v252, 0
    %v273 = vunpack.c.l.b16 %v236
    %v274 = vunpack.c.l.b16 %v237
    %v275 = vunpack.c.l.b16 %v238
    %v276 = vunpack.c.l.b16 %v239
    %v277 = vunpack.c.l.b16 %v240
    %v278 = vunpack.c.l.b16 %v241
    %v279 = vunpack.c.l.b16 %v242
    %v280 = vunpack.c.l.b16 %v243
    %v281 = vunpack.c.l.b16 %v244
    %v282 = vunpack.c.l.b16 %v245
    %v283 = vunpack.c.l.b16 %v246
    %v284 = vunpack.c.l.b16 %v247
    %v285 = vunpack.c.l.b16 %v248
    %v286 = vunpack.c.l.b16 %v249
    %v287 = vunpack.c.l.b16 %v250
    %v288 = vunpack.c.l.b16 %v251
    %v289 = vpack.c.b16 %v274, %v273
    %v290 = vpack.c.b16 %v276, %v275
    %v291 = vpack.c.b16 %v278, %v277
    %v292 = vpack.c.b16 %v280, %v279
    %v293 = vpack.c.b16 %v282, %v281
    %v294 = vpack.c.b16 %v284, %v283
    %v295 = vpack.c.b16 %v286, %v285
    %v296 = vpack.c.b16 %v288, %v287
    %305 = vmatpush.bf16.msra.mxu0 %v296
    %306 = vmatpush.bf16.msra.mxu0 %v295
    %307 = vmatpush.bf16.msra.mxu0 %v294
    %308 = vmatpush.bf16.msra.mxu0 %v293
    %309 = vmatpush.bf16.msra.mxu0 %v292
    %310 = vmatpush.bf16.msra.mxu0 %v291
    %311 = vmatpush.bf16.msra.mxu0 %v290
    %312 = vmatpush.bf16.msra.mxu0 %v289
    %313 = vmatmul.bf16.gmra.mxu0 %v253
    %v314 = vpop.f32.mrf.mxu0
    %v315 = vadd.f32 %v255, %v314
    %v316 = vpop.f32.mrf.mxu0
    %317 = vdwg.mxu0
    %v318 = vmax.f32 %v315, 0.0
    %v319 = vld [vmem:[#allocation2 + $0xc0] sm:$0xf]
    %v320 = vld [vmem:[#allocation2 + $0xc4] sm:$0xf]
    %v321 = vld [vmem:[#allocation2 + $0xc8] sm:$0xf]
    %v322 = vld [vmem:[#allocation2 + $0xcc] sm:$0xf]
    %v323 = vld [vmem:[#allocation2 + $0xd0] sm:$0xf]
    %v324 = vld [vmem:[#allocation2 + $0xd4] sm:$0xf]
    %v325 = vld [vmem:[#allocation2 + $0xd8] sm:$0xf]
    %v326 = vld [vmem:[#allocation2 + $0xdc] sm:$0xf]
    %v327 = vld [vmem:[#allocation2 + $0xe0] sm:$0xf]
    %v328 = vld [vmem:[#allocation2 + $0xe4] sm:$0xf]
    %v329 = vld [vmem:[#allocation2 + $0xe8] sm:$0xf]
    %v330 = vld [vmem:[#allocation2 + $0xec] sm:$0xf]
    %v331 = vld [vmem:[#allocation2 + $0xf0] sm:$0xf]
    %v332 = vld [vmem:[#allocation2 + $0xf4] sm:$0xf]
    %v333 = vld [vmem:[#allocation2 + $0xf8] sm:$0xf]
    %v334 = vld [vmem:[#allocation2 + $0xfc] sm:$0xf]
    %v335 = vld [vmem:[%s4 + $0x2] sm:$0x1]
    %v336 = vpack.c.bf16 %v318, %v318
    %v338 = vperm.slane %v335, 0
    %v356 = vunpack.c.l.b16 %v319
    %v357 = vunpack.c.l.b16 %v320
    %v358 = vunpack.c.l.b16 %v321
    %v359 = vunpack.c.l.b16 %v322
    %v360 = vunpack.c.l.b16 %v323
    %v361 = vunpack.c.l.b16 %v324
    %v362 = vunpack.c.l.b16 %v325
    %v363 = vunpack.c.l.b16 %v326
    %v364 = vunpack.c.l.b16 %v327
    %v365 = vunpack.c.l.b16 %v328
    %v366 = vunpack.c.l.b16 %v329
    %v367 = vunpack.c.l.b16 %v330
    %v368 = vunpack.c.l.b16 %v331
    %v369 = vunpack.c.l.b16 %v332
    %v370 = vunpack.c.l.b16 %v333
    %v371 = vunpack.c.l.b16 %v334
    %v372 = vpack.c.b16 %v357, %v356
    %v373 = vpack.c.b16 %v359, %v358
    %v374 = vpack.c.b16 %v361, %v360
    %v375 = vpack.c.b16 %v363, %v362
    %v376 = vpack.c.b16 %v365, %v364
    %v377 = vpack.c.b16 %v367, %v366
    %v378 = vpack.c.b16 %v369, %v368
    %v379 = vpack.c.b16 %v371, %v370
    %388 = vmatpush.bf16.msra.mxu0 %v379
    %389 = vmatpush.bf16.msra.mxu0 %v378
    %390 = vmatpush.bf16.msra.mxu0 %v377
    %391 = vmatpush.bf16.msra.mxu0 %v376
    %392 = vmatpush.bf16.msra.mxu0 %v375
    %393 = vmatpush.bf16.msra.mxu0 %v374
    %394 = vmatpush.bf16.msra.mxu0 %v373
    %395 = vmatpush.bf16.msra.mxu0 %v372
    %396 = vmatmul.bf16.gmra.mxu0 %v336
    %v397 = vpop.f32.mrf.mxu0
    %v398 = vadd.f32 %v338, %v397
    %v399 = vpop.f32.mrf.mxu0
    %400 = vdwg.mxu0
    %v401 = vmax.f32 %v398, 0.0
    %v402 = vld [vmem:[#allocation6] sm:$0xff]
    %v403 = vld [vmem:[#allocation6 + $0x8] sm:$0xff]
    %v404 = vld [vmem:[#allocation6 + $0x10] sm:$0xff]
    %v405 = vld [vmem:[#allocation6 + $0x18] sm:$0xff]
    %v406 = vld [vmem:[#allocation6 + $0x20] sm:$0xff]
    %v407 = vld [vmem:[#allocation6 + $0x28] sm:$0xff]
    %v408 = vld [vmem:[#allocation6 + $0x30] sm:$0xff]
    %v409 = vld [vmem:[#allocation6 + $0x38] sm:$0xff]
    %v410 = vld [vmem:[#allocation6 + $0x40] sm:$0xff]
    %v411 = vld [vmem:[#allocation6 + $0x48] sm:$0xff]
    %v412 = vld [vmem:[#allocation6 + $0x50] sm:$0xff]
    %v413 = vld [vmem:[#allocation6 + $0x58] sm:$0xff]
    %v414 = vld [vmem:[#allocation6 + $0x60] sm:$0xff]
    %v415 = vld [vmem:[#allocation6 + $0x68] sm:$0xff]
    %v416 = vld [vmem:[#allocation6 + $0x70] sm:$0xff]
    %v417 = vld [vmem:[#allocation6 + $0x78] sm:$0xff]
    %v418 = vld [vmem:[#allocation6 + $0x80] sm:$0xff]
    %v419 = vld [vmem:[#allocation6 + $0x88] sm:$0xff]
    %v420 = vld [vmem:[#allocation6 + $0x90] sm:$0xff]
    %v421 = vld [vmem:[#allocation6 + $0x98] sm:$0xff]
    %v422 = vld [vmem:[#allocation6 + $0xa0] sm:$0xff]
    %v423 = vld [vmem:[#allocation6 + $0xa8] sm:$0xff]
    %v424 = vld [vmem:[#allocation6 + $0xb0] sm:$0xff]
    %v425 = vld [vmem:[#allocation6 + $0xb8] sm:$0xff]
    %v426 = vld [vmem:[#allocation6 + $0xc0] sm:$0xff]
    %v427 = vld [vmem:[#allocation6 + $0xc8] sm:$0xff]
    %v428 = vld [vmem:[#allocation6 + $0xd0] sm:$0xff]
    %v429 = vld [vmem:[#allocation6 + $0xd8] sm:$0xff]
    %v430 = vld [vmem:[#allocation6 + $0xe0] sm:$0xff]
    %v431 = vld [vmem:[#allocation6 + $0xe8] sm:$0xff]
    %v432 = vld [vmem:[#allocation6 + $0xf0] sm:$0xff]
    %v433 = vld [vmem:[#allocation6 + $0xf8] sm:$0xff]
    %v434 = vld [vmem:[%s4 + $0x3] sm:$0xf]
    %v435 = vpack.c.bf16 %v401, %v401
    %v437 = vperm.slane %v434, 0
    %v438 = vperm.slane %v434, 1
    %v439 = vperm.slane %v434, 2
    %v440 = vperm.slane %v434, 3
    %v477 = vunpack.c.l.b16 %v402
    %v478 = vunpack.c.h.b16 %v402
    %v479 = vunpack.c.l.b16 %v403
    %v480 = vunpack.c.h.b16 %v403
    %v481 = vunpack.c.l.b16 %v404
    %v482 = vunpack.c.h.b16 %v404
    %v483 = vunpack.c.l.b16 %v405
    %v484 = vunpack.c.h.b16 %v405
    %v485 = vunpack.c.l.b16 %v406
    %v486 = vunpack.c.h.b16 %v406
    %v487 = vunpack.c.l.b16 %v407
    %v488 = vunpack.c.h.b16 %v407
    %v489 = vunpack.c.l.b16 %v408
    %v490 = vunpack.c.h.b16 %v408
    %v491 = vunpack.c.l.b16 %v409
    %v492 = vunpack.c.h.b16 %v409
    %v493 = vunpack.c.l.b16 %v410
    %v494 = vunpack.c.h.b16 %v410
    %v495 = vunpack.c.l.b16 %v411
    %v496 = vunpack.c.h.b16 %v411
    %v497 = vunpack.c.l.b16 %v412
    %v498 = vunpack.c.h.b16 %v412
    %v499 = vunpack.c.l.b16 %v413
    %v500 = vunpack.c.h.b16 %v413
    %v501 = vunpack.c.l.b16 %v414
    %v502 = vunpack.c.h.b16 %v414
    %v503 = vunpack.c.l.b16 %v415
    %v504 = vunpack.c.h.b16 %v415
    %v505 = vunpack.c.l.b16 %v416
    %v506 = vunpack.c.h.b16 %v416
    %v507 = vunpack.c.l.b16 %v417
    %v508 = vunpack.c.h.b16 %v417
    %v509 = vunpack.c.l.b16 %v418
    %v510 = vunpack.c.h.b16 %v418
    %v511 = vunpack.c.l.b16 %v419
    %v512 = vunpack.c.h.b16 %v419
    %v513 = vunpack.c.l.b16 %v420
    %v514 = vunpack.c.h.b16 %v420
    %v515 = vunpack.c.l.b16 %v421
    %v516 = vunpack.c.h.b16 %v421
    %v517 = vunpack.c.l.b16 %v422
    %v518 = vunpack.c.h.b16 %v422
    %v519 = vunpack.c.l.b16 %v423
    %v520 = vunpack.c.h.b16 %v423
    %v521 = vunpack.c.l.b16 %v424
    %v522 = vunpack.c.h.b16 %v424
    %v523 = vunpack.c.l.b16 %v425
    %v524 = vunpack.c.h.b16 %v425
    %v525 = vunpack.c.l.b16 %v426
    %v526 = vunpack.c.h.b16 %v426
    %v527 = vunpack.c.l.b16 %v427
    %v528 = vunpack.c.h.b16 %v427
    %v529 = vunpack.c.l.b16 %v428
    %v530 = vunpack.c.h.b16 %v428
    %v531 = vunpack.c.l.b16 %v429
    %v532 = vunpack.c.h.b16 %v429
    %v533 = vunpack.c.l.b16 %v430
    %v534 = vunpack.c.h.b16 %v430
    %v535 = vunpack.c.l.b16 %v431
    %v536 = vunpack.c.h.b16 %v431
    %v537 = vunpack.c.l.b16 %v432
    %v538 = vunpack.c.h.b16 %v432
    %v539 = vunpack.c.l.b16 %v433
    %v540 = vunpack.c.h.b16 %v433
    %v541 = vpack.c.b16 %v481, %v477
    %v542 = vpack.c.b16 %v482, %v478
    %v543 = vpack.c.b16 %v483, %v479
    %v544 = vpack.c.b16 %v484, %v480
    %v545 = vpack.c.b16 %v489, %v485
    %v546 = vpack.c.b16 %v490, %v486
    %v547 = vpack.c.b16 %v491, %v487
    %v548 = vpack.c.b16 %v492, %v488
    %v549 = vpack.c.b16 %v497, %v493
    %v550 = vpack.c.b16 %v498, %v494
    %v551 = vpack.c.b16 %v499, %v495
    %v552 = vpack.c.b16 %v500, %v496
    %v553 = vpack.c.b16 %v505, %v501
    %v554 = vpack.c.b16 %v506, %v502
    %v555 = vpack.c.b16 %v507, %v503
    %v556 = vpack.c.b16 %v508, %v504
    %v557 = vpack.c.b16 %v513, %v509
    %v558 = vpack.c.b16 %v514, %v510
    %v559 = vpack.c.b16 %v515, %v511
    %v560 = vpack.c.b16 %v516, %v512
    %v561 = vpack.c.b16 %v521, %v517
    %v562 = vpack.c.b16 %v522, %v518
    %v563 = vpack.c.b16 %v523, %v519
    %v564 = vpack.c.b16 %v524, %v520
    %v565 = vpack.c.b16 %v529, %v525
    %v566 = vpack.c.b16 %v530, %v526
    %v567 = vpack.c.b16 %v531, %v527
    %v568 = vpack.c.b16 %v532, %v528
    %v569 = vpack.c.b16 %v537, %v533
    %v570 = vpack.c.b16 %v538, %v534
    %v571 = vpack.c.b16 %v539, %v535
    %v572 = vpack.c.b16 %v540, %v536
    %605 = vmatpush.bf16.msra.mxu0 %v569
    %606 = vmatpush.bf16.msra.mxu0 %v565
    %607 = vmatpush.bf16.msra.mxu0 %v561
    %608 = vmatpush.bf16.msra.mxu0 %v557
    %609 = vmatpush.bf16.msra.mxu0 %v553
    %610 = vmatpush.bf16.msra.mxu0 %v549
    %611 = vmatpush.bf16.msra.mxu0 %v545
    %612 = vmatpush.bf16.msra.mxu0 %v541
    %613 = vmatmul.bf16.gmra.mxu0 %v435
    %v614 = vpop.f32.mrf.mxu0
    %v615 = vadd.f32 %v437, %v614
    %v616 = vpop.f32.mrf.mxu0
    %617 = vdwg.mxu0
    %618 = vmatpush.bf16.msra.mxu0 %v570
    %619 = vmatpush.bf16.msra.mxu0 %v566
    %620 = vmatpush.bf16.msra.mxu0 %v562
    %621 = vmatpush.bf16.msra.mxu0 %v558
    %622 = vmatpush.bf16.msra.mxu0 %v554
    %623 = vmatpush.bf16.msra.mxu0 %v550
    %624 = vmatpush.bf16.msra.mxu0 %v546
    %625 = vmatpush.bf16.msra.mxu0 %v542
    %626 = vmatmul.bf16.gmra.mxu0 %v435
    %v627 = vpop.f32.mrf.mxu0
    %v628 = vadd.f32 %v438, %v627
    %v629 = vpop.f32.mrf.mxu0
    %630 = vdwg.mxu0
    %631 = vmatpush.bf16.msra.mxu0 %v571
    %632 = vmatpush.bf16.msra.mxu0 %v567
    %633 = vmatpush.bf16.msra.mxu0 %v563
    %634 = vmatpush.bf16.msra.mxu0 %v559
    %635 = vmatpush.bf16.msra.mxu0 %v555
    %636 = vmatpush.bf16.msra.mxu0 %v551
    %637 = vmatpush.bf16.msra.mxu0 %v547
    %638 = vmatpush.bf16.msra.mxu0 %v543
    %639 = vmatmul.bf16.gmra.mxu0 %v435
    %v640 = vpop.f32.mrf.mxu0
    %v641 = vadd.f32 %v439, %v640
    %v642 = vpop.f32.mrf.mxu0
    %643 = vdwg.mxu0
    %644 = vmatpush.bf16.msra.mxu0 %v572
    %645 = vmatpush.bf16.msra.mxu0 %v568
    %646 = vmatpush.bf16.msra.mxu0 %v564
    %647 = vmatpush.bf16.msra.mxu0 %v560
    %648 = vmatpush.bf16.msra.mxu0 %v556
    %649 = vmatpush.bf16.msra.mxu0 %v552
    %650 = vmatpush.bf16.msra.mxu0 %v548
    %651 = vmatpush.bf16.msra.mxu0 %v544
    %652 = vmatmul.bf16.gmra.mxu0 %v435
    %v653 = vpop.f32.mrf.mxu0
    %v654 = vadd.f32 %v440, %v653
    %v655 = vpop.f32.mrf.mxu0
    %656 = vdwg.mxu0
    %v657 = vmax.f32 %v615, 0.0
    %v658 = vmax.f32 %v628, 0.0
    %v659 = vmax.f32 %v641, 0.0
    %v660 = vmax.f32 %v654, 0.0
    %v661 = vld [vmem:[#allocation6 + $0x100] sm:$0xff]
    %v662 = vld [vmem:[#allocation6 + $0x108] sm:$0xff]
    %v663 = vld [vmem:[#allocation6 + $0x110] sm:$0xff]
    %v664 = vld [vmem:[#allocation6 + $0x118] sm:$0xff]
    %v665 = vld [vmem:[#allocation6 + $0x120] sm:$0xff]
    %v666 = vld [vmem:[#allocation6 + $0x128] sm:$0xff]
    %v667 = vld [vmem:[#allocation6 + $0x130] sm:$0xff]
    %v668 = vld [vmem:[#allocation6 + $0x138] sm:$0xff]
    %v669 = vld [vmem:[#allocation6 + $0x140] sm:$0xff]
    %v670 = vld [vmem:[#allocation6 + $0x148] sm:$0xff]
    %v671 = vld [vmem:[#allocation6 + $0x150] sm:$0xff]
    %v672 = vld [vmem:[#allocation6 + $0x158] sm:$0xff]
    %v673 = vld [vmem:[#allocation6 + $0x160] sm:$0xff]
    %v674 = vld [vmem:[#allocation6 + $0x168] sm:$0xff]
    %v675 = vld [vmem:[#allocation6 + $0x170] sm:$0xff]
    %v676 = vld [vmem:[#allocation6 + $0x178] sm:$0xff]
    %v677 = vld [vmem:[#allocation6 + $0x180] sm:$0xff]
    %v678 = vld [vmem:[#allocation6 + $0x188] sm:$0xff]
    %v679 = vld [vmem:[#allocation6 + $0x190] sm:$0xff]
    %v680 = vld [vmem:[#allocation6 + $0x198] sm:$0xff]
    %v681 = vld [vmem:[#allocation6 + $0x1a0] sm:$0xff]
    %v682 = vld [vmem:[#allocation6 + $0x1a8] sm:$0xff]
    %v683 = vld [vmem:[#allocation6 + $0x1b0] sm:$0xff]
    %v684 = vld [vmem:[#allocation6 + $0x1b8] sm:$0xff]
    %v685 = vld [vmem:[#allocation6 + $0x1c0] sm:$0xff]
    %v686 = vld [vmem:[#allocation6 + $0x1c8] sm:$0xff]
    %v687 = vld [vmem:[#allocation6 + $0x1d0] sm:$0xff]
    %v688 = vld [vmem:[#allocation6 + $0x1d8] sm:$0xff]
    %v689 = vld [vmem:[#allocation6 + $0x1e0] sm:$0xff]
    %v690 = vld [vmem:[#allocation6 + $0x1e8] sm:$0xff]
    %v691 = vld [vmem:[#allocation6 + $0x1f0] sm:$0xff]
    %v692 = vld [vmem:[#allocation6 + $0x1f8] sm:$0xff]
    %v693 = vld [vmem:[#allocation6 + $0x200] sm:$0xff]
    %v694 = vld [vmem:[#allocation6 + $0x208] sm:$0xff]
    %v695 = vld [vmem:[#allocation6 + $0x210] sm:$0xff]
    %v696 = vld [vmem:[#allocation6 + $0x218] sm:$0xff]
    %v697 = vld [vmem:[#allocation6 + $0x220] sm:$0xff]
    %v698 = vld [vmem:[#allocation6 + $0x228] sm:$0xff]
    %v699 = vld [vmem:[#allocation6 + $0x230] sm:$0xff]
    %v700 = vld [vmem:[#allocation6 + $0x238] sm:$0xff]
    %v701 = vld [vmem:[#allocation6 + $0x240] sm:$0xff]
    %v702 = vld [vmem:[#allocation6 + $0x248] sm:$0xff]
    %v703 = vld [vmem:[#allocation6 + $0x250] sm:$0xff]
    %v704 = vld [vmem:[#allocation6 + $0x258] sm:$0xff]
    %v705 = vld [vmem:[#allocation6 + $0x260] sm:$0xff]
    %v706 = vld [vmem:[#allocation6 + $0x268] sm:$0xff]
    %v707 = vld [vmem:[#allocation6 + $0x270] sm:$0xff]
    %v708 = vld [vmem:[#allocation6 + $0x278] sm:$0xff]
    %v709 = vld [vmem:[#allocation6 + $0x280] sm:$0xff]
    %v710 = vld [vmem:[#allocation6 + $0x288] sm:$0xff]
    %v711 = vld [vmem:[#allocation6 + $0x290] sm:$0xff]
    %v712 = vld [vmem:[#allocation6 + $0x298] sm:$0xff]
    %v713 = vld [vmem:[#allocation6 + $0x2a0] sm:$0xff]
    %v714 = vld [vmem:[#allocation6 + $0x2a8] sm:$0xff]
    %v715 = vld [vmem:[#allocation6 + $0x2b0] sm:$0xff]
    %v716 = vld [vmem:[#allocation6 + $0x2b8] sm:$0xff]
    %v717 = vld [vmem:[#allocation6 + $0x2c0] sm:$0xff]
    %v718 = vld [vmem:[#allocation6 + $0x2c8] sm:$0xff]
    %v719 = vld [vmem:[#allocation6 + $0x2d0] sm:$0xff]
    %v720 = vld [vmem:[#allocation6 + $0x2d8] sm:$0xff]
    %v721 = vld [vmem:[#allocation6 + $0x2e0] sm:$0xff]
    %v722 = vld [vmem:[#allocation6 + $0x2e8] sm:$0xff]
    %v723 = vld [vmem:[#allocation6 + $0x2f0] sm:$0xff]
    %v724 = vld [vmem:[#allocation6 + $0x2f8] sm:$0xff]
    %v725 = vld [vmem:[#allocation6 + $0x300] sm:$0xff]
    %v726 = vld [vmem:[#allocation6 + $0x308] sm:$0xff]
    %v727 = vld [vmem:[#allocation6 + $0x310] sm:$0xff]
    %v728 = vld [vmem:[#allocation6 + $0x318] sm:$0xff]
    %v729 = vld [vmem:[#allocation6 + $0x320] sm:$0xff]
    %v730 = vld [vmem:[#allocation6 + $0x328] sm:$0xff]
    %v731 = vld [vmem:[#allocation6 + $0x330] sm:$0xff]
    %v732 = vld [vmem:[#allocation6 + $0x338] sm:$0xff]
    %v733 = vld [vmem:[#allocation6 + $0x340] sm:$0xff]
    %v734 = vld [vmem:[#allocation6 + $0x348] sm:$0xff]
    %v735 = vld [vmem:[#allocation6 + $0x350] sm:$0xff]
    %v736 = vld [vmem:[#allocation6 + $0x358] sm:$0xff]
    %v737 = vld [vmem:[#allocation6 + $0x360] sm:$0xff]
    %v738 = vld [vmem:[#allocation6 + $0x368] sm:$0xff]
    %v739 = vld [vmem:[#allocation6 + $0x370] sm:$0xff]
    %v740 = vld [vmem:[#allocation6 + $0x378] sm:$0xff]
    %v741 = vld [vmem:[#allocation6 + $0x380] sm:$0xff]
    %v742 = vld [vmem:[#allocation6 + $0x388] sm:$0xff]
    %v743 = vld [vmem:[#allocation6 + $0x390] sm:$0xff]
    %v744 = vld [vmem:[#allocation6 + $0x398] sm:$0xff]
    %v745 = vld [vmem:[#allocation6 + $0x3a0] sm:$0xff]
    %v746 = vld [vmem:[#allocation6 + $0x3a8] sm:$0xff]
    %v747 = vld [vmem:[#allocation6 + $0x3b0] sm:$0xff]
    %v748 = vld [vmem:[#allocation6 + $0x3b8] sm:$0xff]
    %v749 = vld [vmem:[#allocation6 + $0x3c0] sm:$0xff]
    %v750 = vld [vmem:[#allocation6 + $0x3c8] sm:$0xff]
    %v751 = vld [vmem:[#allocation6 + $0x3d0] sm:$0xff]
    %v752 = vld [vmem:[#allocation6 + $0x3d8] sm:$0xff]
    %v753 = vld [vmem:[#allocation6 + $0x3e0] sm:$0xff]
    %v754 = vld [vmem:[#allocation6 + $0x3e8] sm:$0xff]
    %v755 = vld [vmem:[#allocation6 + $0x3f0] sm:$0xff]
    %v756 = vld [vmem:[#allocation6 + $0x3f8] sm:$0xff]
    %v757 = vld [vmem:[#allocation6 + $0x400] sm:$0xff]
    %v758 = vld [vmem:[#allocation6 + $0x408] sm:$0xff]
    %v759 = vld [vmem:[#allocation6 + $0x410] sm:$0xff]
    %v760 = vld [vmem:[#allocation6 + $0x418] sm:$0xff]
    %v761 = vld [vmem:[#allocation6 + $0x420] sm:$0xff]
    %v762 = vld [vmem:[#allocation6 + $0x428] sm:$0xff]
    %v763 = vld [vmem:[#allocation6 + $0x430] sm:$0xff]
    %v764 = vld [vmem:[#allocation6 + $0x438] sm:$0xff]
    %v765 = vld [vmem:[#allocation6 + $0x440] sm:$0xff]
    %v766 = vld [vmem:[#allocation6 + $0x448] sm:$0xff]
    %v767 = vld [vmem:[#allocation6 + $0x450] sm:$0xff]
    %v768 = vld [vmem:[#allocation6 + $0x458] sm:$0xff]
    %v769 = vld [vmem:[#allocation6 + $0x460] sm:$0xff]
    %v770 = vld [vmem:[#allocation6 + $0x468] sm:$0xff]
    %v771 = vld [vmem:[#allocation6 + $0x470] sm:$0xff]
    %v772 = vld [vmem:[#allocation6 + $0x478] sm:$0xff]
    %v773 = vld [vmem:[#allocation6 + $0x480] sm:$0xff]
    %v774 = vld [vmem:[#allocation6 + $0x488] sm:$0xff]
    %v775 = vld [vmem:[#allocation6 + $0x490] sm:$0xff]
    %v776 = vld [vmem:[#allocation6 + $0x498] sm:$0xff]
    %v777 = vld [vmem:[#allocation6 + $0x4a0] sm:$0xff]
    %v778 = vld [vmem:[#allocation6 + $0x4a8] sm:$0xff]
    %v779 = vld [vmem:[#allocation6 + $0x4b0] sm:$0xff]
    %v780 = vld [vmem:[#allocation6 + $0x4b8] sm:$0xff]
    %v781 = vld [vmem:[#allocation6 + $0x4c0] sm:$0xff]
    %v782 = vld [vmem:[#allocation6 + $0x4c8] sm:$0xff]
    %v783 = vld [vmem:[#allocation6 + $0x4d0] sm:$0xff]
    %v784 = vld [vmem:[#allocation6 + $0x4d8] sm:$0xff]
    %v785 = vld [vmem:[#allocation6 + $0x4e0] sm:$0xff]
    %v786 = vld [vmem:[#allocation6 + $0x4e8] sm:$0xff]
    %v787 = vld [vmem:[#allocation6 + $0x4f0] sm:$0xff]
    %v788 = vld [vmem:[#allocation6 + $0x4f8] sm:$0xff]
    %v789 = vld [vmem:[%s4 + $0x7] sm:$0xf]
    %v790 = vpack.c.bf16 %v657, %v657
    %v791 = vpack.c.bf16 %v658, %v658
    %v792 = vpack.c.bf16 %v659, %v659
    %v793 = vpack.c.bf16 %v660, %v660
    %v795 = vperm.slane %v789, 0
    %v796 = vperm.slane %v789, 1
    %v797 = vperm.slane %v789, 2
    %v798 = vperm.slane %v789, 3
    %v931 = vunpack.c.l.b16 %v661
    %v932 = vunpack.c.h.b16 %v661
    %v933 = vunpack.c.l.b16 %v662
    %v934 = vunpack.c.h.b16 %v662
    %v935 = vunpack.c.l.b16 %v663
    %v936 = vunpack.c.h.b16 %v663
    %v937 = vunpack.c.l.b16 %v664
    %v938 = vunpack.c.h.b16 %v664
    %v939 = vunpack.c.l.b16 %v665
    %v940 = vunpack.c.h.b16 %v665
    %v941 = vunpack.c.l.b16 %v666
    %v942 = vunpack.c.h.b16 %v666
    %v943 = vunpack.c.l.b16 %v667
    %v944 = vunpack.c.h.b16 %v667
    %v945 = vunpack.c.l.b16 %v668
    %v946 = vunpack.c.h.b16 %v668
    %v947 = vunpack.c.l.b16 %v669
    %v948 = vunpack.c.h.b16 %v669
    %v949 = vunpack.c.l.b16 %v670
    %v950 = vunpack.c.h.b16 %v670
    %v951 = vunpack.c.l.b16 %v671
    %v952 = vunpack.c.h.b16 %v671
    %v953 = vunpack.c.l.b16 %v672
    %v954 = vunpack.c.h.b16 %v672
    %v955 = vunpack.c.l.b16 %v673
    %v956 = vunpack.c.h.b16 %v673
    %v957 = vunpack.c.l.b16 %v674
    %v958 = vunpack.c.h.b16 %v674
    %v959 = vunpack.c.l.b16 %v675
    %v960 = vunpack.c.h.b16 %v675
    %v961 = vunpack.c.l.b16 %v676
    %v962 = vunpack.c.h.b16 %v676
    %v963 = vunpack.c.l.b16 %v677
    %v964 = vunpack.c.h.b16 %v677
    %v965 = vunpack.c.l.b16 %v678
    %v966 = vunpack.c.h.b16 %v678
    %v967 = vunpack.c.l.b16 %v679
    %v968 = vunpack.c.h.b16 %v679
    %v969 = vunpack.c.l.b16 %v680
    %v970 = vunpack.c.h.b16 %v680
    %v971 = vunpack.c.l.b16 %v681
    %v972 = vunpack.c.h.b16 %v681
    %v973 = vunpack.c.l.b16 %v682
    %v974 = vunpack.c.h.b16 %v682
    %v975 = vunpack.c.l.b16 %v683
    %v976 = vunpack.c.h.b16 %v683
    %v977 = vunpack.c.l.b16 %v684
    %v978 = vunpack.c.h.b16 %v684
    %v979 = vunpack.c.l.b16 %v685
    %v980 = vunpack.c.h.b16 %v685
    %v981 = vunpack.c.l.b16 %v686
    %v982 = vunpack.c.h.b16 %v686
    %v983 = vunpack.c.l.b16 %v687
    %v984 = vunpack.c.h.b16 %v687
    %v985 = vunpack.c.l.b16 %v688
    %v986 = vunpack.c.h.b16 %v688
    %v987 = vunpack.c.l.b16 %v689
    %v988 = vunpack.c.h.b16 %v689
    %v989 = vunpack.c.l.b16 %v690
    %v990 = vunpack.c.h.b16 %v690
    %v991 = vunpack.c.l.b16 %v691
    %v992 = vunpack.c.h.b16 %v691
    %v993 = vunpack.c.l.b16 %v692
    %v994 = vunpack.c.h.b16 %v692
    %v995 = vunpack.c.l.b16 %v693
    %v996 = vunpack.c.h.b16 %v693
    %v997 = vunpack.c.l.b16 %v694
    %v998 = vunpack.c.h.b16 %v694
    %v999 = vunpack.c.l.b16 %v695
    %v1000 = vunpack.c.h.b16 %v695
    %v1001 = vunpack.c.l.b16 %v696
    %v1002 = vunpack.c.h.b16 %v696
    %v1003 = vunpack.c.l.b16 %v697
    %v1004 = vunpack.c.h.b16 %v697
    %v1005 = vunpack.c.l.b16 %v698
    %v1006 = vunpack.c.h.b16 %v698
    %v1007 = vunpack.c.l.b16 %v699
    %v1008 = vunpack.c.h.b16 %v699
    %v1009 = vunpack.c.l.b16 %v700
    %v1010 = vunpack.c.h.b16 %v700
    %v1011 = vunpack.c.l.b16 %v701
    %v1012 = vunpack.c.h.b16 %v701
    %v1013 = vunpack.c.l.b16 %v702
    %v1014 = vunpack.c.h.b16 %v702
    %v1015 = vunpack.c.l.b16 %v703
    %v1016 = vunpack.c.h.b16 %v703
    %v1017 = vunpack.c.l.b16 %v704
    %v1018 = vunpack.c.h.b16 %v704
    %v1019 = vunpack.c.l.b16 %v705
    %v1020 = vunpack.c.h.b16 %v705
    %v1021 = vunpack.c.l.b16 %v706
    %v1022 = vunpack.c.h.b16 %v706
    %v1023 = vunpack.c.l.b16 %v707
    %v1024 = vunpack.c.h.b16 %v707
    %v1025 = vunpack.c.l.b16 %v708
    %v1026 = vunpack.c.h.b16 %v708
    %v1027 = vunpack.c.l.b16 %v709
    %v1028 = vunpack.c.h.b16 %v709
    %v1029 = vunpack.c.l.b16 %v710
    %v1030 = vunpack.c.h.b16 %v710
    %v1031 = vunpack.c.l.b16 %v711
    %v1032 = vunpack.c.h.b16 %v711
    %v1033 = vunpack.c.l.b16 %v712
    %v1034 = vunpack.c.h.b16 %v712
    %v1035 = vunpack.c.l.b16 %v713
    %v1036 = vunpack.c.h.b16 %v713
    %v1037 = vunpack.c.l.b16 %v714
    %v1038 = vunpack.c.h.b16 %v714
    %v1039 = vunpack.c.l.b16 %v715
    %v1040 = vunpack.c.h.b16 %v715
    %v1041 = vunpack.c.l.b16 %v716
    %v1042 = vunpack.c.h.b16 %v716
    %v1043 = vunpack.c.l.b16 %v717
    %v1044 = vunpack.c.h.b16 %v717
    %v1045 = vunpack.c.l.b16 %v718
    %v1046 = vunpack.c.h.b16 %v718
    %v1047 = vunpack.c.l.b16 %v719
    %v1048 = vunpack.c.h.b16 %v719
    %v1049 = vunpack.c.l.b16 %v720
    %v1050 = vunpack.c.h.b16 %v720
    %v1051 = vunpack.c.l.b16 %v721
    %v1052 = vunpack.c.h.b16 %v721
    %v1053 = vunpack.c.l.b16 %v722
    %v1054 = vunpack.c.h.b16 %v722
    %v1055 = vunpack.c.l.b16 %v723
    %v1056 = vunpack.c.h.b16 %v723
    %v1057 = vunpack.c.l.b16 %v724
    %v1058 = vunpack.c.h.b16 %v724
    %v1059 = vunpack.c.l.b16 %v725
    %v1060 = vunpack.c.h.b16 %v725
    %v1061 = vunpack.c.l.b16 %v726
    %v1062 = vunpack.c.h.b16 %v726
    %v1063 = vunpack.c.l.b16 %v727
    %v1064 = vunpack.c.h.b16 %v727
    %v1065 = vunpack.c.l.b16 %v728
    %v1066 = vunpack.c.h.b16 %v728
    %v1067 = vunpack.c.l.b16 %v729
    %v1068 = vunpack.c.h.b16 %v729
    %v1069 = vunpack.c.l.b16 %v730
    %v1070 = vunpack.c.h.b16 %v730
    %v1071 = vunpack.c.l.b16 %v731
    %v1072 = vunpack.c.h.b16 %v731
    %v1073 = vunpack.c.l.b16 %v732
    %v1074 = vunpack.c.h.b16 %v732
    %v1075 = vunpack.c.l.b16 %v733
    %v1076 = vunpack.c.h.b16 %v733
    %v1077 = vunpack.c.l.b16 %v734
    %v1078 = vunpack.c.h.b16 %v734
    %v1079 = vunpack.c.l.b16 %v735
    %v1080 = vunpack.c.h.b16 %v735
    %v1081 = vunpack.c.l.b16 %v736
    %v1082 = vunpack.c.h.b16 %v736
    %v1083 = vunpack.c.l.b16 %v737
    %v1084 = vunpack.c.h.b16 %v737
    %v1085 = vunpack.c.l.b16 %v738
    %v1086 = vunpack.c.h.b16 %v738
    %v1087 = vunpack.c.l.b16 %v739
    %v1088 = vunpack.c.h.b16 %v739
    %v1089 = vunpack.c.l.b16 %v740
    %v1090 = vunpack.c.h.b16 %v740
    %v1091 = vunpack.c.l.b16 %v741
    %v1092 = vunpack.c.h.b16 %v741
    %v1093 = vunpack.c.l.b16 %v742
    %v1094 = vunpack.c.h.b16 %v742
    %v1095 = vunpack.c.l.b16 %v743
    %v1096 = vunpack.c.h.b16 %v743
    %v1097 = vunpack.c.l.b16 %v744
    %v1098 = vunpack.c.h.b16 %v744
    %v1099 = vunpack.c.l.b16 %v745
    %v1100 = vunpack.c.h.b16 %v745
    %v1101 = vunpack.c.l.b16 %v746
    %v1102 = vunpack.c.h.b16 %v746
    %v1103 = vunpack.c.l.b16 %v747
    %v1104 = vunpack.c.h.b16 %v747
    %v1105 = vunpack.c.l.b16 %v748
    %v1106 = vunpack.c.h.b16 %v748
    %v1107 = vunpack.c.l.b16 %v749
    %v1108 = vunpack.c.h.b16 %v749
    %v1109 = vunpack.c.l.b16 %v750
    %v1110 = vunpack.c.h.b16 %v750
    %v1111 = vunpack.c.l.b16 %v751
    %v1112 = vunpack.c.h.b16 %v751
    %v1113 = vunpack.c.l.b16 %v752
    %v1114 = vunpack.c.h.b16 %v752
    %v1115 = vunpack.c.l.b16 %v753
    %v1116 = vunpack.c.h.b16 %v753
    %v1117 = vunpack.c.l.b16 %v754
    %v1118 = vunpack.c.h.b16 %v754
    %v1119 = vunpack.c.l.b16 %v755
    %v1120 = vunpack.c.h.b16 %v755
    %v1121 = vunpack.c.l.b16 %v756
    %v1122 = vunpack.c.h.b16 %v756
    %v1123 = vunpack.c.l.b16 %v757
    %v1124 = vunpack.c.h.b16 %v757
    %v1125 = vunpack.c.l.b16 %v758
    %v1126 = vunpack.c.h.b16 %v758
    %v1127 = vunpack.c.l.b16 %v759
    %v1128 = vunpack.c.h.b16 %v759
    %v1129 = vunpack.c.l.b16 %v760
    %v1130 = vunpack.c.h.b16 %v760
    %v1131 = vunpack.c.l.b16 %v761
    %v1132 = vunpack.c.h.b16 %v761
    %v1133 = vunpack.c.l.b16 %v762
    %v1134 = vunpack.c.h.b16 %v762
    %v1135 = vunpack.c.l.b16 %v763
    %v1136 = vunpack.c.h.b16 %v763
    %v1137 = vunpack.c.l.b16 %v764
    %v1138 = vunpack.c.h.b16 %v764
    %v1139 = vunpack.c.l.b16 %v765
    %v1140 = vunpack.c.h.b16 %v765
    %v1141 = vunpack.c.l.b16 %v766
    %v1142 = vunpack.c.h.b16 %v766
    %v1143 = vunpack.c.l.b16 %v767
    %v1144 = vunpack.c.h.b16 %v767
    %v1145 = vunpack.c.l.b16 %v768
    %v1146 = vunpack.c.h.b16 %v768
    %v1147 = vunpack.c.l.b16 %v769
    %v1148 = vunpack.c.h.b16 %v769
    %v1149 = vunpack.c.l.b16 %v770
    %v1150 = vunpack.c.h.b16 %v770
    %v1151 = vunpack.c.l.b16 %v771
    %v1152 = vunpack.c.h.b16 %v771
    %v1153 = vunpack.c.l.b16 %v772
    %v1154 = vunpack.c.h.b16 %v772
    %v1155 = vunpack.c.l.b16 %v773
    %v1156 = vunpack.c.h.b16 %v773
    %v1157 = vunpack.c.l.b16 %v774
    %v1158 = vunpack.c.h.b16 %v774
    %v1159 = vunpack.c.l.b16 %v775
    %v1160 = vunpack.c.h.b16 %v775
    %v1161 = vunpack.c.l.b16 %v776
    %v1162 = vunpack.c.h.b16 %v776
    %v1163 = vunpack.c.l.b16 %v777
    %v1164 = vunpack.c.h.b16 %v777
    %v1165 = vunpack.c.l.b16 %v778
    %v1166 = vunpack.c.h.b16 %v778
    %v1167 = vunpack.c.l.b16 %v779
    %v1168 = vunpack.c.h.b16 %v779
    %v1169 = vunpack.c.l.b16 %v780
    %v1170 = vunpack.c.h.b16 %v780
    %v1171 = vunpack.c.l.b16 %v781
    %v1172 = vunpack.c.h.b16 %v781
    %v1173 = vunpack.c.l.b16 %v782
    %v1174 = vunpack.c.h.b16 %v782
    %v1175 = vunpack.c.l.b16 %v783
    %v1176 = vunpack.c.h.b16 %v783
    %v1177 = vunpack.c.l.b16 %v784
    %v1178 = vunpack.c.h.b16 %v784
    %v1179 = vunpack.c.l.b16 %v785
    %v1180 = vunpack.c.h.b16 %v785
    %v1181 = vunpack.c.l.b16 %v786
    %v1182 = vunpack.c.h.b16 %v786
    %v1183 = vunpack.c.l.b16 %v787
    %v1184 = vunpack.c.h.b16 %v787
    %v1185 = vunpack.c.l.b16 %v788
    %v1186 = vunpack.c.h.b16 %v788
    %v1187 = vpack.c.b16 %v935, %v931
    %v1188 = vpack.c.b16 %v936, %v932
    %v1189 = vpack.c.b16 %v937, %v933
    %v1190 = vpack.c.b16 %v938, %v934
    %v1191 = vpack.c.b16 %v943, %v939
    %v1192 = vpack.c.b16 %v944, %v940
    %v1193 = vpack.c.b16 %v945, %v941
    %v1194 = vpack.c.b16 %v946, %v942
    %v1195 = vpack.c.b16 %v951, %v947
    %v1196 = vpack.c.b16 %v952, %v948
    %v1197 = vpack.c.b16 %v953, %v949
    %v1198 = vpack.c.b16 %v954, %v950
    %v1199 = vpack.c.b16 %v959, %v955
    %v1200 = vpack.c.b16 %v960, %v956
    %v1201 = vpack.c.b16 %v961, %v957
    %v1202 = vpack.c.b16 %v962, %v958
    %v1203 = vpack.c.b16 %v967, %v963
    %v1204 = vpack.c.b16 %v968, %v964
    %v1205 = vpack.c.b16 %v969, %v965
    %v1206 = vpack.c.b16 %v970, %v966
    %v1207 = vpack.c.b16 %v975, %v971
    %v1208 = vpack.c.b16 %v976, %v972
    %v1209 = vpack.c.b16 %v977, %v973
    %v1210 = vpack.c.b16 %v978, %v974
    %v1211 = vpack.c.b16 %v983, %v979
    %v1212 = vpack.c.b16 %v984, %v980
    %v1213 = vpack.c.b16 %v985, %v981
    %v1214 = vpack.c.b16 %v986, %v982
    %v1215 = vpack.c.b16 %v991, %v987
    %v1216 = vpack.c.b16 %v992, %v988
    %v1217 = vpack.c.b16 %v993, %v989
    %v1218 = vpack.c.b16 %v994, %v990
    %v1219 = vpack.c.b16 %v999, %v995
    %v1220 = vpack.c.b16 %v1000, %v996
    %v1221 = vpack.c.b16 %v1001, %v997
    %v1222 = vpack.c.b16 %v1002, %v998
    %v1223 = vpack.c.b16 %v1007, %v1003
    %v1224 = vpack.c.b16 %v1008, %v1004
    %v1225 = vpack.c.b16 %v1009, %v1005
    %v1226 = vpack.c.b16 %v1010, %v1006
    %v1227 = vpack.c.b16 %v1015, %v1011
    %v1228 = vpack.c.b16 %v1016, %v1012
    %v1229 = vpack.c.b16 %v1017, %v1013
    %v1230 = vpack.c.b16 %v1018, %v1014
    %v1231 = vpack.c.b16 %v1023, %v1019
    %v1232 = vpack.c.b16 %v1024, %v1020
    %v1233 = vpack.c.b16 %v1025, %v1021
    %v1234 = vpack.c.b16 %v1026, %v1022
    %v1235 = vpack.c.b16 %v1031, %v1027
    %v1236 = vpack.c.b16 %v1032, %v1028
    %v1237 = vpack.c.b16 %v1033, %v1029
    %v1238 = vpack.c.b16 %v1034, %v1030
    %v1239 = vpack.c.b16 %v1039, %v1035
    %v1240 = vpack.c.b16 %v1040, %v1036
    %v1241 = vpack.c.b16 %v1041, %v1037
    %v1242 = vpack.c.b16 %v1042, %v1038
    %v1243 = vpack.c.b16 %v1047, %v1043
    %v1244 = vpack.c.b16 %v1048, %v1044
    %v1245 = vpack.c.b16 %v1049, %v1045
    %v1246 = vpack.c.b16 %v1050, %v1046
    %v1247 = vpack.c.b16 %v1055, %v1051
    %v1248 = vpack.c.b16 %v1056, %v1052
    %v1249 = vpack.c.b16 %v1057, %v1053
    %v1250 = vpack.c.b16 %v1058, %v1054
    %v1251 = vpack.c.b16 %v1063, %v1059
    %v1252 = vpack.c.b16 %v1064, %v1060
    %v1253 = vpack.c.b16 %v1065, %v1061
    %v1254 = vpack.c.b16 %v1066, %v1062
    %v1255 = vpack.c.b16 %v1071, %v1067
    %v1256 = vpack.c.b16 %v1072, %v1068
    %v1257 = vpack.c.b16 %v1073, %v1069
    %v1258 = vpack.c.b16 %v1074, %v1070
    %v1259 = vpack.c.b16 %v1079, %v1075
    %v1260 = vpack.c.b16 %v1080, %v1076
    %v1261 = vpack.c.b16 %v1081, %v1077
    %v1262 = vpack.c.b16 %v1082, %v1078
    %v1263 = vpack.c.b16 %v1087, %v1083
    %v1264 = vpack.c.b16 %v1088, %v1084
    %v1265 = vpack.c.b16 %v1089, %v1085
    %v1266 = vpack.c.b16 %v1090, %v1086
    %v1267 = vpack.c.b16 %v1095, %v1091
    %v1268 = vpack.c.b16 %v1096, %v1092
    %v1269 = vpack.c.b16 %v1097, %v1093
    %v1270 = vpack.c.b16 %v1098, %v1094
    %v1271 = vpack.c.b16 %v1103, %v1099
    %v1272 = vpack.c.b16 %v1104, %v1100
    %v1273 = vpack.c.b16 %v1105, %v1101
    %v1274 = vpack.c.b16 %v1106, %v1102
    %v1275 = vpack.c.b16 %v1111, %v1107
    %v1276 = vpack.c.b16 %v1112, %v1108
    %v1277 = vpack.c.b16 %v1113, %v1109
    %v1278 = vpack.c.b16 %v1114, %v1110
    %v1279 = vpack.c.b16 %v1119, %v1115
    %v1280 = vpack.c.b16 %v1120, %v1116
    %v1281 = vpack.c.b16 %v1121, %v1117
    %v1282 = vpack.c.b16 %v1122, %v1118
    %v1283 = vpack.c.b16 %v1127, %v1123
    %v1284 = vpack.c.b16 %v1128, %v1124
    %v1285 = vpack.c.b16 %v1129, %v1125
    %v1286 = vpack.c.b16 %v1130, %v1126
    %v1287 = vpack.c.b16 %v1135, %v1131
    %v1288 = vpack.c.b16 %v1136, %v1132
    %v1289 = vpack.c.b16 %v1137, %v1133
    %v1290 = vpack.c.b16 %v1138, %v1134
    %v1291 = vpack.c.b16 %v1143, %v1139
    %v1292 = vpack.c.b16 %v1144, %v1140
    %v1293 = vpack.c.b16 %v1145, %v1141
    %v1294 = vpack.c.b16 %v1146, %v1142
    %v1295 = vpack.c.b16 %v1151, %v1147
    %v1296 = vpack.c.b16 %v1152, %v1148
    %v1297 = vpack.c.b16 %v1153, %v1149
    %v1298 = vpack.c.b16 %v1154, %v1150
    %v1299 = vpack.c.b16 %v1159, %v1155
    %v1300 = vpack.c.b16 %v1160, %v1156
    %v1301 = vpack.c.b16 %v1161, %v1157
    %v1302 = vpack.c.b16 %v1162, %v1158
    %v1303 = vpack.c.b16 %v1167, %v1163
    %v1304 = vpack.c.b16 %v1168, %v1164
    %v1305 = vpack.c.b16 %v1169, %v1165
    %v1306 = vpack.c.b16 %v1170, %v1166
    %v1307 = vpack.c.b16 %v1175, %v1171
    %v1308 = vpack.c.b16 %v1176, %v1172
    %v1309 = vpack.c.b16 %v1177, %v1173
    %v1310 = vpack.c.b16 %v1178, %v1174
    %v1311 = vpack.c.b16 %v1183, %v1179
    %v1312 = vpack.c.b16 %v1184, %v1180
    %v1313 = vpack.c.b16 %v1185, %v1181
    %v1314 = vpack.c.b16 %v1186, %v1182
    %1443 = vmatpush.bf16.msra.mxu0 %v1215
    %1444 = vmatpush.bf16.msra.mxu0 %v1211
    %1445 = vmatpush.bf16.msra.mxu0 %v1207
    %1446 = vmatpush.bf16.msra.mxu0 %v1203
    %1447 = vmatpush.bf16.msra.mxu0 %v1199
    %1448 = vmatpush.bf16.msra.mxu0 %v1195
    %1449 = vmatpush.bf16.msra.mxu0 %v1191
    %1450 = vmatpush.bf16.msra.mxu0 %v1187
    %1451 = vmatmul.bf16.gmra.mxu0 %v790
    %v1452 = vpop.f32.mrf.mxu0
    %v1453 = vadd.f32 %v795, %v1452
    %v1454 = vpop.f32.mrf.mxu0
    %1455 = vdwg.mxu0
    %1456 = vmatpush.bf16.msra.mxu0 %v1247
    %1457 = vmatpush.bf16.msra.mxu0 %v1243
    %1458 = vmatpush.bf16.msra.mxu0 %v1239
    %1459 = vmatpush.bf16.msra.mxu0 %v1235
    %1460 = vmatpush.bf16.msra.mxu0 %v1231
    %1461 = vmatpush.bf16.msra.mxu0 %v1227
    %1462 = vmatpush.bf16.msra.mxu0 %v1223
    %1463 = vmatpush.bf16.msra.mxu0 %v1219
    %1464 = vmatmul.bf16.gmra.mxu0 %v791
    %v1465 = vpop.f32.mrf.mxu0
    %v1466 = vadd.f32 %v1453, %v1465
    %v1467 = vpop.f32.mrf.mxu0
    %1468 = vdwg.mxu0
    %1469 = vmatpush.bf16.msra.mxu0 %v1279
    %1470 = vmatpush.bf16.msra.mxu0 %v1275
    %1471 = vmatpush.bf16.msra.mxu0 %v1271
    %1472 = vmatpush.bf16.msra.mxu0 %v1267
    %1473 = vmatpush.bf16.msra.mxu0 %v1263
    %1474 = vmatpush.bf16.msra.mxu0 %v1259
    %1475 = vmatpush.bf16.msra.mxu0 %v1255
    %1476 = vmatpush.bf16.msra.mxu0 %v1251
    %1477 = vmatmul.bf16.gmra.mxu0 %v792
    %v1478 = vpop.f32.mrf.mxu0
    %v1479 = vadd.f32 %v1466, %v1478
    %v1480 = vpop.f32.mrf.mxu0
    %1481 = vdwg.mxu0
    %1482 = vmatpush.bf16.msra.mxu0 %v1311
    %1483 = vmatpush.bf16.msra.mxu0 %v1307
    %1484 = vmatpush.bf16.msra.mxu0 %v1303
    %1485 = vmatpush.bf16.msra.mxu0 %v1299
    %1486 = vmatpush.bf16.msra.mxu0 %v1295
    %1487 = vmatpush.bf16.msra.mxu0 %v1291
    %1488 = vmatpush.bf16.msra.mxu0 %v1287
    %1489 = vmatpush.bf16.msra.mxu0 %v1283
    %1490 = vmatmul.bf16.gmra.mxu0 %v793
    %v1491 = vpop.f32.mrf.mxu0
    %v1492 = vadd.f32 %v1479, %v1491
    %v1493 = vpop.f32.mrf.mxu0
    %1494 = vdwg.mxu0
    %1495 = vmatpush.bf16.msra.mxu0 %v1216
    %1496 = vmatpush.bf16.msra.mxu0 %v1212
    %1497 = vmatpush.bf16.msra.mxu0 %v1208
    %1498 = vmatpush.bf16.msra.mxu0 %v1204
    %1499 = vmatpush.bf16.msra.mxu0 %v1200
    %1500 = vmatpush.bf16.msra.mxu0 %v1196
    %1501 = vmatpush.bf16.msra.mxu0 %v1192
    %1502 = vmatpush.bf16.msra.mxu0 %v1188
    %1503 = vmatmul.bf16.gmra.mxu0 %v790
    %v1504 = vpop.f32.mrf.mxu0
    %v1505 = vadd.f32 %v796, %v1504
    %v1506 = vpop.f32.mrf.mxu0
    %1507 = vdwg.mxu0
    %1508 = vmatpush.bf16.msra.mxu0 %v1248
    %1509 = vmatpush.bf16.msra.mxu0 %v1244
    %1510 = vmatpush.bf16.msra.mxu0 %v1240
    %1511 = vmatpush.bf16.msra.mxu0 %v1236
    %1512 = vmatpush.bf16.msra.mxu0 %v1232
    %1513 = vmatpush.bf16.msra.mxu0 %v1228
    %1514 = vmatpush.bf16.msra.mxu0 %v1224
    %1515 = vmatpush.bf16.msra.mxu0 %v1220
    %1516 = vmatmul.bf16.gmra.mxu0 %v791
    %v1517 = vpop.f32.mrf.mxu0
    %v1518 = vadd.f32 %v1505, %v1517
    %v1519 = vpop.f32.mrf.mxu0
    %1520 = vdwg.mxu0
    %1521 = vmatpush.bf16.msra.mxu0 %v1280
    %1522 = vmatpush.bf16.msra.mxu0 %v1276
    %1523 = vmatpush.bf16.msra.mxu0 %v1272
    %1524 = vmatpush.bf16.msra.mxu0 %v1268
    %1525 = vmatpush.bf16.msra.mxu0 %v1264
    %1526 = vmatpush.bf16.msra.mxu0 %v1260
    %1527 = vmatpush.bf16.msra.mxu0 %v1256
    %1528 = vmatpush.bf16.msra.mxu0 %v1252
    %1529 = vmatmul.bf16.gmra.mxu0 %v792
    %v1530 = vpop.f32.mrf.mxu0
    %v1531 = vadd.f32 %v1518, %v1530
    %v1532 = vpop.f32.mrf.mxu0
    %1533 = vdwg.mxu0
    %1534 = vmatpush.bf16.msra.mxu0 %v1312
    %1535 = vmatpush.bf16.msra.mxu0 %v1308
    %1536 = vmatpush.bf16.msra.mxu0 %v1304
    %1537 = vmatpush.bf16.msra.mxu0 %v1300
    %1538 = vmatpush.bf16.msra.mxu0 %v1296
    %1539 = vmatpush.bf16.msra.mxu0 %v1292
    %1540 = vmatpush.bf16.msra.mxu0 %v1288
    %1541 = vmatpush.bf16.msra.mxu0 %v1284
    %1542 = vmatmul.bf16.gmra.mxu0 %v793
    %v1543 = vpop.f32.mrf.mxu0
    %v1544 = vadd.f32 %v1531, %v1543
    %v1545 = vpop.f32.mrf.mxu0
    %1546 = vdwg.mxu0
    %1547 = vmatpush.bf16.msra.mxu0 %v1217
    %1548 = vmatpush.bf16.msra.mxu0 %v1213
    %1549 = vmatpush.bf16.msra.mxu0 %v1209
    %1550 = vmatpush.bf16.msra.mxu0 %v1205
    %1551 = vmatpush.bf16.msra.mxu0 %v1201
    %1552 = vmatpush.bf16.msra.mxu0 %v1197
    %1553 = vmatpush.bf16.msra.mxu0 %v1193
    %1554 = vmatpush.bf16.msra.mxu0 %v1189
    %1555 = vmatmul.bf16.gmra.mxu0 %v790
    %v1556 = vpop.f32.mrf.mxu0
    %v1557 = vadd.f32 %v797, %v1556
    %v1558 = vpop.f32.mrf.mxu0
    %1559 = vdwg.mxu0
    %1560 = vmatpush.bf16.msra.mxu0 %v1249
    %1561 = vmatpush.bf16.msra.mxu0 %v1245
    %1562 = vmatpush.bf16.msra.mxu0 %v1241
    %1563 = vmatpush.bf16.msra.mxu0 %v1237
    %1564 = vmatpush.bf16.msra.mxu0 %v1233
    %1565 = vmatpush.bf16.msra.mxu0 %v1229
    %1566 = vmatpush.bf16.msra.mxu0 %v1225
    %1567 = vmatpush.bf16.msra.mxu0 %v1221
    %1568 = vmatmul.bf16.gmra.mxu0 %v791
    %v1569 = vpop.f32.mrf.mxu0
    %v1570 = vadd.f32 %v1557, %v1569
    %v1571 = vpop.f32.mrf.mxu0
    %1572 = vdwg.mxu0
    %1573 = vmatpush.bf16.msra.mxu0 %v1281
    %1574 = vmatpush.bf16.msra.mxu0 %v1277
    %1575 = vmatpush.bf16.msra.mxu0 %v1273
    %1576 = vmatpush.bf16.msra.mxu0 %v1269
    %1577 = vmatpush.bf16.msra.mxu0 %v1265
    %1578 = vmatpush.bf16.msra.mxu0 %v1261
    %1579 = vmatpush.bf16.msra.mxu0 %v1257
    %1580 = vmatpush.bf16.msra.mxu0 %v1253
    %1581 = vmatmul.bf16.gmra.mxu0 %v792
    %v1582 = vpop.f32.mrf.mxu0
    %v1583 = vadd.f32 %v1570, %v1582
    %v1584 = vpop.f32.mrf.mxu0
    %1585 = vdwg.mxu0
    %1586 = vmatpush.bf16.msra.mxu0 %v1313
    %1587 = vmatpush.bf16.msra.mxu0 %v1309
    %1588 = vmatpush.bf16.msra.mxu0 %v1305
    %1589 = vmatpush.bf16.msra.mxu0 %v1301
    %1590 = vmatpush.bf16.msra.mxu0 %v1297
    %1591 = vmatpush.bf16.msra.mxu0 %v1293
    %1592 = vmatpush.bf16.msra.mxu0 %v1289
    %1593 = vmatpush.bf16.msra.mxu0 %v1285
    %1594 = vmatmul.bf16.gmra.mxu0 %v793
    %v1595 = vpop.f32.mrf.mxu0
    %v1596 = vadd.f32 %v1583, %v1595
    %v1597 = vpop.f32.mrf.mxu0
    %1598 = vdwg.mxu0
    %1599 = vmatpush.bf16.msra.mxu0 %v1218
    %1600 = vmatpush.bf16.msra.mxu0 %v1214
    %1601 = vmatpush.bf16.msra.mxu0 %v1210
    %1602 = vmatpush.bf16.msra.mxu0 %v1206
    %1603 = vmatpush.bf16.msra.mxu0 %v1202
    %1604 = vmatpush.bf16.msra.mxu0 %v1198
    %1605 = vmatpush.bf16.msra.mxu0 %v1194
    %1606 = vmatpush.bf16.msra.mxu0 %v1190
    %1607 = vmatmul.bf16.gmra.mxu0 %v790
    %v1608 = vpop.f32.mrf.mxu0
    %v1609 = vadd.f32 %v798, %v1608
    %v1610 = vpop.f32.mrf.mxu0
    %1611 = vdwg.mxu0
    %1612 = vmatpush.bf16.msra.mxu0 %v1250
    %1613 = vmatpush.bf16.msra.mxu0 %v1246
    %1614 = vmatpush.bf16.msra.mxu0 %v1242
    %1615 = vmatpush.bf16.msra.mxu0 %v1238
    %1616 = vmatpush.bf16.msra.mxu0 %v1234
    %1617 = vmatpush.bf16.msra.mxu0 %v1230
    %1618 = vmatpush.bf16.msra.mxu0 %v1226
    %1619 = vmatpush.bf16.msra.mxu0 %v1222
    %1620 = vmatmul.bf16.gmra.mxu0 %v791
    %v1621 = vpop.f32.mrf.mxu0
    %v1622 = vadd.f32 %v1609, %v1621
    %v1623 = vpop.f32.mrf.mxu0
    %1624 = vdwg.mxu0
    %1625 = vmatpush.bf16.msra.mxu0 %v1282
    %1626 = vmatpush.bf16.msra.mxu0 %v1278
    %1627 = vmatpush.bf16.msra.mxu0 %v1274
    %1628 = vmatpush.bf16.msra.mxu0 %v1270
    %1629 = vmatpush.bf16.msra.mxu0 %v1266
    %1630 = vmatpush.bf16.msra.mxu0 %v1262
    %1631 = vmatpush.bf16.msra.mxu0 %v1258
    %1632 = vmatpush.bf16.msra.mxu0 %v1254
    %1633 = vmatmul.bf16.gmra.mxu0 %v792
    %v1634 = vpop.f32.mrf.mxu0
    %v1635 = vadd.f32 %v1622, %v1634
    %v1636 = vpop.f32.mrf.mxu0
    %1637 = vdwg.mxu0
    %1638 = vmatpush.bf16.msra.mxu0 %v1314
    %1639 = vmatpush.bf16.msra.mxu0 %v1310
    %1640 = vmatpush.bf16.msra.mxu0 %v1306
    %1641 = vmatpush.bf16.msra.mxu0 %v1302
    %1642 = vmatpush.bf16.msra.mxu0 %v1298
    %1643 = vmatpush.bf16.msra.mxu0 %v1294
    %1644 = vmatpush.bf16.msra.mxu0 %v1290
    %1645 = vmatpush.bf16.msra.mxu0 %v1286
    %1646 = vmatmul.bf16.gmra.mxu0 %v793
    %v1647 = vpop.f32.mrf.mxu0
    %v1648 = vadd.f32 %v1635, %v1647
    %v1649 = vpop.f32.mrf.mxu0
    %1650 = vdwg.mxu0
    %v1651 = vmax.f32 %v1492, 0.0
    %v1652 = vmax.f32 %v1544, 0.0
    %v1653 = vmax.f32 %v1596, 0.0
    %v1654 = vmax.f32 %v1648, 0.0
    %v1655 = vld [vmem:[#allocation4] sm:$0xff]
    %v1656 = vld [vmem:[#allocation4 + $0x8] sm:$0xf]
    %v1657 = vld [vmem:[#allocation4 + $0xc] sm:$0xff]
    %v1658 = vld [vmem:[#allocation4 + $0x14] sm:$0xf]
    %v1659 = vld [vmem:[#allocation4 + $0x18] sm:$0xff]
    %v1660 = vld [vmem:[#allocation4 + $0x20] sm:$0xf]
    %v1661 = vld [vmem:[#allocation4 + $0x24] sm:$0xff]
    %v1662 = vld [vmem:[#allocation4 + $0x2c] sm:$0xf]
    %v1663 = vld [vmem:[#allocation4 + $0x30] sm:$0xff]
    %v1664 = vld [vmem:[#allocation4 + $0x38] sm:$0xf]
    %v1665 = vld [vmem:[#allocation4 + $0x3c] sm:$0xff]
    %v1666 = vld [vmem:[#allocation4 + $0x44] sm:$0xf]
    %v1667 = vld [vmem:[#allocation4 + $0x48] sm:$0xff]
    %v1668 = vld [vmem:[#allocation4 + $0x50] sm:$0xf]
    %v1669 = vld [vmem:[#allocation4 + $0x54] sm:$0xff]
    %v1670 = vld [vmem:[#allocation4 + $0x5c] sm:$0xf]
    %v1671 = vld [vmem:[#allocation4 + $0x60] sm:$0xff]
    %v1672 = vld [vmem:[#allocation4 + $0x68] sm:$0xf]
    %v1673 = vld [vmem:[#allocation4 + $0x6c] sm:$0xff]
    %v1674 = vld [vmem:[#allocation4 + $0x74] sm:$0xf]
    %v1675 = vld [vmem:[#allocation4 + $0x78] sm:$0xff]
    %v1676 = vld [vmem:[#allocation4 + $0x80] sm:$0xf]
    %v1677 = vld [vmem:[#allocation4 + $0x84] sm:$0xff]
    %v1678 = vld [vmem:[#allocation4 + $0x8c] sm:$0xf]
    %v1679 = vld [vmem:[#allocation4 + $0x90] sm:$0xff]
    %v1680 = vld [vmem:[#allocation4 + $0x98] sm:$0xf]
    %v1681 = vld [vmem:[#allocation4 + $0x9c] sm:$0xff]
    %v1682 = vld [vmem:[#allocation4 + $0xa4] sm:$0xf]
    %v1683 = vld [vmem:[#allocation4 + $0xa8] sm:$0xff]
    %v1684 = vld [vmem:[#allocation4 + $0xb0] sm:$0xf]
    %v1685 = vld [vmem:[#allocation4 + $0xb4] sm:$0xff]
    %v1686 = vld [vmem:[#allocation4 + $0xbc] sm:$0xf]
    %v1687 = vld [vmem:[#allocation4 + $0xc0] sm:$0xff]
    %v1688 = vld [vmem:[#allocation4 + $0xc8] sm:$0xf]
    %v1689 = vld [vmem:[#allocation4 + $0xcc] sm:$0xff]
    %v1690 = vld [vmem:[#allocation4 + $0xd4] sm:$0xf]
    %v1691 = vld [vmem:[#allocation4 + $0xd8] sm:$0xff]
    %v1692 = vld [vmem:[#allocation4 + $0xe0] sm:$0xf]
    %v1693 = vld [vmem:[#allocation4 + $0xe4] sm:$0xff]
    %v1694 = vld [vmem:[#allocation4 + $0xec] sm:$0xf]
    %v1695 = vld [vmem:[#allocation4 + $0xf0] sm:$0xff]
    %v1696 = vld [vmem:[#allocation4 + $0xf8] sm:$0xf]
    %v1697 = vld [vmem:[#allocation4 + $0xfc] sm:$0xff]
    %v1698 = vld [vmem:[#allocation4 + $0x104] sm:$0xf]
    %v1699 = vld [vmem:[#allocation4 + $0x108] sm:$0xff]
    %v1700 = vld [vmem:[#allocation4 + $0x110] sm:$0xf]
    %v1701 = vld [vmem:[#allocation4 + $0x114] sm:$0xff]
    %v1702 = vld [vmem:[#allocation4 + $0x11c] sm:$0xf]
    %v1703 = vld [vmem:[#allocation4 + $0x120] sm:$0xff]
    %v1704 = vld [vmem:[#allocation4 + $0x128] sm:$0xf]
    %v1705 = vld [vmem:[#allocation4 + $0x12c] sm:$0xff]
    %v1706 = vld [vmem:[#allocation4 + $0x134] sm:$0xf]
    %v1707 = vld [vmem:[#allocation4 + $0x138] sm:$0xff]
    %v1708 = vld [vmem:[#allocation4 + $0x140] sm:$0xf]
    %v1709 = vld [vmem:[#allocation4 + $0x144] sm:$0xff]
    %v1710 = vld [vmem:[#allocation4 + $0x14c] sm:$0xf]
    %v1711 = vld [vmem:[#allocation4 + $0x150] sm:$0xff]
    %v1712 = vld [vmem:[#allocation4 + $0x158] sm:$0xf]
    %v1713 = vld [vmem:[#allocation4 + $0x15c] sm:$0xff]
    %v1714 = vld [vmem:[#allocation4 + $0x164] sm:$0xf]
    %v1715 = vld [vmem:[#allocation4 + $0x168] sm:$0xff]
    %v1716 = vld [vmem:[#allocation4 + $0x170] sm:$0xf]
    %v1717 = vld [vmem:[#allocation4 + $0x174] sm:$0xff]
    %v1718 = vld [vmem:[#allocation4 + $0x17c] sm:$0xf]
    %v1719 = vld [vmem:[#allocation4 + $0x180] sm:$0xff]
    %v1720 = vld [vmem:[#allocation4 + $0x188] sm:$0xf]
    %v1721 = vld [vmem:[#allocation4 + $0x18c] sm:$0xff]
    %v1722 = vld [vmem:[#allocation4 + $0x194] sm:$0xf]
    %v1723 = vld [vmem:[#allocation4 + $0x198] sm:$0xff]
    %v1724 = vld [vmem:[#allocation4 + $0x1a0] sm:$0xf]
    %v1725 = vld [vmem:[#allocation4 + $0x1a4] sm:$0xff]
    %v1726 = vld [vmem:[#allocation4 + $0x1ac] sm:$0xf]
    %v1727 = vld [vmem:[#allocation4 + $0x1b0] sm:$0xff]
    %v1728 = vld [vmem:[#allocation4 + $0x1b8] sm:$0xf]
    %v1729 = vld [vmem:[#allocation4 + $0x1bc] sm:$0xff]
    %v1730 = vld [vmem:[#allocation4 + $0x1c4] sm:$0xf]
    %v1731 = vld [vmem:[#allocation4 + $0x1c8] sm:$0xff]
    %v1732 = vld [vmem:[#allocation4 + $0x1d0] sm:$0xf]
    %v1733 = vld [vmem:[#allocation4 + $0x1d4] sm:$0xff]
    %v1734 = vld [vmem:[#allocation4 + $0x1dc] sm:$0xf]
    %v1735 = vld [vmem:[#allocation4 + $0x1e0] sm:$0xff]
    %v1736 = vld [vmem:[#allocation4 + $0x1e8] sm:$0xf]
    %v1737 = vld [vmem:[#allocation4 + $0x1ec] sm:$0xff]
    %v1738 = vld [vmem:[#allocation4 + $0x1f4] sm:$0xf]
    %v1739 = vld [vmem:[#allocation4 + $0x1f8] sm:$0xff]
    %v1740 = vld [vmem:[#allocation4 + $0x200] sm:$0xf]
    %v1741 = vld [vmem:[#allocation4 + $0x204] sm:$0xff]
    %v1742 = vld [vmem:[#allocation4 + $0x20c] sm:$0xf]
    %v1743 = vld [vmem:[#allocation4 + $0x210] sm:$0xff]
    %v1744 = vld [vmem:[#allocation4 + $0x218] sm:$0xf]
    %v1745 = vld [vmem:[#allocation4 + $0x21c] sm:$0xff]
    %v1746 = vld [vmem:[#allocation4 + $0x224] sm:$0xf]
    %v1747 = vld [vmem:[#allocation4 + $0x228] sm:$0xff]
    %v1748 = vld [vmem:[#allocation4 + $0x230] sm:$0xf]
    %v1749 = vld [vmem:[#allocation4 + $0x234] sm:$0xff]
    %v1750 = vld [vmem:[#allocation4 + $0x23c] sm:$0xf]
    %v1751 = vld [vmem:[#allocation4 + $0x240] sm:$0xff]
    %v1752 = vld [vmem:[#allocation4 + $0x248] sm:$0xf]
    %v1753 = vld [vmem:[#allocation4 + $0x24c] sm:$0xff]
    %v1754 = vld [vmem:[#allocation4 + $0x254] sm:$0xf]
    %v1755 = vld [vmem:[#allocation4 + $0x258] sm:$0xff]
    %v1756 = vld [vmem:[#allocation4 + $0x260] sm:$0xf]
    %v1757 = vld [vmem:[#allocation4 + $0x264] sm:$0xff]
    %v1758 = vld [vmem:[#allocation4 + $0x26c] sm:$0xf]
    %v1759 = vld [vmem:[#allocation4 + $0x270] sm:$0xff]
    %v1760 = vld [vmem:[#allocation4 + $0x278] sm:$0xf]
    %v1761 = vld [vmem:[#allocation4 + $0x27c] sm:$0xff]
    %v1762 = vld [vmem:[#allocation4 + $0x284] sm:$0xf]
    %v1763 = vld [vmem:[#allocation4 + $0x288] sm:$0xff]
    %v1764 = vld [vmem:[#allocation4 + $0x290] sm:$0xf]
    %v1765 = vld [vmem:[#allocation4 + $0x294] sm:$0xff]
    %v1766 = vld [vmem:[#allocation4 + $0x29c] sm:$0xf]
    %v1767 = vld [vmem:[#allocation4 + $0x2a0] sm:$0xff]
    %v1768 = vld [vmem:[#allocation4 + $0x2a8] sm:$0xf]
    %v1769 = vld [vmem:[#allocation4 + $0x2ac] sm:$0xff]
    %v1770 = vld [vmem:[#allocation4 + $0x2b4] sm:$0xf]
    %v1771 = vld [vmem:[#allocation4 + $0x2b8] sm:$0xff]
    %v1772 = vld [vmem:[#allocation4 + $0x2c0] sm:$0xf]
    %v1773 = vld [vmem:[#allocation4 + $0x2c4] sm:$0xff]
    %v1774 = vld [vmem:[#allocation4 + $0x2cc] sm:$0xf]
    %v1775 = vld [vmem:[#allocation4 + $0x2d0] sm:$0xff]
    %v1776 = vld [vmem:[#allocation4 + $0x2d8] sm:$0xf]
    %v1777 = vld [vmem:[#allocation4 + $0x2dc] sm:$0xff]
    %v1778 = vld [vmem:[#allocation4 + $0x2e4] sm:$0xf]
    %v1779 = vld [vmem:[#allocation4 + $0x2e8] sm:$0xff]
    %v1780 = vld [vmem:[#allocation4 + $0x2f0] sm:$0xf]
    %v1781 = vld [vmem:[#allocation4 + $0x2f4] sm:$0xff]
    %v1782 = vld [vmem:[#allocation4 + $0x2fc] sm:$0xf]
    %v1783 = vld [vmem:[%s4 + $0xb] sm:$0x7]
    %v1784 = vpack.c.bf16 %v1651, %v1651
    %v1785 = vpack.c.bf16 %v1652, %v1652
    %v1786 = vpack.c.bf16 %v1653, %v1653
    %v1787 = vpack.c.bf16 %v1654, %v1654
    %v1789 = vperm.slane %v1783, 0
    %v1790 = vperm.slane %v1783, 1
    %v1791 = vperm.slane %v1783, 2
    %v1923 = vunpack.c.l.b16 %v1655
    %v1924 = vunpack.c.h.b16 %v1655
    %v1925 = vunpack.c.l.b16 %v1656
    %v1926 = vunpack.c.l.b16 %v1657
    %v1927 = vunpack.c.h.b16 %v1657
    %v1928 = vunpack.c.l.b16 %v1658
    %v1929 = vunpack.c.l.b16 %v1659
    %v1930 = vunpack.c.h.b16 %v1659
    %v1931 = vunpack.c.l.b16 %v1660
    %v1932 = vunpack.c.l.b16 %v1661
    %v1933 = vunpack.c.h.b16 %v1661
    %v1934 = vunpack.c.l.b16 %v1662
    %v1935 = vunpack.c.l.b16 %v1663
    %v1936 = vunpack.c.h.b16 %v1663
    %v1937 = vunpack.c.l.b16 %v1664
    %v1938 = vunpack.c.l.b16 %v1665
    %v1939 = vunpack.c.h.b16 %v1665
    %v1940 = vunpack.c.l.b16 %v1666
    %v1941 = vunpack.c.l.b16 %v1667
    %v1942 = vunpack.c.h.b16 %v1667
    %v1943 = vunpack.c.l.b16 %v1668
    %v1944 = vunpack.c.l.b16 %v1669
    %v1945 = vunpack.c.h.b16 %v1669
    %v1946 = vunpack.c.l.b16 %v1670
    %v1947 = vunpack.c.l.b16 %v1671
    %v1948 = vunpack.c.h.b16 %v1671
    %v1949 = vunpack.c.l.b16 %v1672
    %v1950 = vunpack.c.l.b16 %v1673
    %v1951 = vunpack.c.h.b16 %v1673
    %v1952 = vunpack.c.l.b16 %v1674
    %v1953 = vunpack.c.l.b16 %v1675
    %v1954 = vunpack.c.h.b16 %v1675
    %v1955 = vunpack.c.l.b16 %v1676
    %v1956 = vunpack.c.l.b16 %v1677
    %v1957 = vunpack.c.h.b16 %v1677
    %v1958 = vunpack.c.l.b16 %v1678
    %v1959 = vunpack.c.l.b16 %v1679
    %v1960 = vunpack.c.h.b16 %v1679
    %v1961 = vunpack.c.l.b16 %v1680
    %v1962 = vunpack.c.l.b16 %v1681
    %v1963 = vunpack.c.h.b16 %v1681
    %v1964 = vunpack.c.l.b16 %v1682
    %v1965 = vunpack.c.l.b16 %v1683
    %v1966 = vunpack.c.h.b16 %v1683
    %v1967 = vunpack.c.l.b16 %v1684
    %v1968 = vunpack.c.l.b16 %v1685
    %v1969 = vunpack.c.h.b16 %v1685
    %v1970 = vunpack.c.l.b16 %v1686
    %v1971 = vunpack.c.l.b16 %v1687
    %v1972 = vunpack.c.h.b16 %v1687
    %v1973 = vunpack.c.l.b16 %v1688
    %v1974 = vunpack.c.l.b16 %v1689
    %v1975 = vunpack.c.h.b16 %v1689
    %v1976 = vunpack.c.l.b16 %v1690
    %v1977 = vunpack.c.l.b16 %v1691
    %v1978 = vunpack.c.h.b16 %v1691
    %v1979 = vunpack.c.l.b16 %v1692
    %v1980 = vunpack.c.l.b16 %v1693
    %v1981 = vunpack.c.h.b16 %v1693
    %v1982 = vunpack.c.l.b16 %v1694
    %v1983 = vunpack.c.l.b16 %v1695
    %v1984 = vunpack.c.h.b16 %v1695
    %v1985 = vunpack.c.l.b16 %v1696
    %v1986 = vunpack.c.l.b16 %v1697
    %v1987 = vunpack.c.h.b16 %v1697
    %v1988 = vunpack.c.l.b16 %v1698
    %v1989 = vunpack.c.l.b16 %v1699
    %v1990 = vunpack.c.h.b16 %v1699
    %v1991 = vunpack.c.l.b16 %v1700
    %v1992 = vunpack.c.l.b16 %v1701
    %v1993 = vunpack.c.h.b16 %v1701
    %v1994 = vunpack.c.l.b16 %v1702
    %v1995 = vunpack.c.l.b16 %v1703
    %v1996 = vunpack.c.h.b16 %v1703
    %v1997 = vunpack.c.l.b16 %v1704
    %v1998 = vunpack.c.l.b16 %v1705
    %v1999 = vunpack.c.h.b16 %v1705
    %v2000 = vunpack.c.l.b16 %v1706
    %v2001 = vunpack.c.l.b16 %v1707
    %v2002 = vunpack.c.h.b16 %v1707
    %v2003 = vunpack.c.l.b16 %v1708
    %v2004 = vunpack.c.l.b16 %v1709
    %v2005 = vunpack.c.h.b16 %v1709
    %v2006 = vunpack.c.l.b16 %v1710
    %v2007 = vunpack.c.l.b16 %v1711
    %v2008 = vunpack.c.h.b16 %v1711
    %v2009 = vunpack.c.l.b16 %v1712
    %v2010 = vunpack.c.l.b16 %v1713
    %v2011 = vunpack.c.h.b16 %v1713
    %v2012 = vunpack.c.l.b16 %v1714
    %v2013 = vunpack.c.l.b16 %v1715
    %v2014 = vunpack.c.h.b16 %v1715
    %v2015 = vunpack.c.l.b16 %v1716
    %v2016 = vunpack.c.l.b16 %v1717
    %v2017 = vunpack.c.h.b16 %v1717
    %v2018 = vunpack.c.l.b16 %v1718
    %v2019 = vunpack.c.l.b16 %v1719
    %v2020 = vunpack.c.h.b16 %v1719
    %v2021 = vunpack.c.l.b16 %v1720
    %v2022 = vunpack.c.l.b16 %v1721
    %v2023 = vunpack.c.h.b16 %v1721
    %v2024 = vunpack.c.l.b16 %v1722
    %v2025 = vunpack.c.l.b16 %v1723
    %v2026 = vunpack.c.h.b16 %v1723
    %v2027 = vunpack.c.l.b16 %v1724
    %v2028 = vunpack.c.l.b16 %v1725
    %v2029 = vunpack.c.h.b16 %v1725
    %v2030 = vunpack.c.l.b16 %v1726
    %v2031 = vunpack.c.l.b16 %v1727
    %v2032 = vunpack.c.h.b16 %v1727
    %v2033 = vunpack.c.l.b16 %v1728
    %v2034 = vunpack.c.l.b16 %v1729
    %v2035 = vunpack.c.h.b16 %v1729
    %v2036 = vunpack.c.l.b16 %v1730
    %v2037 = vunpack.c.l.b16 %v1731
    %v2038 = vunpack.c.h.b16 %v1731
    %v2039 = vunpack.c.l.b16 %v1732
    %v2040 = vunpack.c.l.b16 %v1733
    %v2041 = vunpack.c.h.b16 %v1733
    %v2042 = vunpack.c.l.b16 %v1734
    %v2043 = vunpack.c.l.b16 %v1735
    %v2044 = vunpack.c.h.b16 %v1735
    %v2045 = vunpack.c.l.b16 %v1736
    %v2046 = vunpack.c.l.b16 %v1737
    %v2047 = vunpack.c.h.b16 %v1737
    %v2048 = vunpack.c.l.b16 %v1738
    %v2049 = vunpack.c.l.b16 %v1739
    %v2050 = vunpack.c.h.b16 %v1739
    %v2051 = vunpack.c.l.b16 %v1740
    %v2052 = vunpack.c.l.b16 %v1741
    %v2053 = vunpack.c.h.b16 %v1741
    %v2054 = vunpack.c.l.b16 %v1742
    %v2055 = vunpack.c.l.b16 %v1743
    %v2056 = vunpack.c.h.b16 %v1743
    %v2057 = vunpack.c.l.b16 %v1744
    %v2058 = vunpack.c.l.b16 %v1745
    %v2059 = vunpack.c.h.b16 %v1745
    %v2060 = vunpack.c.l.b16 %v1746
    %v2061 = vunpack.c.l.b16 %v1747
    %v2062 = vunpack.c.h.b16 %v1747
    %v2063 = vunpack.c.l.b16 %v1748
    %v2064 = vunpack.c.l.b16 %v1749
    %v2065 = vunpack.c.h.b16 %v1749
    %v2066 = vunpack.c.l.b16 %v1750
    %v2067 = vunpack.c.l.b16 %v1751
    %v2068 = vunpack.c.h.b16 %v1751
    %v2069 = vunpack.c.l.b16 %v1752
    %v2070 = vunpack.c.l.b16 %v1753
    %v2071 = vunpack.c.h.b16 %v1753
    %v2072 = vunpack.c.l.b16 %v1754
    %v2073 = vunpack.c.l.b16 %v1755
    %v2074 = vunpack.c.h.b16 %v1755
    %v2075 = vunpack.c.l.b16 %v1756
    %v2076 = vunpack.c.l.b16 %v1757
    %v2077 = vunpack.c.h.b16 %v1757
    %v2078 = vunpack.c.l.b16 %v1758
    %v2079 = vunpack.c.l.b16 %v1759
    %v2080 = vunpack.c.h.b16 %v1759
    %v2081 = vunpack.c.l.b16 %v1760
    %v2082 = vunpack.c.l.b16 %v1761
    %v2083 = vunpack.c.h.b16 %v1761
    %v2084 = vunpack.c.l.b16 %v1762
    %v2085 = vunpack.c.l.b16 %v1763
    %v2086 = vunpack.c.h.b16 %v1763
    %v2087 = vunpack.c.l.b16 %v1764
    %v2088 = vunpack.c.l.b16 %v1765
    %v2089 = vunpack.c.h.b16 %v1765
    %v2090 = vunpack.c.l.b16 %v1766
    %v2091 = vunpack.c.l.b16 %v1767
    %v2092 = vunpack.c.h.b16 %v1767
    %v2093 = vunpack.c.l.b16 %v1768
    %v2094 = vunpack.c.l.b16 %v1769
    %v2095 = vunpack.c.h.b16 %v1769
    %v2096 = vunpack.c.l.b16 %v1770
    %v2097 = vunpack.c.l.b16 %v1771
    %v2098 = vunpack.c.h.b16 %v1771
    %v2099 = vunpack.c.l.b16 %v1772
    %v2100 = vunpack.c.l.b16 %v1773
    %v2101 = vunpack.c.h.b16 %v1773
    %v2102 = vunpack.c.l.b16 %v1774
    %v2103 = vunpack.c.l.b16 %v1775
    %v2104 = vunpack.c.h.b16 %v1775
    %v2105 = vunpack.c.l.b16 %v1776
    %v2106 = vunpack.c.l.b16 %v1777
    %v2107 = vunpack.c.h.b16 %v1777
    %v2108 = vunpack.c.l.b16 %v1778
    %v2109 = vunpack.c.l.b16 %v1779
    %v2110 = vunpack.c.h.b16 %v1779
    %v2111 = vunpack.c.l.b16 %v1780
    %v2112 = vunpack.c.l.b16 %v1781
    %v2113 = vunpack.c.h.b16 %v1781
    %v2114 = vunpack.c.l.b16 %v1782
    %v2115 = vpack.c.b16 %v1926, %v1923
    %v2116 = vpack.c.b16 %v1927, %v1924
    %v2117 = vpack.c.b16 %v1928, %v1925
    %v2118 = vpack.c.b16 %v1932, %v1929
    %v2119 = vpack.c.b16 %v1933, %v1930
    %v2120 = vpack.c.b16 %v1934, %v1931
    %v2121 = vpack.c.b16 %v1938, %v1935
    %v2122 = vpack.c.b16 %v1939, %v1936
    %v2123 = vpack.c.b16 %v1940, %v1937
    %v2124 = vpack.c.b16 %v1944, %v1941
    %v2125 = vpack.c.b16 %v1945, %v1942
    %v2126 = vpack.c.b16 %v1946, %v1943
    %v2127 = vpack.c.b16 %v1950, %v1947
    %v2128 = vpack.c.b16 %v1951, %v1948
    %v2129 = vpack.c.b16 %v1952, %v1949
    %v2130 = vpack.c.b16 %v1956, %v1953
    %v2131 = vpack.c.b16 %v1957, %v1954
    %v2132 = vpack.c.b16 %v1958, %v1955
    %v2133 = vpack.c.b16 %v1962, %v1959
    %v2134 = vpack.c.b16 %v1963, %v1960
    %v2135 = vpack.c.b16 %v1964, %v1961
    %v2136 = vpack.c.b16 %v1968, %v1965
    %v2137 = vpack.c.b16 %v1969, %v1966
    %v2138 = vpack.c.b16 %v1970, %v1967
    %v2139 = vpack.c.b16 %v1974, %v1971
    %v2140 = vpack.c.b16 %v1975, %v1972
    %v2141 = vpack.c.b16 %v1976, %v1973
    %v2142 = vpack.c.b16 %v1980, %v1977
    %v2143 = vpack.c.b16 %v1981, %v1978
    %v2144 = vpack.c.b16 %v1982, %v1979
    %v2145 = vpack.c.b16 %v1986, %v1983
    %v2146 = vpack.c.b16 %v1987, %v1984
    %v2147 = vpack.c.b16 %v1988, %v1985
    %v2148 = vpack.c.b16 %v1992, %v1989
    %v2149 = vpack.c.b16 %v1993, %v1990
    %v2150 = vpack.c.b16 %v1994, %v1991
    %v2151 = vpack.c.b16 %v1998, %v1995
    %v2152 = vpack.c.b16 %v1999, %v1996
    %v2153 = vpack.c.b16 %v2000, %v1997
    %v2154 = vpack.c.b16 %v2004, %v2001
    %v2155 = vpack.c.b16 %v2005, %v2002
    %v2156 = vpack.c.b16 %v2006, %v2003
    %v2157 = vpack.c.b16 %v2010, %v2007
    %v2158 = vpack.c.b16 %v2011, %v2008
    %v2159 = vpack.c.b16 %v2012, %v2009
    %v2160 = vpack.c.b16 %v2016, %v2013
    %v2161 = vpack.c.b16 %v2017, %v2014
    %v2162 = vpack.c.b16 %v2018, %v2015
    %v2163 = vpack.c.b16 %v2022, %v2019
    %v2164 = vpack.c.b16 %v2023, %v2020
    %v2165 = vpack.c.b16 %v2024, %v2021
    %v2166 = vpack.c.b16 %v2028, %v2025
    %v2167 = vpack.c.b16 %v2029, %v2026
    %v2168 = vpack.c.b16 %v2030, %v2027
    %v2169 = vpack.c.b16 %v2034, %v2031
    %v2170 = vpack.c.b16 %v2035, %v2032
    %v2171 = vpack.c.b16 %v2036, %v2033
    %v2172 = vpack.c.b16 %v2040, %v2037
    %v2173 = vpack.c.b16 %v2041, %v2038
    %v2174 = vpack.c.b16 %v2042, %v2039
    %v2175 = vpack.c.b16 %v2046, %v2043
    %v2176 = vpack.c.b16 %v2047, %v2044
    %v2177 = vpack.c.b16 %v2048, %v2045
    %v2178 = vpack.c.b16 %v2052, %v2049
    %v2179 = vpack.c.b16 %v2053, %v2050
    %v2180 = vpack.c.b16 %v2054, %v2051
    %v2181 = vpack.c.b16 %v2058, %v2055
    %v2182 = vpack.c.b16 %v2059, %v2056
    %v2183 = vpack.c.b16 %v2060, %v2057
    %v2184 = vpack.c.b16 %v2064, %v2061
    %v2185 = vpack.c.b16 %v2065, %v2062
    %v2186 = vpack.c.b16 %v2066, %v2063
    %v2187 = vpack.c.b16 %v2070, %v2067
    %v2188 = vpack.c.b16 %v2071, %v2068
    %v2189 = vpack.c.b16 %v2072, %v2069
    %v2190 = vpack.c.b16 %v2076, %v2073
    %v2191 = vpack.c.b16 %v2077, %v2074
    %v2192 = vpack.c.b16 %v2078, %v2075
    %v2193 = vpack.c.b16 %v2082, %v2079
    %v2194 = vpack.c.b16 %v2083, %v2080
    %v2195 = vpack.c.b16 %v2084, %v2081
    %v2196 = vpack.c.b16 %v2088, %v2085
    %v2197 = vpack.c.b16 %v2089, %v2086
    %v2198 = vpack.c.b16 %v2090, %v2087
    %v2199 = vpack.c.b16 %v2094, %v2091
    %v2200 = vpack.c.b16 %v2095, %v2092
    %v2201 = vpack.c.b16 %v2096, %v2093
    %v2202 = vpack.c.b16 %v2100, %v2097
    %v2203 = vpack.c.b16 %v2101, %v2098
    %v2204 = vpack.c.b16 %v2102, %v2099
    %v2205 = vpack.c.b16 %v2106, %v2103
    %v2206 = vpack.c.b16 %v2107, %v2104
    %v2207 = vpack.c.b16 %v2108, %v2105
    %v2208 = vpack.c.b16 %v2112, %v2109
    %v2209 = vpack.c.b16 %v2113, %v2110
    %v2210 = vpack.c.b16 %v2114, %v2111
    %2307 = vmatpush.bf16.msra.mxu0 %v2136
    %2308 = vmatpush.bf16.msra.mxu0 %v2133
    %2309 = vmatpush.bf16.msra.mxu0 %v2130
    %2310 = vmatpush.bf16.msra.mxu0 %v2127
    %2311 = vmatpush.bf16.msra.mxu0 %v2124
    %2312 = vmatpush.bf16.msra.mxu0 %v2121
    %2313 = vmatpush.bf16.msra.mxu0 %v2118
    %2314 = vmatpush.bf16.msra.mxu0 %v2115
    %2315 = vmatmul.bf16.gmra.mxu0 %v1784
    %v2316 = vpop.f32.mrf.mxu0
    %v2317 = vadd.f32 %v1789, %v2316
    %v2318 = vpop.f32.mrf.mxu0
    %2319 = vdwg.mxu0
    %2320 = vmatpush.bf16.msra.mxu0 %v2160
    %2321 = vmatpush.bf16.msra.mxu0 %v2157
    %2322 = vmatpush.bf16.msra.mxu0 %v2154
    %2323 = vmatpush.bf16.msra.mxu0 %v2151
    %2324 = vmatpush.bf16.msra.mxu0 %v2148
    %2325 = vmatpush.bf16.msra.mxu0 %v2145
    %2326 = vmatpush.bf16.msra.mxu0 %v2142
    %2327 = vmatpush.bf16.msra.mxu0 %v2139
    %2328 = vmatmul.bf16.gmra.mxu0 %v1785
    %v2329 = vpop.f32.mrf.mxu0
    %v2330 = vadd.f32 %v2317, %v2329
    %v2331 = vpop.f32.mrf.mxu0
    %2332 = vdwg.mxu0
    %2333 = vmatpush.bf16.msra.mxu0 %v2184
    %2334 = vmatpush.bf16.msra.mxu0 %v2181
    %2335 = vmatpush.bf16.msra.mxu0 %v2178
    %2336 = vmatpush.bf16.msra.mxu0 %v2175
    %2337 = vmatpush.bf16.msra.mxu0 %v2172
    %2338 = vmatpush.bf16.msra.mxu0 %v2169
    %2339 = vmatpush.bf16.msra.mxu0 %v2166
    %2340 = vmatpush.bf16.msra.mxu0 %v2163
    %2341 = vmatmul.bf16.gmra.mxu0 %v1786
    %v2342 = vpop.f32.mrf.mxu0
    %v2343 = vadd.f32 %v2330, %v2342
    %v2344 = vpop.f32.mrf.mxu0
    %2345 = vdwg.mxu0
    %2346 = vmatpush.bf16.msra.mxu0 %v2208
    %2347 = vmatpush.bf16.msra.mxu0 %v2205
    %2348 = vmatpush.bf16.msra.mxu0 %v2202
    %2349 = vmatpush.bf16.msra.mxu0 %v2199
    %2350 = vmatpush.bf16.msra.mxu0 %v2196
    %2351 = vmatpush.bf16.msra.mxu0 %v2193
    %2352 = vmatpush.bf16.msra.mxu0 %v2190
    %2353 = vmatpush.bf16.msra.mxu0 %v2187
    %2354 = vmatmul.bf16.gmra.mxu0 %v1787
    %v2355 = vpop.f32.mrf.mxu0
    %v2356 = vadd.f32 %v2343, %v2355
    %v2357 = vpop.f32.mrf.mxu0
    %2358 = vdwg.mxu0
    %2359 = vmatpush.bf16.msra.mxu0 %v2137
    %2360 = vmatpush.bf16.msra.mxu0 %v2134
    %2361 = vmatpush.bf16.msra.mxu0 %v2131
    %2362 = vmatpush.bf16.msra.mxu0 %v2128
    %2363 = vmatpush.bf16.msra.mxu0 %v2125
    %2364 = vmatpush.bf16.msra.mxu0 %v2122
    %2365 = vmatpush.bf16.msra.mxu0 %v2119
    %2366 = vmatpush.bf16.msra.mxu0 %v2116
    %2367 = vmatmul.bf16.gmra.mxu0 %v1784
    %v2368 = vpop.f32.mrf.mxu0
    %v2369 = vadd.f32 %v1790, %v2368
    %v2370 = vpop.f32.mrf.mxu0
    %2371 = vdwg.mxu0
    %2372 = vmatpush.bf16.msra.mxu0 %v2161
    %2373 = vmatpush.bf16.msra.mxu0 %v2158
    %2374 = vmatpush.bf16.msra.mxu0 %v2155
    %2375 = vmatpush.bf16.msra.mxu0 %v2152
    %2376 = vmatpush.bf16.msra.mxu0 %v2149
    %2377 = vmatpush.bf16.msra.mxu0 %v2146
    %2378 = vmatpush.bf16.msra.mxu0 %v2143
    %2379 = vmatpush.bf16.msra.mxu0 %v2140
    %2380 = vmatmul.bf16.gmra.mxu0 %v1785
    %v2381 = vpop.f32.mrf.mxu0
    %v2382 = vadd.f32 %v2369, %v2381
    %v2383 = vpop.f32.mrf.mxu0
    %2384 = vdwg.mxu0
    %2385 = vmatpush.bf16.msra.mxu0 %v2185
    %2386 = vmatpush.bf16.msra.mxu0 %v2182
    %2387 = vmatpush.bf16.msra.mxu0 %v2179
    %2388 = vmatpush.bf16.msra.mxu0 %v2176
    %2389 = vmatpush.bf16.msra.mxu0 %v2173
    %2390 = vmatpush.bf16.msra.mxu0 %v2170
    %2391 = vmatpush.bf16.msra.mxu0 %v2167
    %2392 = vmatpush.bf16.msra.mxu0 %v2164
    %2393 = vmatmul.bf16.gmra.mxu0 %v1786
    %v2394 = vpop.f32.mrf.mxu0
    %v2395 = vadd.f32 %v2382, %v2394
    %v2396 = vpop.f32.mrf.mxu0
    %2397 = vdwg.mxu0
    %2398 = vmatpush.bf16.msra.mxu0 %v2209
    %2399 = vmatpush.bf16.msra.mxu0 %v2206
    %2400 = vmatpush.bf16.msra.mxu0 %v2203
    %2401 = vmatpush.bf16.msra.mxu0 %v2200
    %2402 = vmatpush.bf16.msra.mxu0 %v2197
    %2403 = vmatpush.bf16.msra.mxu0 %v2194
    %2404 = vmatpush.bf16.msra.mxu0 %v2191
    %2405 = vmatpush.bf16.msra.mxu0 %v2188
    %2406 = vmatmul.bf16.gmra.mxu0 %v1787
    %v2407 = vpop.f32.mrf.mxu0
    %v2408 = vadd.f32 %v2395, %v2407
    %v2409 = vpop.f32.mrf.mxu0
    %2410 = vdwg.mxu0
    %2411 = vmatpush.bf16.msra.mxu0 %v2138
    %2412 = vmatpush.bf16.msra.mxu0 %v2135
    %2413 = vmatpush.bf16.msra.mxu0 %v2132
    %2414 = vmatpush.bf16.msra.mxu0 %v2129
    %2415 = vmatpush.bf16.msra.mxu0 %v2126
    %2416 = vmatpush.bf16.msra.mxu0 %v2123
    %2417 = vmatpush.bf16.msra.mxu0 %v2120
    %2418 = vmatpush.bf16.msra.mxu0 %v2117
    %2419 = vmatmul.bf16.gmra.mxu0 %v1784
    %v2420 = vpop.f32.mrf.mxu0
    %v2421 = vadd.f32 %v1791, %v2420
    %v2422 = vpop.f32.mrf.mxu0
    %2423 = vdwg.mxu0
    %2424 = vmatpush.bf16.msra.mxu0 %v2162
    %2425 = vmatpush.bf16.msra.mxu0 %v2159
    %2426 = vmatpush.bf16.msra.mxu0 %v2156
    %2427 = vmatpush.bf16.msra.mxu0 %v2153
    %2428 = vmatpush.bf16.msra.mxu0 %v2150
    %2429 = vmatpush.bf16.msra.mxu0 %v2147
    %2430 = vmatpush.bf16.msra.mxu0 %v2144
    %2431 = vmatpush.bf16.msra.mxu0 %v2141
    %2432 = vmatmul.bf16.gmra.mxu0 %v1785
    %v2433 = vpop.f32.mrf.mxu0
    %v2434 = vadd.f32 %v2421, %v2433
    %v2435 = vpop.f32.mrf.mxu0
    %2436 = vdwg.mxu0
    %2437 = vmatpush.bf16.msra.mxu0 %v2186
    %2438 = vmatpush.bf16.msra.mxu0 %v2183
    %2439 = vmatpush.bf16.msra.mxu0 %v2180
    %2440 = vmatpush.bf16.msra.mxu0 %v2177
    %2441 = vmatpush.bf16.msra.mxu0 %v2174
    %2442 = vmatpush.bf16.msra.mxu0 %v2171
    %2443 = vmatpush.bf16.msra.mxu0 %v2168
    %2444 = vmatpush.bf16.msra.mxu0 %v2165
    %2445 = vmatmul.bf16.gmra.mxu0 %v1786
    %v2446 = vpop.f32.mrf.mxu0
    %v2447 = vadd.f32 %v2434, %v2446
    %v2448 = vpop.f32.mrf.mxu0
    %2449 = vdwg.mxu0
    %2450 = vmatpush.bf16.msra.mxu0 %v2210
    %2451 = vmatpush.bf16.msra.mxu0 %v2207
    %2452 = vmatpush.bf16.msra.mxu0 %v2204
    %2453 = vmatpush.bf16.msra.mxu0 %v2201
    %2454 = vmatpush.bf16.msra.mxu0 %v2198
    %2455 = vmatpush.bf16.msra.mxu0 %v2195
    %2456 = vmatpush.bf16.msra.mxu0 %v2192
    %2457 = vmatpush.bf16.msra.mxu0 %v2189
    %2458 = vmatmul.bf16.gmra.mxu0 %v1787
    %v2459 = vpop.f32.mrf.mxu0
    %v2460 = vadd.f32 %v2447, %v2459
    %v2461 = vpop.f32.mrf.mxu0
    %2462 = vdwg.mxu0
    %v2463 = vpack.c.bf16 %v2408, %v2356
    %v2464 = vpack.c.bf16 %v2460, %v2460
    %2465 = vst [vmem:[%s5] sm:$0xff] %v2463
    %2466 = vst [vmem:[%s5 + $0x8] sm:$0xf] %v2464
    %v2467 = vld [vmem:[#allocation2 + $0x100] sm:$0xf]
    %v2468 = vld [vmem:[#allocation2 + $0x104] sm:$0xf]
    %v2469 = vld [vmem:[#allocation2 + $0x108] sm:$0xf]
    %v2470 = vld [vmem:[#allocation2 + $0x10c] sm:$0xf]
    %v2471 = vld [vmem:[#allocation2 + $0x110] sm:$0xf]
    %v2472 = vld [vmem:[#allocation2 + $0x114] sm:$0xf]
    %v2473 = vld [vmem:[#allocation2 + $0x118] sm:$0xf]
    %v2474 = vld [vmem:[#allocation2 + $0x11c] sm:$0xf]
    %v2475 = vld [vmem:[#allocation2 + $0x120] sm:$0xf]
    %v2476 = vld [vmem:[#allocation2 + $0x124] sm:$0xf]
    %v2477 = vld [vmem:[#allocation2 + $0x128] sm:$0xf]
    %v2478 = vld [vmem:[#allocation2 + $0x12c] sm:$0xf]
    %v2479 = vld [vmem:[#allocation2 + $0x130] sm:$0xf]
    %v2480 = vld [vmem:[#allocation2 + $0x134] sm:$0xf]
    %v2481 = vld [vmem:[#allocation2 + $0x138] sm:$0xf]
    %v2482 = vld [vmem:[#allocation2 + $0x13c] sm:$0xf]
    %v2483 = vld [vmem:[#allocation2 + $0x140] sm:$0xf]
    %v2484 = vld [vmem:[#allocation2 + $0x144] sm:$0xf]
    %v2485 = vld [vmem:[#allocation2 + $0x148] sm:$0xf]
    %v2486 = vld [vmem:[#allocation2 + $0x14c] sm:$0xf]
    %v2487 = vld [vmem:[#allocation2 + $0x150] sm:$0xf]
    %v2488 = vld [vmem:[#allocation2 + $0x154] sm:$0xf]
    %v2489 = vld [vmem:[#allocation2 + $0x158] sm:$0xf]
    %v2490 = vld [vmem:[#allocation2 + $0x15c] sm:$0xf]
    %v2491 = vld [vmem:[#allocation2 + $0x160] sm:$0xf]
    %v2492 = vld [vmem:[#allocation2 + $0x164] sm:$0xf]
    %v2493 = vld [vmem:[#allocation2 + $0x168] sm:$0xf]
    %v2494 = vld [vmem:[#allocation2 + $0x16c] sm:$0xf]
    %v2495 = vld [vmem:[#allocation2 + $0x170] sm:$0xf]
    %v2496 = vld [vmem:[#allocation2 + $0x174] sm:$0xf]
    %v2497 = vld [vmem:[#allocation2 + $0x178] sm:$0xf]
    %v2498 = vld [vmem:[#allocation2 + $0x17c] sm:$0xf]
    %v2499 = vld [vmem:[#allocation2 + $0x180] sm:$0xf]
    %v2500 = vld [vmem:[#allocation2 + $0x184] sm:$0xf]
    %v2501 = vld [vmem:[#allocation2 + $0x188] sm:$0xf]
    %v2502 = vld [vmem:[#allocation2 + $0x18c] sm:$0xf]
    %v2503 = vld [vmem:[#allocation2 + $0x190] sm:$0xf]
    %v2504 = vld [vmem:[#allocation2 + $0x194] sm:$0xf]
    %v2505 = vld [vmem:[#allocation2 + $0x198] sm:$0xf]
    %v2506 = vld [vmem:[#allocation2 + $0x19c] sm:$0xf]
    %v2507 = vld [vmem:[#allocation2 + $0x1a0] sm:$0xf]
    %v2508 = vld [vmem:[#allocation2 + $0x1a4] sm:$0xf]
    %v2509 = vld [vmem:[#allocation2 + $0x1a8] sm:$0xf]
    %v2510 = vld [vmem:[#allocation2 + $0x1ac] sm:$0xf]
    %v2511 = vld [vmem:[#allocation2 + $0x1b0] sm:$0xf]
    %v2512 = vld [vmem:[#allocation2 + $0x1b4] sm:$0xf]
    %v2513 = vld [vmem:[#allocation2 + $0x1b8] sm:$0xf]
    %v2514 = vld [vmem:[#allocation2 + $0x1bc] sm:$0xf]
    %v2515 = vld [vmem:[%s4 + $0xe] sm:$0x1]
    %v2517 = vperm.slane %v2515, 0
    %v2521 = vunpack.c.l.b16 %v2463
    %v2522 = vunpack.c.h.b16 %v2463
    %v2523 = vunpack.c.l.b16 %v2464
    %v2524 = vpack.c.b16 %v2521, %v2521
    %v2525 = vpack.c.b16 %v2522, %v2522
    %v2526 = vpack.c.b16 %v2523, %v2523
    %v2578 = vunpack.c.l.b16 %v2467
    %v2579 = vunpack.c.l.b16 %v2468
    %v2580 = vunpack.c.l.b16 %v2469
    %v2581 = vunpack.c.l.b16 %v2470
    %v2582 = vunpack.c.l.b16 %v2471
    %v2583 = vunpack.c.l.b16 %v2472
    %v2584 = vunpack.c.l.b16 %v2473
    %v2585 = vunpack.c.l.b16 %v2474
    %v2586 = vunpack.c.l.b16 %v2475
    %v2587 = vunpack.c.l.b16 %v2476
    %v2588 = vunpack.c.l.b16 %v2477
    %v2589 = vunpack.c.l.b16 %v2478
    %v2590 = vunpack.c.l.b16 %v2479
    %v2591 = vunpack.c.l.b16 %v2480
    %v2592 = vunpack.c.l.b16 %v2481
    %v2593 = vunpack.c.l.b16 %v2482
    %v2594 = vunpack.c.l.b16 %v2483
    %v2595 = vunpack.c.l.b16 %v2484
    %v2596 = vunpack.c.l.b16 %v2485
    %v2597 = vunpack.c.l.b16 %v2486
    %v2598 = vunpack.c.l.b16 %v2487
    %v2599 = vunpack.c.l.b16 %v2488
    %v2600 = vunpack.c.l.b16 %v2489
    %v2601 = vunpack.c.l.b16 %v2490
    %v2602 = vunpack.c.l.b16 %v2491
    %v2603 = vunpack.c.l.b16 %v2492
    %v2604 = vunpack.c.l.b16 %v2493
    %v2605 = vunpack.c.l.b16 %v2494
    %v2606 = vunpack.c.l.b16 %v2495
    %v2607 = vunpack.c.l.b16 %v2496
    %v2608 = vunpack.c.l.b16 %v2497
    %v2609 = vunpack.c.l.b16 %v2498
    %v2610 = vunpack.c.l.b16 %v2499
    %v2611 = vunpack.c.l.b16 %v2500
    %v2612 = vunpack.c.l.b16 %v2501
    %v2613 = vunpack.c.l.b16 %v2502
    %v2614 = vunpack.c.l.b16 %v2503
    %v2615 = vunpack.c.l.b16 %v2504
    %v2616 = vunpack.c.l.b16 %v2505
    %v2617 = vunpack.c.l.b16 %v2506
    %v2618 = vunpack.c.l.b16 %v2507
    %v2619 = vunpack.c.l.b16 %v2508
    %v2620 = vunpack.c.l.b16 %v2509
    %v2621 = vunpack.c.l.b16 %v2510
    %v2622 = vunpack.c.l.b16 %v2511
    %v2623 = vunpack.c.l.b16 %v2512
    %v2624 = vunpack.c.l.b16 %v2513
    %v2625 = vunpack.c.l.b16 %v2514
    %v2626 = vpack.c.b16 %v2579, %v2578
    %v2627 = vpack.c.b16 %v2581, %v2580
    %v2628 = vpack.c.b16 %v2583, %v2582
    %v2629 = vpack.c.b16 %v2585, %v2584
    %v2630 = vpack.c.b16 %v2587, %v2586
    %v2631 = vpack.c.b16 %v2589, %v2588
    %v2632 = vpack.c.b16 %v2591, %v2590
    %v2633 = vpack.c.b16 %v2593, %v2592
    %v2634 = vpack.c.b16 %v2595, %v2594
    %v2635 = vpack.c.b16 %v2597, %v2596
    %v2636 = vpack.c.b16 %v2599, %v2598
    %v2637 = vpack.c.b16 %v2601, %v2600
    %v2638 = vpack.c.b16 %v2603, %v2602
    %v2639 = vpack.c.b16 %v2605, %v2604
    %v2640 = vpack.c.b16 %v2607, %v2606
    %v2641 = vpack.c.b16 %v2609, %v2608
    %v2642 = vpack.c.b16 %v2611, %v2610
    %v2643 = vpack.c.b16 %v2613, %v2612
    %v2644 = vpack.c.b16 %v2615, %v2614
    %v2645 = vpack.c.b16 %v2617, %v2616
    %v2646 = vpack.c.b16 %v2619, %v2618
    %v2647 = vpack.c.b16 %v2621, %v2620
    %v2648 = vpack.c.b16 %v2623, %v2622
    %v2649 = vpack.c.b16 %v2625, %v2624
    %2674 = vmatpush.bf16.msra.mxu0 %v2633
    %2675 = vmatpush.bf16.msra.mxu0 %v2632
    %2676 = vmatpush.bf16.msra.mxu0 %v2631
    %2677 = vmatpush.bf16.msra.mxu0 %v2630
    %2678 = vmatpush.bf16.msra.mxu0 %v2629
    %2679 = vmatpush.bf16.msra.mxu0 %v2628
    %2680 = vmatpush.bf16.msra.mxu0 %v2627
    %2681 = vmatpush.bf16.msra.mxu0 %v2626
    %2682 = vmatmul.bf16.gmra.mxu0 %v2524
    %v2683 = vpop.f32.mrf.mxu0
    %v2684 = vadd.f32 %v2517, %v2683
    %v2685 = vpop.f32.mrf.mxu0
    %2686 = vdwg.mxu0
    %2687 = vmatpush.bf16.msra.mxu0 %v2641
    %2688 = vmatpush.bf16.msra.mxu0 %v2640
    %2689 = vmatpush.bf16.msra.mxu0 %v2639
    %2690 = vmatpush.bf16.msra.mxu0 %v2638
    %2691 = vmatpush.bf16.msra.mxu0 %v2637
    %2692 = vmatpush.bf16.msra.mxu0 %v2636
    %2693 = vmatpush.bf16.msra.mxu0 %v2635
    %2694 = vmatpush.bf16.msra.mxu0 %v2634
    %2695 = vmatmul.bf16.gmra.mxu0 %v2525
    %v2696 = vpop.f32.mrf.mxu0
    %v2697 = vadd.f32 %v2684, %v2696
    %v2698 = vpop.f32.mrf.mxu0
    %2699 = vdwg.mxu0
    %2700 = vmatpush.bf16.msra.mxu0 %v2649
    %2701 = vmatpush.bf16.msra.mxu0 %v2648
    %2702 = vmatpush.bf16.msra.mxu0 %v2647
    %2703 = vmatpush.bf16.msra.mxu0 %v2646
    %2704 = vmatpush.bf16.msra.mxu0 %v2645
    %2705 = vmatpush.bf16.msra.mxu0 %v2644
    %2706 = vmatpush.bf16.msra.mxu0 %v2643
    %2707 = vmatpush.bf16.msra.mxu0 %v2642
    %2708 = vmatmul.bf16.gmra.mxu0 %v2526
    %v2709 = vpop.f32.mrf.mxu0
    %v2710 = vadd.f32 %v2697, %v2709
    %v2711 = vpop.f32.mrf.mxu0
    %2712 = vdwg.mxu0
    %v2713 = vmax.f32 %v2710, 0.0
    %v2714 = vld [vmem:[#allocation2 + $0x1c0] sm:$0xf]
    %v2715 = vld [vmem:[#allocation2 + $0x1c4] sm:$0xf]
    %v2716 = vld [vmem:[#allocation2 + $0x1c8] sm:$0xf]
    %v2717 = vld [vmem:[#allocation2 + $0x1cc] sm:$0xf]
    %v2718 = vld [vmem:[#allocation2 + $0x1d0] sm:$0xf]
    %v2719 = vld [vmem:[#allocation2 + $0x1d4] sm:$0xf]
    %v2720 = vld [vmem:[#allocation2 + $0x1d8] sm:$0xf]
    %v2721 = vld [vmem:[#allocation2 + $0x1dc] sm:$0xf]
    %v2722 = vld [vmem:[#allocation2 + $0x1e0] sm:$0xf]
    %v2723 = vld [vmem:[#allocation2 + $0x1e4] sm:$0xf]
    %v2724 = vld [vmem:[#allocation2 + $0x1e8] sm:$0xf]
    %v2725 = vld [vmem:[#allocation2 + $0x1ec] sm:$0xf]
    %v2726 = vld [vmem:[#allocation2 + $0x1f0] sm:$0xf]
    %v2727 = vld [vmem:[#allocation2 + $0x1f4] sm:$0xf]
    %v2728 = vld [vmem:[#allocation2 + $0x1f8] sm:$0xf]
    %v2729 = vld [vmem:[#allocation2 + $0x1fc] sm:$0xf]
    %v2730 = vld [vmem:[%s4 + $0xf] sm:$0x1]
    %v2731 = vpack.c.bf16 %v2713, %v2713
    %v2733 = vperm.slane %v2730, 0
    %v2751 = vunpack.c.l.b16 %v2714
    %v2752 = vunpack.c.l.b16 %v2715
    %v2753 = vunpack.c.l.b16 %v2716
    %v2754 = vunpack.c.l.b16 %v2717
    %v2755 = vunpack.c.l.b16 %v2718
    %v2756 = vunpack.c.l.b16 %v2719
    %v2757 = vunpack.c.l.b16 %v2720
    %v2758 = vunpack.c.l.b16 %v2721
    %v2759 = vunpack.c.l.b16 %v2722
    %v2760 = vunpack.c.l.b16 %v2723
    %v2761 = vunpack.c.l.b16 %v2724
    %v2762 = vunpack.c.l.b16 %v2725
    %v2763 = vunpack.c.l.b16 %v2726
    %v2764 = vunpack.c.l.b16 %v2727
    %v2765 = vunpack.c.l.b16 %v2728
    %v2766 = vunpack.c.l.b16 %v2729
    %v2767 = vpack.c.b16 %v2752, %v2751
    %v2768 = vpack.c.b16 %v2754, %v2753
    %v2769 = vpack.c.b16 %v2756, %v2755
    %v2770 = vpack.c.b16 %v2758, %v2757
    %v2771 = vpack.c.b16 %v2760, %v2759
    %v2772 = vpack.c.b16 %v2762, %v2761
    %v2773 = vpack.c.b16 %v2764, %v2763
    %v2774 = vpack.c.b16 %v2766, %v2765
    %2783 = vmatpush.bf16.msra.mxu0 %v2774
    %2784 = vmatpush.bf16.msra.mxu0 %v2773
    %2785 = vmatpush.bf16.msra.mxu0 %v2772
    %2786 = vmatpush.bf16.msra.mxu0 %v2771
    %2787 = vmatpush.bf16.msra.mxu0 %v2770
    %2788 = vmatpush.bf16.msra.mxu0 %v2769
    %2789 = vmatpush.bf16.msra.mxu0 %v2768
    %2790 = vmatpush.bf16.msra.mxu0 %v2767
    %2791 = vmatmul.bf16.gmra.mxu0 %v2731
    %v2792 = vpop.f32.mrf.mxu0
    %v2793 = vadd.f32 %v2733, %v2792
    %v2794 = vpop.f32.mrf.mxu0
    %2795 = vdwg.mxu0
    %v2796 = vmax.f32 %v2793, 0.0
    %v2797 = vld [vmem:[#allocation2 + $0x200] sm:$0xf]
    %v2798 = vld [vmem:[#allocation2 + $0x204] sm:$0xf]
    %v2799 = vld [vmem:[#allocation2 + $0x208] sm:$0xf]
    %v2800 = vld [vmem:[#allocation2 + $0x20c] sm:$0xf]
    %v2801 = vld [vmem:[#allocation2 + $0x210] sm:$0xf]
    %v2802 = vld [vmem:[#allocation2 + $0x214] sm:$0xf]
    %v2803 = vld [vmem:[#allocation2 + $0x218] sm:$0xf]
    %v2804 = vld [vmem:[#allocation2 + $0x21c] sm:$0xf]
    %v2805 = vld [vmem:[#allocation2 + $0x220] sm:$0xf]
    %v2806 = vld [vmem:[#allocation2 + $0x224] sm:$0xf]
    %v2807 = vld [vmem:[#allocation2 + $0x228] sm:$0xf]
    %v2808 = vld [vmem:[#allocation2 + $0x22c] sm:$0xf]
    %v2809 = vld [vmem:[#allocation2 + $0x230] sm:$0xf]
    %v2810 = vld [vmem:[#allocation2 + $0x234] sm:$0xf]
    %v2811 = vld [vmem:[#allocation2 + $0x238] sm:$0xf]
    %v2812 = vld [vmem:[#allocation2 + $0x23c] sm:$0xf]
    %v2813 = vld [vmem:[%s4 + $0x10] sm:$0x1]
    %v2814 = vpack.c.bf16 %v2796, %v2796
    %v2816 = vperm.slane %v2813, 0
    %v2834 = vunpack.c.l.b16 %v2797
    %v2835 = vunpack.c.l.b16 %v2798
    %v2836 = vunpack.c.l.b16 %v2799
    %v2837 = vunpack.c.l.b16 %v2800
    %v2838 = vunpack.c.l.b16 %v2801
    %v2839 = vunpack.c.l.b16 %v2802
    %v2840 = vunpack.c.l.b16 %v2803
    %v2841 = vunpack.c.l.b16 %v2804
    %v2842 = vunpack.c.l.b16 %v2805
    %v2843 = vunpack.c.l.b16 %v2806
    %v2844 = vunpack.c.l.b16 %v2807
    %v2845 = vunpack.c.l.b16 %v2808
    %v2846 = vunpack.c.l.b16 %v2809
    %v2847 = vunpack.c.l.b16 %v2810
    %v2848 = vunpack.c.l.b16 %v2811
    %v2849 = vunpack.c.l.b16 %v2812
    %v2850 = vpack.c.b16 %v2835, %v2834
    %v2851 = vpack.c.b16 %v2837, %v2836
    %v2852 = vpack.c.b16 %v2839, %v2838
    %v2853 = vpack.c.b16 %v2841, %v2840
    %v2854 = vpack.c.b16 %v2843, %v2842
    %v2855 = vpack.c.b16 %v2845, %v2844
    %v2856 = vpack.c.b16 %v2847, %v2846
    %v2857 = vpack.c.b16 %v2849, %v2848
    %2866 = vmatpush.bf16.msra.mxu0 %v2857
    %2867 = vmatpush.bf16.msra.mxu0 %v2856
    %2868 = vmatpush.bf16.msra.mxu0 %v2855
    %2869 = vmatpush.bf16.msra.mxu0 %v2854
    %2870 = vmatpush.bf16.msra.mxu0 %v2853
    %2871 = vmatpush.bf16.msra.mxu0 %v2852
    %2872 = vmatpush.bf16.msra.mxu0 %v2851
    %2873 = vmatpush.bf16.msra.mxu0 %v2850
    %2874 = vmatmul.bf16.gmra.mxu0 %v2814
    %v2875 = vpop.f32.mrf.mxu0
    %v2876 = vadd.f32 %v2816, %v2875
    %v2877 = vpop.f32.mrf.mxu0
    %2878 = vdwg.mxu0
    %v2879 = vmax.f32 %v2876, 0.0
    %v2880 = vld [vmem:[#allocation2 + $0x240] sm:$0xf]
    %v2881 = vld [vmem:[#allocation2 + $0x244] sm:$0xf]
    %v2882 = vld [vmem:[#allocation2 + $0x248] sm:$0xf]
    %v2883 = vld [vmem:[#allocation2 + $0x24c] sm:$0xf]
    %v2884 = vld [vmem:[#allocation2 + $0x250] sm:$0xf]
    %v2885 = vld [vmem:[#allocation2 + $0x254] sm:$0xf]
    %v2886 = vld [vmem:[#allocation2 + $0x258] sm:$0xf]
    %v2887 = vld [vmem:[#allocation2 + $0x25c] sm:$0xf]
    %v2888 = vld [vmem:[#allocation2 + $0x260] sm:$0xf]
    %v2889 = vld [vmem:[#allocation2 + $0x264] sm:$0xf]
    %v2890 = vld [vmem:[#allocation2 + $0x268] sm:$0xf]
    %v2891 = vld [vmem:[#allocation2 + $0x26c] sm:$0xf]
    %v2892 = vld [vmem:[#allocation2 + $0x270] sm:$0xf]
    %v2893 = vld [vmem:[#allocation2 + $0x274] sm:$0xf]
    %v2894 = vld [vmem:[#allocation2 + $0x278] sm:$0xf]
    %v2895 = vld [vmem:[#allocation2 + $0x27c] sm:$0xf]
    %v2896 = vld [vmem:[%s4 + $0x11] sm:$0x1]
    %v2897 = vpack.c.bf16 %v2879, %v2879
    %v2899 = vperm.slane %v2896, 0
    %v2917 = vunpack.c.l.b16 %v2880
    %v2918 = vunpack.c.l.b16 %v2881
    %v2919 = vunpack.c.l.b16 %v2882
    %v2920 = vunpack.c.l.b16 %v2883
    %v2921 = vunpack.c.l.b16 %v2884
    %v2922 = vunpack.c.l.b16 %v2885
    %v2923 = vunpack.c.l.b16 %v2886
    %v2924 = vunpack.c.l.b16 %v2887
    %v2925 = vunpack.c.l.b16 %v2888
    %v2926 = vunpack.c.l.b16 %v2889
    %v2927 = vunpack.c.l.b16 %v2890
    %v2928 = vunpack.c.l.b16 %v2891
    %v2929 = vunpack.c.l.b16 %v2892
    %v2930 = vunpack.c.l.b16 %v2893
    %v2931 = vunpack.c.l.b16 %v2894
    %v2932 = vunpack.c.l.b16 %v2895
    %v2933 = vpack.c.b16 %v2918, %v2917
    %v2934 = vpack.c.b16 %v2920, %v2919
    %v2935 = vpack.c.b16 %v2922, %v2921
    %v2936 = vpack.c.b16 %v2924, %v2923
    %v2937 = vpack.c.b16 %v2926, %v2925
    %v2938 = vpack.c.b16 %v2928, %v2927
    %v2939 = vpack.c.b16 %v2930, %v2929
    %v2940 = vpack.c.b16 %v2932, %v2931
    %2949 = vmatpush.bf16.msra.mxu0 %v2940
    %2950 = vmatpush.bf16.msra.mxu0 %v2939
    %2951 = vmatpush.bf16.msra.mxu0 %v2938
    %2952 = vmatpush.bf16.msra.mxu0 %v2937
    %2953 = vmatpush.bf16.msra.mxu0 %v2936
    %2954 = vmatpush.bf16.msra.mxu0 %v2935
    %2955 = vmatpush.bf16.msra.mxu0 %v2934
    %2956 = vmatpush.bf16.msra.mxu0 %v2933
    %2957 = vmatmul.bf16.gmra.mxu0 %v2897
    %v2958 = vpop.f32.mrf.mxu0
    %v2959 = vadd.f32 %v2899, %v2958
    %v2960 = vpop.f32.mrf.mxu0
    %2961 = vdwg.mxu0
    %2962 = vst [vmem:[%s6] sm:$0xff] %v2959
    // Predicated region
    $region34: #{qnet_forward.2} parent=1 // pred_check
      _
    $region35: #{qnet_forward.2} parent=1 // pred_check_branch
      %2964 = sbr.rel (0) target = $region37
    $region36: #{qnet_forward.2} parent=1 // pred_region
      _
    $region37: #{qnet_forward.2} parent=1 // pred_fallthru
      _
    // Predicated region
    $region38: #{qnet_forward.2} parent=1 // pred_check
      _
    $region39: #{qnet_forward.2} parent=1 // pred_check_branch
      %2966 = sbr.rel (0) target = $region41
    $region40: #{qnet_forward.2} parent=1 // pred_region
      _
    $region41: #{qnet_forward.2} parent=1 // pred_fallthru
      _
    // Predicated region
    $region42: #{qnet_forward.2} parent=1 // pred_check
      _
    $region43: #{qnet_forward.2} parent=1 // pred_check_branch
      %2968 = sbr.rel (0) target = $region45
    $region44: #{qnet_forward.2} parent=1 // pred_region
      _
    $region45: #{qnet_forward.2} parent=1 // pred_fallthru
      _
    // Predicated region
    $region46: #{qnet_forward.2} parent=1 // pred_check
      _
    $region47: #{qnet_forward.2} parent=1 // pred_check_branch
      %2970 = sbr.rel (0) target = $region49
    $region48: #{qnet_forward.2} parent=1 // pred_region
      _
    $region49: #{qnet_forward.2} parent=1 // pred_fallthru
      _
    %2971 = vsyncpa [#allocation3], 1
    %2972 = vsyncpa [#allocation5], 1

</llo_original>
